<compile_context>
chip_gen: v6e
topology: v6e:2x2x1
jax: 0.10.0
libtpu: 0.0.40
codegen_flags: <defaults>
</compile_context>

<pallas_src>
import functools

import jax
import jax.numpy as jnp
import numpy as np
from jax import lax
from jax.experimental import pallas as pl
from jax.experimental.pallas import tpu as pltpu


# ----------------------------- activations ---------------------------------
def _elu(x):
    return jnp.where(x > 0, x, jnp.exp(jnp.minimum(x, 0.0)) - 1.0)


def _silu(x):
    return x * (1.0 / (1.0 + jnp.exp(-x)))


def _round_up(x, m):
    return (x + m - 1) // m * m


# ------------------------------- kernel ------------------------------------
def mastered_egcl_kernel(
    # edge-tiled selection matrices (bf16 storage, exact 0/1)
    srow_ref, scol_ref, srow_t_ref,
    # resident node data / scalars
    h_ref, coord_ref, mb_ref, mb_t_ref,
    node_mask_ref, inv_n_ref, inv_cnt_row_ref, inv_cnt_b_ref, has_graph_ref,
    # E_GCL edge_mlp
    w1a_ref, w1b_ref, w1c_ref, b1_ref, w2_ref, b2_ref,
    # E_GCL coord_mlp
    wc1_ref, bc1_ref, wc2_ref,
    # E_GCL node_mlp
    wn1a_ref, wn1b_ref, bn1_ref, wn2_ref, bn2_ref,
    # BatchNorm1d
    gamma_ref, beta_ref,
    # MasterNode
    wm_ref, bm_ref, wconv_ref, bconv_ref,
    # outputs
    h_out_ref, coord_out_ref,
    # scratch
    prow_ref, pcol_ref, acc_ref,
):
    f32 = jnp.float32
    dot = lambda a, b: jnp.dot(a, b, preferred_element_type=f32)
    H = w2_ref.shape[0]

    k = pl.program_id(0)
    n_steps = pl.num_programs(0)

    # ---------------- init: project-before-gather + zero accumulator ---------
    @pl.when(k == 0)
    def _init():
        h = h_ref[...]
        coord = coord_ref[...]
        prow_ref[...] = jnp.concatenate([dot(h, w1a_ref[...]), coord], axis=1)
        pcol_ref[...] = jnp.concatenate([dot(h, w1b_ref[...]), coord], axis=1)
        acc_ref[...] = jnp.zeros_like(acc_ref)

    # ---------------- edge phase for this tile --------------------------------
    srow = srow_ref[...].astype(f32)        # [TE, N]
    scol = scol_ref[...].astype(f32)        # [TE, N]
    srow_t = srow_t_ref[...].astype(f32)    # [N, TE]

    g_row = dot(srow, prow_ref[...])        # fused gather: [h@w1a | coord][row]
    g_col = dot(scol, pcol_ref[...])        # fused gather: [h@w1b | coord][col]
    ph_row = g_row[:, :H]
    ph_col = g_col[:, :H]
    coord_diff = g_row[:, H:] - g_col[:, H:]                    # [TE, 3]
    radial = jnp.sum(coord_diff * coord_diff, axis=-1, keepdims=True)

    # edge model: edge_mlp(cat[h_row, h_col, radial])
    e = _silu(ph_row + ph_col + radial * w1c_ref[...] + b1_ref[...])
    e = _silu(dot(e, w2_ref[...]) + b2_ref[...])                # [TE, H]

    # coord model
    cm = _silu(dot(e, wc1_ref[...]) + bc1_ref[...])
    phi = dot(cm, wc2_ref[...])                                 # [TE, 1]
    trans = coord_diff * phi                                    # [TE, 3]

    # fused scatter (segment sum accumulate): [agg_h | agg_c]
    feats = jnp.concatenate([e, trans], axis=1)                 # [TE, H+3]
    acc_ref[...] += dot(srow_t, feats)                          # [N, H+3]

    # ---------------- finalize: node phase, BN, MasterNode --------------------
    @pl.when(k == n_steps - 1)
    def _finalize():
        h = h_ref[...]
        coord = coord_ref[...]
        agg = acc_ref[...]
        agg_h = agg[:, :H]
        agg_c = agg[:, H:]

        # coord update (coords_agg='mean')
        coord_out_ref[...] = coord + agg_c * inv_cnt_row_ref[...]

        # node model (residual)
        m = _silu(dot(h, wn1a_ref[...]) + dot(agg_h, wn1b_ref[...]) + bn1_ref[...])
        h2 = h + dot(m, wn2_ref[...]) + bn2_ref[...]

        # ELU + BatchNorm1d (training-mode batch stats; padded nodes masked out)
        h2 = _elu(h2)
        mask = node_mask_ref[...]
        inv_n = inv_n_ref[...]
        mean = jnp.sum(h2 * mask, axis=0, keepdims=True) * inv_n
        centered = (h2 - mean) * mask
        var = jnp.sum(centered * centered, axis=0, keepdims=True) * inv_n
        h2 = (h2 - mean) * lax.rsqrt(var + 1e-5) * gamma_ref[...] + beta_ref[...]

        # MasterNode
        x = _elu(dot(h2, wm_ref[...]) + bm_ref[...])            # [N, H]
        mb = mb_ref[...]                                        # [N, B]
        mean_pool = dot(mb_t_ref[...], x) * inv_cnt_b_ref[...]  # [B, H]

        B = mb.shape[1]
        maxes = []
        for b in range(B):                                      # B small & static
            mask_b = mb[:, b:b + 1]
            mx = jnp.max(jnp.where(mask_b > 0.5, x, -1e30), axis=0, keepdims=True)
            maxes.append(mx)
        max_pool = jnp.concatenate(maxes, axis=0)               # [B, H]
        max_pool = jnp.where(has_graph_ref[...] > 0.5, max_pool, 0.0)

        # Conv1d(in=2, out=1, k=1) over stack((max, mean), dim=1)
        wconv = wconv_ref[...]                                  # [1, 2]
        pert = _elu(wconv[:, 0:1] * max_pool + wconv[:, 1:2] * mean_pool
                    + bconv_ref[...])                           # [B, H]

        # index_select(pert, 0, batch) == Mb @ pert
        h_out_ref[...] = h2 + dot(mb, pert)


# ------------------------------ wrapper -------------------------------------
def mastered_egcl(h, coord, edge_index, batch, params, num_graphs, *, edge_tile=128):
    f32, bf16 = jnp.float32, jnp.bfloat16
    N, D = h.shape
    E = edge_index.shape[1]
    B = num_graphs
    H = params["w2"].shape[0]
    O = params["wn2"].shape[1]
    row, col = edge_index[0], edge_index[1]

    # padded sizes (sublane alignment for nodes, tile alignment for edges)
    Np = _round_up(max(N, 8), 8)
    TE = min(edge_tile, _round_up(max(E, 8), 8))
    Ep = _round_up(max(E, TE), TE)
    n_et = Ep // TE

    # glue: one-hot gather/scatter matrices + counts (selection matrices in bf16)
    srow = jax.nn.one_hot(row, Np, dtype=f32)                   # [E, Np]
    scol = jax.nn.one_hot(col, Np, dtype=f32)
    mb = jax.nn.one_hot(batch, B, dtype=f32)                    # [N, B]

    srow_p = jnp.zeros((Ep, Np), f32).at[:E].set(srow)
    scol_p = jnp.zeros((Ep, Np), f32).at[:E].set(scol)
    mb_p = jnp.zeros((Np, B), f32).at[:N].set(mb)
    h_p = jnp.zeros((Np, D), f32).at[:N].set(h)
    coord_p = jnp.zeros((Np, 3), f32).at[:N].set(coord)

    cnt_row = jnp.sum(srow_p, axis=0)[:, None]                  # [Np, 1]
    inv_cnt_row = 1.0 / jnp.maximum(cnt_row, 1.0)
    cnt_b = jnp.sum(mb_p, axis=0)[:, None]                      # [B, 1]
    inv_cnt_b = 1.0 / jnp.maximum(cnt_b, 1.0)
    has_graph = (cnt_b > 0).astype(f32)
    node_mask = jnp.zeros((Np, 1), f32).at[:N].set(1.0)
    inv_n = jnp.full((1, 1), 1.0 / N, f32)

    srow_bf = srow_p.astype(bf16)
    scol_bf = scol_p.astype(bf16)
    srow_t_bf = srow_p.T.astype(bf16)
    mb_t = mb_p.T

    resident_args = (
        h_p, coord_p, mb_p, mb_t,
        node_mask, inv_n, inv_cnt_row, inv_cnt_b, has_graph,
        params["w1a"], params["w1b"], params["w1c"], params["b1"],
        params["w2"], params["b2"],
        params["wc1"], params["bc1"], params["wc2"],
        params["wn1a"], params["wn1b"], params["bn1"], params["wn2"], params["bn2"],
        params["gamma"], params["beta"],
        params["wm"], params["bm"], params["wconv"], params["bconv"],
    )
    args = (srow_bf, scol_bf, srow_t_bf) + resident_args

    def _resident(shape):   # whole array, fetched once (constant block index)
        return pl.BlockSpec(shape, lambda k: (0, 0))

    in_specs = [
        pl.BlockSpec((TE, Np), lambda k: (k, 0)),               # srow tile
        pl.BlockSpec((TE, Np), lambda k: (k, 0)),               # scol tile
        pl.BlockSpec((Np, TE), lambda k: (0, k)),               # srow^T tile
    ] + [_resident(a.shape) for a in resident_args]

    out_specs = [_resident((Np, O)), _resident((Np, 3))]

    grid_spec = pltpu.PrefetchScalarGridSpec(
        num_scalar_prefetch=0,
        grid=(n_et,),
        in_specs=in_specs,
        out_specs=out_specs,
        scratch_shapes=[
            pltpu.VMEM((Np, H + 3), f32),   # prow: [h@w1a | coord]
            pltpu.VMEM((Np, H + 3), f32),   # pcol: [h@w1b | coord]
            pltpu.VMEM((Np, H + 3), f32),   # acc : [agg_h | agg_c]
        ],
    )

    h_out, coord_out = pl.pallas_call(
        mastered_egcl_kernel,
        out_shape=(
            jax.ShapeDtypeStruct((Np, O), f32),
            jax.ShapeDtypeStruct((Np, 3), f32),
        ),
        grid_spec=grid_spec,
        compiler_params=pltpu.CompilerParams(
            dimension_semantics=("arbitrary",),        # edge axis carries the accumulator
            vmem_limit_bytes=48 * 1024 * 1024,         # fits v7x's 64 MiB physical VMEM
        ),
    )(*args)

    return h_out[:N], coord_out[:N]


# --------------------------- parameter init ---------------------------------
def init_params(key, D, H, O):
    def lin(key, fan_in, fan_out, bias=True):
        k1, k2 = jax.random.split(key)
        bound = 1.0 / np.sqrt(fan_in)
        w = jax.random.uniform(k1, (fan_in, fan_out), jnp.float32, -bound, bound)
        b = jax.random.uniform(k2, (1, fan_out), jnp.float32, -bound, bound) if bias else None
        return w, b

    keys = jax.random.split(key, 8)
    w1, b1 = lin(keys[0], 2 * D + 1, H)           # edge_mlp lin1
    w2, b2 = lin(keys[1], H, H)                   # edge_mlp lin2
    wc1, bc1 = lin(keys[2], H, H)                 # coord_mlp lin1
    wc2, _ = lin(keys[3], H, 1, bias=False)       # coord_mlp lin2 (no bias)
    wn1, bn1 = lin(keys[4], D + H, H)             # node_mlp lin1 (input order: [h, agg])
    wn2, bn2 = lin(keys[5], H, O)                 # node_mlp lin2
    wm, bm = lin(keys[6], O, H)                   # MasterNode.nodes_to_master
    kc1, kc2 = jax.random.split(keys[7])
    cbound = 1.0 / np.sqrt(2.0)
    wconv = jax.random.uniform(kc1, (1, 2), jnp.float32, -cbound, cbound)   # Conv1d(2,1,1) weight
    bconv = jax.random.uniform(kc2, (1, 1), jnp.float32, -cbound, cbound)   # Conv1d bias

    return {
        "w1a": w1[:D], "w1b": w1[D:2 * D], "w1c": w1[2 * D:], "b1": b1,
        "w2": w2, "b2": b2,
        "wc1": wc1, "bc1": bc1, "wc2": wc2,
        "wn1a": wn1[:D], "wn1b": wn1[D:], "bn1": bn1, "wn2": wn2, "bn2": bn2,
        "gamma": jnp.ones((1, O), jnp.float32), "beta": jnp.zeros((1, O), jnp.float32),
        "wm": wm, "bm": bm, "wconv": wconv, "bconv": bconv,
    }


# --------------------------- pure-JAX reference ------------------------------
def reference(h, coord, edge_index, batch, p, B):
    N = h.shape[0]
    row, col = edge_index[0], edge_index[1]
    hp = jax.lax.Precision.HIGHEST
    mm = functools.partial(jnp.matmul, precision=hp)

    coord_diff = coord[row] - coord[col]
    radial = jnp.sum(coord_diff ** 2, -1, keepdims=True)
    w1 = jnp.concatenate([p["w1a"], p["w1b"], p["w1c"]], axis=0)
    e = mm(jnp.concatenate([h[row], h[col], radial], -1), w1) + p["b1"]
    e = _silu(e)
    e = _silu(mm(e, p["w2"]) + p["b2"])

    phi = mm(_silu(mm(e, p["wc1"]) + p["bc1"]), p["wc2"])
    trans = coord_diff * phi
    agg_c = jax.ops.segment_sum(trans, row, N)
    cnt = jnp.maximum(jax.ops.segment_sum(jnp.ones_like(trans), row, N), 1.0)
    coord_out = coord + agg_c / cnt

    agg_h = jax.ops.segment_sum(e, row, N)
    wn1 = jnp.concatenate([p["wn1a"], p["wn1b"]], axis=0)
    m = _silu(mm(jnp.concatenate([h, agg_h], -1), wn1) + p["bn1"])
    h2 = h + (mm(m, p["wn2"]) + p["bn2"])

    h2 = _elu(h2)
    mean = h2.mean(0, keepdims=True)
    var = ((h2 - mean) ** 2).mean(0, keepdims=True)
    h2 = (h2 - mean) / jnp.sqrt(var + 1e-5) * p["gamma"] + p["beta"]

    x = _elu(mm(h2, p["wm"]) + p["bm"])
    ones = jnp.ones((N, 1), jnp.float32)
    mean_pool = jax.ops.segment_sum(x, batch, B) / jnp.maximum(
        jax.ops.segment_sum(ones, batch, B), 1.0)
    max_pool = jax.ops.segment_max(x, batch, B)
    pert = _elu(p["wconv"][0, 0] * max_pool + p["wconv"][0, 1] * mean_pool + p["bconv"][0, 0])
    h_out = h2 + pert[batch]
    return h_out, coord_out


# --------------------------------- main --------------------------------------
if __name__ == "__main__":
    # D = hidden = output = 128 (lane-dense matmuls; residual + master add need D == O)
    N, E, B, D, H, O = 64, 512, 4, 128, 128, 128

    key = jax.random.PRNGKey(0)
    k_h, k_c, k_e, k_p = jax.random.split(key, 4)

    h = jax.random.normal(k_h, (N, D), jnp.float32)
    coord = jax.random.normal(k_c, (N, 3), jnp.float32)
    edge_index = jax.random.randint(k_e, (2, E), 0, N, dtype=jnp.int32)
    batch = jnp.repeat(jnp.arange(B, dtype=jnp.int32), N // B)   # all graphs non-empty

    params = init_params(k_p, D, H, O)

    h_out, coord_out = mastered_egcl(h, coord, edge_index, batch, params, B)
    jax.block_until_ready((h_out, coord_out))

    h_ref, coord_ref = reference(h, coord, edge_index, batch, params, B)
    np.testing.assert_allclose(np.asarray(h_out), np.asarray(h_ref), rtol=1e-2, atol=1e-2)
    np.testing.assert_allclose(np.asarray(coord_out), np.asarray(coord_ref), rtol=1e-2, atol=1e-2)
    assert np.isfinite(np.asarray(h_out)).all() and np.isfinite(np.asarray(coord_out)).all()

    print("KERNEL_OK")
</pallas_src>

<mosaic_0001>
module attributes {stable_mosaic.version = 11 : i64} {
  func.func @mastered_egcl_kernel(%arg0: i32, %arg1: memref<128x64xbf16, #tpu.memory_space<vmem>>, %arg2: memref<128x64xbf16, #tpu.memory_space<vmem>>, %arg3: memref<64x128xbf16, #tpu.memory_space<vmem>>, %arg4: memref<64x128xf32, #tpu.memory_space<vmem>>, %arg5: memref<64x3xf32, #tpu.memory_space<vmem>>, %arg6: memref<64x4xf32, #tpu.memory_space<vmem>>, %arg7: memref<4x64xf32, #tpu.memory_space<vmem>>, %arg8: memref<64x1xf32, #tpu.memory_space<vmem>>, %arg9: memref<1x1xf32, #tpu.memory_space<vmem>>, %arg10: memref<64x1xf32, #tpu.memory_space<vmem>>, %arg11: memref<4x1xf32, #tpu.memory_space<vmem>>, %arg12: memref<4x1xf32, #tpu.memory_space<vmem>>, %arg13: memref<128x128xf32, #tpu.memory_space<vmem>>, %arg14: memref<128x128xf32, #tpu.memory_space<vmem>>, %arg15: memref<1x128xf32, #tpu.memory_space<vmem>>, %arg16: memref<1x128xf32, #tpu.memory_space<vmem>>, %arg17: memref<128x128xf32, #tpu.memory_space<vmem>>, %arg18: memref<1x128xf32, #tpu.memory_space<vmem>>, %arg19: memref<128x128xf32, #tpu.memory_space<vmem>>, %arg20: memref<1x128xf32, #tpu.memory_space<vmem>>, %arg21: memref<128x1xf32, #tpu.memory_space<vmem>>, %arg22: memref<128x128xf32, #tpu.memory_space<vmem>>, %arg23: memref<128x128xf32, #tpu.memory_space<vmem>>, %arg24: memref<1x128xf32, #tpu.memory_space<vmem>>, %arg25: memref<128x128xf32, #tpu.memory_space<vmem>>, %arg26: memref<1x128xf32, #tpu.memory_space<vmem>>, %arg27: memref<1x128xf32, #tpu.memory_space<vmem>>, %arg28: memref<1x128xf32, #tpu.memory_space<vmem>>, %arg29: memref<128x128xf32, #tpu.memory_space<vmem>>, %arg30: memref<1x128xf32, #tpu.memory_space<vmem>>, %arg31: memref<1x2xf32, #tpu.memory_space<vmem>>, %arg32: memref<1x1xf32, #tpu.memory_space<vmem>>, %arg33: memref<64x128xf32, #tpu.memory_space<vmem>>, %arg34: memref<64x3xf32, #tpu.memory_space<vmem>>, %arg35: memref<64x131xf32, #tpu.memory_space<vmem>>, %arg36: memref<64x131xf32, #tpu.memory_space<vmem>>, %arg37: memref<64x131xf32, #tpu.memory_space<vmem>>) attributes {dimension_semantics = [#tpu.dimension_semantics<arbitrary>], iteration_bounds = array<i64: 4>, scalar_prefetch = 0 : i64, scratch_operands = 3 : i64, tpu.core_type = #tpu.core_type<tc>, window_params = [{transform_indices = @transform_0, window_bounds = array<i64: 128, 64>}, {transform_indices = @transform_1, window_bounds = array<i64: 128, 64>}, {transform_indices = @transform_2, window_bounds = array<i64: 64, 128>}, {pipeline_mode = #tpu.pipeline_mode<synchronous>, transform_indices = @transform_3, window_bounds = array<i64: 64, 128>}, {pipeline_mode = #tpu.pipeline_mode<synchronous>, transform_indices = @transform_4, window_bounds = array<i64: 64, 3>}, {pipeline_mode = #tpu.pipeline_mode<synchronous>, transform_indices = @transform_5, window_bounds = array<i64: 64, 4>}, {pipeline_mode = #tpu.pipeline_mode<synchronous>, transform_indices = @transform_6, window_bounds = array<i64: 4, 64>}, {pipeline_mode = #tpu.pipeline_mode<synchronous>, transform_indices = @transform_7, window_bounds = array<i64: 64, 1>}, {pipeline_mode = #tpu.pipeline_mode<synchronous>, transform_indices = @transform_8, window_bounds = array<i64: 1, 1>}, {pipeline_mode = #tpu.pipeline_mode<synchronous>, transform_indices = @transform_9, window_bounds = array<i64: 64, 1>}, {pipeline_mode = #tpu.pipeline_mode<synchronous>, transform_indices = @transform_10, window_bounds = array<i64: 4, 1>}, {pipeline_mode = #tpu.pipeline_mode<synchronous>, transform_indices = @transform_11, window_bounds = array<i64: 4, 1>}, {pipeline_mode = #tpu.pipeline_mode<synchronous>, transform_indices = @transform_12, window_bounds = array<i64: 128, 128>}, {pipeline_mode = #tpu.pipeline_mode<synchronous>, transform_indices = @transform_13, window_bounds = array<i64: 128, 128>}, {pipeline_mode = #tpu.pipeline_mode<synchronous>, transform_indices = @transform_14, window_bounds = array<i64: 1, 128>}, {pipeline_mode = #tpu.pipeline_mode<synchronous>, transform_indices = @transform_15, window_bounds = array<i64: 1, 128>}, {pipeline_mode = #tpu.pipeline_mode<synchronous>, transform_indices = @transform_16, window_bounds = array<i64: 128, 128>}, {pipeline_mode = #tpu.pipeline_mode<synchronous>, transform_indices = @transform_17, window_bounds = array<i64: 1, 128>}, {pipeline_mode = #tpu.pipeline_mode<synchronous>, transform_indices = @transform_18, window_bounds = array<i64: 128, 128>}, {pipeline_mode = #tpu.pipeline_mode<synchronous>, transform_indices = @transform_19, window_bounds = array<i64: 1, 128>}, {pipeline_mode = #tpu.pipeline_mode<synchronous>, transform_indices = @transform_20, window_bounds = array<i64: 128, 1>}, {pipeline_mode = #tpu.pipeline_mode<synchronous>, transform_indices = @transform_21, window_bounds = array<i64: 128, 128>}, {pipeline_mode = #tpu.pipeline_mode<synchronous>, transform_indices = @transform_22, window_bounds = array<i64: 128, 128>}, {pipeline_mode = #tpu.pipeline_mode<synchronous>, transform_indices = @transform_23, window_bounds = array<i64: 1, 128>}, {pipeline_mode = #tpu.pipeline_mode<synchronous>, transform_indices = @transform_24, window_bounds = array<i64: 128, 128>}, {pipeline_mode = #tpu.pipeline_mode<synchronous>, transform_indices = @transform_25, window_bounds = array<i64: 1, 128>}, {pipeline_mode = #tpu.pipeline_mode<synchronous>, transform_indices = @transform_26, window_bounds = array<i64: 1, 128>}, {pipeline_mode = #tpu.pipeline_mode<synchronous>, transform_indices = @transform_27, window_bounds = array<i64: 1, 128>}, {pipeline_mode = #tpu.pipeline_mode<synchronous>, transform_indices = @transform_28, window_bounds = array<i64: 128, 128>}, {pipeline_mode = #tpu.pipeline_mode<synchronous>, transform_indices = @transform_29, window_bounds = array<i64: 1, 128>}, {pipeline_mode = #tpu.pipeline_mode<synchronous>, transform_indices = @transform_30, window_bounds = array<i64: 1, 2>}, {pipeline_mode = #tpu.pipeline_mode<synchronous>, transform_indices = @transform_31, window_bounds = array<i64: 1, 1>}, {pipeline_mode = #tpu.pipeline_mode<synchronous>, transform_indices = @transform_32, window_bounds = array<i64: 64, 128>}, {pipeline_mode = #tpu.pipeline_mode<synchronous>, transform_indices = @transform_33, window_bounds = array<i64: 64, 3>}]} {
    %c0_i32 = arith.constant 0 : i32
    %0 = arith.cmpi eq, %arg0, %c0_i32 : i32
    %1 = arith.extui %0 : i1 to i32
    %c0_i32_0 = arith.constant 0 : i32
    %2 = arith.cmpi ne, %1, %c0_i32_0 : i32
    scf.if %2 {
      %c0_44 = arith.constant 0 : index
      %c0_45 = arith.constant 0 : index
      %76 = vector.load %arg4[%c0_44, %c0_45] : memref<64x128xf32, #tpu.memory_space<vmem>>, vector<64x128xf32>
      %c0_46 = arith.constant 0 : index
      %c0_47 = arith.constant 0 : index
      %77 = vector.load %arg5[%c0_46, %c0_47] : memref<64x3xf32, #tpu.memory_space<vmem>>, vector<64x3xf32>
      %c0_48 = arith.constant 0 : index
      %c0_49 = arith.constant 0 : index
      %78 = vector.load %arg13[%c0_48, %c0_49] : memref<128x128xf32, #tpu.memory_space<vmem>>, vector<128x128xf32>
      %cst_50 = arith.constant dense<0.000000e+00> : vector<64x128xf32>
      %79 = tpu.matmul %76, %78, %cst_50 {dimension_numbers = #tpu.dot_dimension_numbers<[1], [0], [0], [1], [0, 0, 1, 1], [], []>} : vector<64x128xf32>, vector<128x128xf32>, vector<64x128xf32> -> vector<64x128xf32>
      %80 = tpu.concatenate %79, %77 in 1 : vector<64x128xf32>, vector<64x3xf32> -> vector<64x131xf32>
      %c0_51 = arith.constant 0 : index
      %c0_52 = arith.constant 0 : index
      %81 = vector.load %arg35[%c0_51, %c0_52] : memref<64x131xf32, #tpu.memory_space<vmem>>, vector<64x131xf32>
      tpu.vector_store %arg35[%c0_51, %c0_52], %80 {strides = array<i32>} : memref<64x131xf32, #tpu.memory_space<vmem>>, vector<64x131xf32>,
      %c0_53 = arith.constant 0 : index
      %c0_54 = arith.constant 0 : index
      %82 = vector.load %arg14[%c0_53, %c0_54] : memref<128x128xf32, #tpu.memory_space<vmem>>, vector<128x128xf32>
      %cst_55 = arith.constant dense<0.000000e+00> : vector<64x128xf32>
      %83 = tpu.matmul %76, %82, %cst_55 {dimension_numbers = #tpu.dot_dimension_numbers<[1], [0], [0], [1], [0, 0, 1, 1], [], []>} : vector<64x128xf32>, vector<128x128xf32>, vector<64x128xf32> -> vector<64x128xf32>
      %84 = tpu.concatenate %83, %77 in 1 : vector<64x128xf32>, vector<64x3xf32> -> vector<64x131xf32>
      %c0_56 = arith.constant 0 : index
      %c0_57 = arith.constant 0 : index
      %85 = vector.load %arg36[%c0_56, %c0_57] : memref<64x131xf32, #tpu.memory_space<vmem>>, vector<64x131xf32>
      tpu.vector_store %arg36[%c0_56, %c0_57], %84 {strides = array<i32>} : memref<64x131xf32, #tpu.memory_space<vmem>>, vector<64x131xf32>,
      %cst_58 = arith.constant 0.000000e+00 : f32
      %86 = vector.broadcast %cst_58 : f32 to vector<64x131xf32>
      %c0_59 = arith.constant 0 : index
      %c0_60 = arith.constant 0 : index
      %87 = vector.load %arg37[%c0_59, %c0_60] : memref<64x131xf32, #tpu.memory_space<vmem>>, vector<64x131xf32>
      tpu.vector_store %arg37[%c0_59, %c0_60], %86 {strides = array<i32>} : memref<64x131xf32, #tpu.memory_space<vmem>>, vector<64x131xf32>,
    } else {
    }
    %c0 = arith.constant 0 : index
    %c0_1 = arith.constant 0 : index
    %3 = vector.load %arg1[%c0, %c0_1] : memref<128x64xbf16, #tpu.memory_space<vmem>>, vector<128x64xbf16>
    %4 = arith.extf %3 : vector<128x64xbf16> to vector<128x64xf32>
    %c0_2 = arith.constant 0 : index
    %c0_3 = arith.constant 0 : index
    %5 = vector.load %arg2[%c0_2, %c0_3] : memref<128x64xbf16, #tpu.memory_space<vmem>>, vector<128x64xbf16>
    %6 = arith.extf %5 : vector<128x64xbf16> to vector<128x64xf32>
    %c0_4 = arith.constant 0 : index
    %c0_5 = arith.constant 0 : index
    %7 = vector.load %arg3[%c0_4, %c0_5] : memref<64x128xbf16, #tpu.memory_space<vmem>>, vector<64x128xbf16>
    %8 = arith.extf %7 : vector<64x128xbf16> to vector<64x128xf32>
    %c0_6 = arith.constant 0 : index
    %c0_7 = arith.constant 0 : index
    %9 = vector.load %arg35[%c0_6, %c0_7] : memref<64x131xf32, #tpu.memory_space<vmem>>, vector<64x131xf32>
    %cst = arith.constant dense<0.000000e+00> : vector<128x131xf32>
    %10 = tpu.matmul %4, %9, %cst {dimension_numbers = #tpu.dot_dimension_numbers<[1], [0], [0], [1], [0, 0, 1, 1], [], []>} : vector<128x64xf32>, vector<64x131xf32>, vector<128x131xf32> -> vector<128x131xf32>
    %c0_8 = arith.constant 0 : index
    %c0_9 = arith.constant 0 : index
    %11 = vector.load %arg36[%c0_8, %c0_9] : memref<64x131xf32, #tpu.memory_space<vmem>>, vector<64x131xf32>
    %cst_10 = arith.constant dense<0.000000e+00> : vector<128x131xf32>
    %12 = tpu.matmul %6, %11, %cst_10 {dimension_numbers = #tpu.dot_dimension_numbers<[1], [0], [0], [1], [0, 0, 1, 1], [], []>} : vector<128x64xf32>, vector<64x131xf32>, vector<128x131xf32> -> vector<128x131xf32>
    %13 = vector.extract_strided_slice %10 {offsets = [0, 0], sizes = [128, 128], strides = [1, 1]} : vector<128x131xf32> to vector<128x128xf32>
    %14 = vector.extract_strided_slice %12 {offsets = [0, 0], sizes = [128, 128], strides = [1, 1]} : vector<128x131xf32> to vector<128x128xf32>
    %15 = vector.extract_strided_slice %10 {offsets = [0, 128], sizes = [128, 3], strides = [1, 1]} : vector<128x131xf32> to vector<128x3xf32>
    %16 = vector.extract_strided_slice %12 {offsets = [0, 128], sizes = [128, 3], strides = [1, 1]} : vector<128x131xf32> to vector<128x3xf32>
    %17 = arith.subf %15, %16 : vector<128x3xf32>
    %18 = arith.mulf %17, %17 : vector<128x3xf32>
    %cst_11 = arith.constant dense<0.000000e+00> : vector<128xf32>
    %19 = vector.multi_reduction <add>, %18, %cst_11 [1] : vector<128x3xf32> to vector<128xf32>
    %20 = vector.shape_cast %19 : vector<128xf32> to vector<128x1xf32>
    %21 = arith.addf %13, %14 : vector<128x128xf32>
    %c0_12 = arith.constant 0 : index
    %c0_13 = arith.constant 0 : index
    %22 = vector.load %arg15[%c0_12, %c0_13] : memref<1x128xf32, #tpu.memory_space<vmem>>, vector<1x128xf32>
    %23 = vector.broadcast %20 : vector<128x1xf32> to vector<128x128xf32>
    %24 = vector.broadcast %22 : vector<1x128xf32> to vector<128x128xf32>
    %25 = arith.mulf %23, %24 : vector<128x128xf32>
    %26 = arith.addf %21, %25 : vector<128x128xf32>
    %c0_14 = arith.constant 0 : index
    %c0_15 = arith.constant 0 : index
    %27 = vector.load %arg16[%c0_14, %c0_15] : memref<1x128xf32, #tpu.memory_space<vmem>>, vector<1x128xf32>
    %28 = vector.broadcast %27 : vector<1x128xf32> to vector<128x128xf32>
    %29 = arith.addf %26, %28 : vector<128x128xf32>
    %cst_16 = arith.constant 0.000000e+00 : f32
    %30 = vector.broadcast %cst_16 : f32 to vector<128x128xf32>
    %31 = arith.subf %30, %29 : vector<128x128xf32>
    %32 = math.exp %31 : vector<128x128xf32>
    %cst_17 = arith.constant 1.000000e+00 : f32
    %33 = vector.broadcast %cst_17 : f32 to vector<128x128xf32>
    %34 = arith.addf %33, %32 : vector<128x128xf32>
    %cst_18 = arith.constant 1.000000e+00 : f32
    %35 = vector.broadcast %cst_18 : f32 to vector<128x128xf32>
    %36 = arith.divf %35, %34 : vector<128x128xf32>
    %37 = arith.mulf %29, %36 : vector<128x128xf32>
    %c0_19 = arith.constant 0 : index
    %c0_20 = arith.constant 0 : index
    %38 = vector.load %arg17[%c0_19, %c0_20] : memref<128x128xf32, #tpu.memory_space<vmem>>, vector<128x128xf32>
    %cst_21 = arith.constant dense<0.000000e+00> : vector<128x128xf32>
    %39 = tpu.matmul %37, %38, %cst_21 {dimension_numbers = #tpu.dot_dimension_numbers<[1], [0], [0], [1], [0, 0, 1, 1], [], []>} : vector<128x128xf32>, vector<128x128xf32>, vector<128x128xf32> -> vector<128x128xf32>
    %c0_22 = arith.constant 0 : index
    %c0_23 = arith.constant 0 : index
    %40 = vector.load %arg18[%c0_22, %c0_23] : memref<1x128xf32, #tpu.memory_space<vmem>>, vector<1x128xf32>
    %41 = vector.broadcast %40 : vector<1x128xf32> to vector<128x128xf32>
    %42 = arith.addf %39, %41 : vector<128x128xf32>
    %cst_24 = arith.constant 0.000000e+00 : f32
    %43 = vector.broadcast %cst_24 : f32 to vector<128x128xf32>
    %44 = arith.subf %43, %42 : vector<128x128xf32>
    %45 = math.exp %44 : vector<128x128xf32>
    %cst_25 = arith.constant 1.000000e+00 : f32
    %46 = vector.broadcast %cst_25 : f32 to vector<128x128xf32>
    %47 = arith.addf %46, %45 : vector<128x128xf32>
    %cst_26 = arith.constant 1.000000e+00 : f32
    %48 = vector.broadcast %cst_26 : f32 to vector<128x128xf32>
    %49 = arith.divf %48, %47 : vector<128x128xf32>
    %50 = arith.mulf %42, %49 : vector<128x128xf32>
    %c0_27 = arith.constant 0 : index
    %c0_28 = arith.constant 0 : index
    %51 = vector.load %arg19[%c0_27, %c0_28] : memref<128x128xf32, #tpu.memory_space<vmem>>, vector<128x128xf32>
    %cst_29 = arith.constant dense<0.000000e+00> : vector<128x128xf32>
    %52 = tpu.matmul %50, %51, %cst_29 {dimension_numbers = #tpu.dot_dimension_numbers<[1], [0], [0], [1], [0, 0, 1, 1], [], []>} : vector<128x128xf32>, vector<128x128xf32>, vector<128x128xf32> -> vector<128x128xf32>
    %c0_30 = arith.constant 0 : index
    %c0_31 = arith.constant 0 : index
    %53 = vector.load %arg20[%c0_30, %c0_31] : memref<1x128xf32, #tpu.memory_space<vmem>>, vector<1x128xf32>
    %54 = vector.broadcast %53 : vector<1x128xf32> to vector<128x128xf32>
    %55 = arith.addf %52, %54 : vector<128x128xf32>
    %cst_32 = arith.constant 0.000000e+00 : f32
    %56 = vector.broadcast %cst_32 : f32 to vector<128x128xf32>
    %57 = arith.subf %56, %55 : vector<128x128xf32>
    %58 = math.exp %57 : vector<128x128xf32>
    %cst_33 = arith.constant 1.000000e+00 : f32
    %59 = vector.broadcast %cst_33 : f32 to vector<128x128xf32>
    %60 = arith.addf %59, %58 : vector<128x128xf32>
    %cst_34 = arith.constant 1.000000e+00 : f32
    %61 = vector.broadcast %cst_34 : f32 to vector<128x128xf32>
    %62 = arith.divf %61, %60 : vector<128x128xf32>
    %63 = arith.mulf %55, %62 : vector<128x128xf32>
    %c0_35 = arith.constant 0 : index
    %c0_36 = arith.constant 0 : index
    %64 = vector.load %arg21[%c0_35, %c0_36] : memref<128x1xf32, #tpu.memory_space<vmem>>, vector<128x1xf32>
    %cst_37 = arith.constant dense<0.000000e+00> : vector<128x1xf32>
    %65 = tpu.matmul %63, %64, %cst_37 {dimension_numbers = #tpu.dot_dimension_numbers<[1], [0], [0], [1], [0, 0, 1, 1], [], []>} : vector<128x128xf32>, vector<128x1xf32>, vector<128x1xf32> -> vector<128x1xf32>
    %66 = vector.broadcast %65 : vector<128x1xf32> to vector<128x3xf32>
    %67 = arith.mulf %17, %66 : vector<128x3xf32>
    %68 = tpu.concatenate %50, %67 in 1 : vector<128x128xf32>, vector<128x3xf32> -> vector<128x131xf32>
    %c0_38 = arith.constant 0 : index
    %c0_39 = arith.constant 0 : index
    %69 = vector.load %arg37[%c0_38, %c0_39] : memref<64x131xf32, #tpu.memory_space<vmem>>, vector<64x131xf32>
    %cst_40 = arith.constant dense<0.000000e+00> : vector<64x131xf32>
    %70 = tpu.matmul %8, %68, %cst_40 {dimension_numbers = #tpu.dot_dimension_numbers<[1], [0], [0], [1], [0, 0, 1, 1], [], []>} : vector<64x128xf32>, vector<128x131xf32>, vector<64x131xf32> -> vector<64x131xf32>
    %71 = arith.addf %69, %70 : vector<64x131xf32>
    %c0_41 = arith.constant 0 : index
    %c0_42 = arith.constant 0 : index
    %72 = vector.load %arg37[%c0_41, %c0_42] : memref<64x131xf32, #tpu.memory_space<vmem>>, vector<64x131xf32>
    tpu.vector_store %arg37[%c0_41, %c0_42], %71 {strides = array<i32>} : memref<64x131xf32, #tpu.memory_space<vmem>>, vector<64x131xf32>,
    %c3_i32 = arith.constant 3 : i32
    %73 = arith.cmpi eq, %arg0, %c3_i32 : i32
    %74 = arith.extui %73 : i1 to i32
    %c0_i32_43 = arith.constant 0 : i32
    %75 = arith.cmpi ne, %74, %c0_i32_43 : i32
    scf.if %75 {
      %c0_44 = arith.constant 0 : index
      %c0_45 = arith.constant 0 : index
      %76 = vector.load %arg4[%c0_44, %c0_45] : memref<64x128xf32, #tpu.memory_space<vmem>>, vector<64x128xf32>
      %c0_46 = arith.constant 0 : index
      %c0_47 = arith.constant 0 : index
      %77 = vector.load %arg5[%c0_46, %c0_47] : memref<64x3xf32, #tpu.memory_space<vmem>>, vector<64x3xf32>
      %c0_48 = arith.constant 0 : index
      %c0_49 = arith.constant 0 : index
      %78 = vector.load %arg37[%c0_48, %c0_49] : memref<64x131xf32, #tpu.memory_space<vmem>>, vector<64x131xf32>
      %79 = vector.extract_strided_slice %78 {offsets = [0, 0], sizes = [64, 128], strides = [1, 1]} : vector<64x131xf32> to vector<64x128xf32>
      %80 = vector.extract_strided_slice %78 {offsets = [0, 128], sizes = [64, 3], strides = [1, 1]} : vector<64x131xf32> to vector<64x3xf32>
      %c0_50 = arith.constant 0 : index
      %c0_51 = arith.constant 0 : index
      %81 = vector.load %arg10[%c0_50, %c0_51] : memref<64x1xf32, #tpu.memory_space<vmem>>, vector<64x1xf32>
      %82 = vector.broadcast %81 : vector<64x1xf32> to vector<64x3xf32>
      %83 = arith.mulf %80, %82 : vector<64x3xf32>
      %84 = arith.addf %77, %83 : vector<64x3xf32>
      %c0_52 = arith.constant 0 : index
      %c0_53 = arith.constant 0 : index
      %85 = vector.load %arg34[%c0_52, %c0_53] : memref<64x3xf32, #tpu.memory_space<vmem>>, vector<64x3xf32>
      tpu.vector_store %arg34[%c0_52, %c0_53], %84 {strides = array<i32>} : memref<64x3xf32, #tpu.memory_space<vmem>>, vector<64x3xf32>,
      %c0_54 = arith.constant 0 : index
      %c0_55 = arith.constant 0 : index
      %86 = vector.load %arg22[%c0_54, %c0_55] : memref<128x128xf32, #tpu.memory_space<vmem>>, vector<128x128xf32>
      %cst_56 = arith.constant dense<0.000000e+00> : vector<64x128xf32>
      %87 = tpu.matmul %76, %86, %cst_56 {dimension_numbers = #tpu.dot_dimension_numbers<[1], [0], [0], [1], [0, 0, 1, 1], [], []>} : vector<64x128xf32>, vector<128x128xf32>, vector<64x128xf32> -> vector<64x128xf32>
      %c0_57 = arith.constant 0 : index
      %c0_58 = arith.constant 0 : index
      %88 = vector.load %arg23[%c0_57, %c0_58] : memref<128x128xf32, #tpu.memory_space<vmem>>, vector<128x128xf32>
      %cst_59 = arith.constant dense<0.000000e+00> : vector<64x128xf32>
      %89 = tpu.matmul %79, %88, %cst_59 {dimension_numbers = #tpu.dot_dimension_numbers<[1], [0], [0], [1], [0, 0, 1, 1], [], []>} : vector<64x128xf32>, vector<128x128xf32>, vector<64x128xf32> -> vector<64x128xf32>
      %90 = arith.addf %87, %89 : vector<64x128xf32>
      %c0_60 = arith.constant 0 : index
      %c0_61 = arith.constant 0 : index
      %91 = vector.load %arg24[%c0_60, %c0_61] : memref<1x128xf32, #tpu.memory_space<vmem>>, vector<1x128xf32>
      %92 = vector.broadcast %91 : vector<1x128xf32> to vector<64x128xf32>
      %93 = arith.addf %90, %92 : vector<64x128xf32>
      %cst_62 = arith.constant 0.000000e+00 : f32
      %94 = vector.broadcast %cst_62 : f32 to vector<64x128xf32>
      %95 = arith.subf %94, %93 : vector<64x128xf32>
      %96 = math.exp %95 : vector<64x128xf32>
      %cst_63 = arith.constant 1.000000e+00 : f32
      %97 = vector.broadcast %cst_63 : f32 to vector<64x128xf32>
      %98 = arith.addf %97, %96 : vector<64x128xf32>
      %cst_64 = arith.constant 1.000000e+00 : f32
      %99 = vector.broadcast %cst_64 : f32 to vector<64x128xf32>
      %100 = arith.divf %99, %98 : vector<64x128xf32>
      %101 = arith.mulf %93, %100 : vector<64x128xf32>
      %c0_65 = arith.constant 0 : index
      %c0_66 = arith.constant 0 : index
      %102 = vector.load %arg25[%c0_65, %c0_66] : memref<128x128xf32, #tpu.memory_space<vmem>>, vector<128x128xf32>
      %cst_67 = arith.constant dense<0.000000e+00> : vector<64x128xf32>
      %103 = tpu.matmul %101, %102, %cst_67 {dimension_numbers = #tpu.dot_dimension_numbers<[1], [0], [0], [1], [0, 0, 1, 1], [], []>} : vector<64x128xf32>, vector<128x128xf32>, vector<64x128xf32> -> vector<64x128xf32>
      %104 = arith.addf %76, %103 : vector<64x128xf32>
      %c0_68 = arith.constant 0 : index
      %c0_69 = arith.constant 0 : index
      %105 = vector.load %arg26[%c0_68, %c0_69] : memref<1x128xf32, #tpu.memory_space<vmem>>, vector<1x128xf32>
      %106 = vector.broadcast %105 : vector<1x128xf32> to vector<64x128xf32>
      %107 = arith.addf %104, %106 : vector<64x128xf32>
      %cst_70 = arith.constant 0.000000e+00 : f32
      %108 = vector.broadcast %cst_70 : f32 to vector<64x128xf32>
      %109 = arith.cmpf ogt, %107, %108 : vector<64x128xf32>
      %cst_71 = arith.constant 0.000000e+00 : f32
      %110 = vector.broadcast %cst_71 : f32 to vector<64x128xf32>
      %111 = arith.minimumf %107, %110 : vector<64x128xf32>
      %112 = math.exp %111 : vector<64x128xf32>
      %cst_72 = arith.constant 1.000000e+00 : f32
      %113 = vector.broadcast %cst_72 : f32 to vector<64x128xf32>
      %114 = arith.subf %112, %113 : vector<64x128xf32>
      %115 = arith.select %109, %107, %114 : vector<64x128xi1>, vector<64x128xf32>
      %c0_73 = arith.constant 0 : index
      %c0_74 = arith.constant 0 : index
      %116 = vector.load %arg8[%c0_73, %c0_74] : memref<64x1xf32, #tpu.memory_space<vmem>>, vector<64x1xf32>
      %c0_75 = arith.constant 0 : index
      %c0_76 = arith.constant 0 : index
      %117 = vector.load %arg9[%c0_75, %c0_76] : memref<1x1xf32, #tpu.memory_space<vmem>>, vector<1x1xf32>
      %118 = vector.broadcast %116 : vector<64x1xf32> to vector<64x128xf32>
      %119 = arith.mulf %115, %118 : vector<64x128xf32>
      %cst_77 = arith.constant dense<0.000000e+00> : vector<128xf32>
      %120 = vector.multi_reduction <add>, %119, %cst_77 [0] : vector<64x128xf32> to vector<128xf32>
      %121 = vector.shape_cast %120 : vector<128xf32> to vector<1x128xf32>
      %122 = vector.broadcast %117 : vector<1x1xf32> to vector<1x128xf32>
      %123 = arith.mulf %121, %122 : vector<1x128xf32>
      %124 = vector.broadcast %123 : vector<1x128xf32> to vector<64x128xf32>
      %125 = arith.subf %115, %124 : vector<64x128xf32>
      %126 = vector.broadcast %116 : vector<64x1xf32> to vector<64x128xf32>
      %127 = arith.mulf %125, %126 : vector<64x128xf32>
      %128 = arith.mulf %127, %127 : vector<64x128xf32>
      %cst_78 = arith.constant dense<0.000000e+00> : vector<128xf32>
      %129 = vector.multi_reduction <add>, %128, %cst_78 [0] : vector<64x128xf32> to vector<128xf32>
      %130 = vector.shape_cast %129 : vector<128xf32> to vector<1x128xf32>
      %131 = vector.broadcast %117 : vector<1x1xf32> to vector<1x128xf32>
      %132 = arith.mulf %130, %131 : vector<1x128xf32>
      %133 = vector.broadcast %123 : vector<1x128xf32> to vector<64x128xf32>
      %134 = arith.subf %115, %133 : vector<64x128xf32>
      %cst_79 = arith.constant 9.99999974E-6 : f32
      %135 = vector.broadcast %cst_79 : f32 to vector<1x128xf32>
      %136 = arith.addf %132, %135 : vector<1x128xf32>
      %137 = math.rsqrt %136 : vector<1x128xf32>
      %138 = vector.broadcast %137 : vector<1x128xf32> to vector<64x128xf32>
      %139 = arith.mulf %134, %138 : vector<64x128xf32>
      %c0_80 = arith.constant 0 : index
      %c0_81 = arith.constant 0 : index
      %140 = vector.load %arg27[%c0_80, %c0_81] : memref<1x128xf32, #tpu.memory_space<vmem>>, vector<1x128xf32>
      %141 = vector.broadcast %140 : vector<1x128xf32> to vector<64x128xf32>
      %142 = arith.mulf %139, %141 : vector<64x128xf32>
      %c0_82 = arith.constant 0 : index
      %c0_83 = arith.constant 0 : index
      %143 = vector.load %arg28[%c0_82, %c0_83] : memref<1x128xf32, #tpu.memory_space<vmem>>, vector<1x128xf32>
      %144 = vector.broadcast %143 : vector<1x128xf32> to vector<64x128xf32>
      %145 = arith.addf %142, %144 : vector<64x128xf32>
      %c0_84 = arith.constant 0 : index
      %c0_85 = arith.constant 0 : index
      %146 = vector.load %arg29[%c0_84, %c0_85] : memref<128x128xf32, #tpu.memory_space<vmem>>, vector<128x128xf32>
      %cst_86 = arith.constant dense<0.000000e+00> : vector<64x128xf32>
      %147 = tpu.matmul %145, %146, %cst_86 {dimension_numbers = #tpu.dot_dimension_numbers<[1], [0], [0], [1], [0, 0, 1, 1], [], []>} : vector<64x128xf32>, vector<128x128xf32>, vector<64x128xf32> -> vector<64x128xf32>
      %c0_87 = arith.constant 0 : index
      %c0_88 = arith.constant 0 : index
      %148 = vector.load %arg30[%c0_87, %c0_88] : memref<1x128xf32, #tpu.memory_space<vmem>>, vector<1x128xf32>
      %149 = vector.broadcast %148 : vector<1x128xf32> to vector<64x128xf32>
      %150 = arith.addf %147, %149 : vector<64x128xf32>
      %cst_89 = arith.constant 0.000000e+00 : f32
      %151 = vector.broadcast %cst_89 : f32 to vector<64x128xf32>
      %152 = arith.cmpf ogt, %150, %151 : vector<64x128xf32>
      %cst_90 = arith.constant 0.000000e+00 : f32
      %153 = vector.broadcast %cst_90 : f32 to vector<64x128xf32>
      %154 = arith.minimumf %150, %153 : vector<64x128xf32>
      %155 = math.exp %154 : vector<64x128xf32>
      %cst_91 = arith.constant 1.000000e+00 : f32
      %156 = vector.broadcast %cst_91 : f32 to vector<64x128xf32>
      %157 = arith.subf %155, %156 : vector<64x128xf32>
      %158 = arith.select %152, %150, %157 : vector<64x128xi1>, vector<64x128xf32>
      %c0_92 = arith.constant 0 : index
      %c0_93 = arith.constant 0 : index
      %159 = vector.load %arg6[%c0_92, %c0_93] : memref<64x4xf32, #tpu.memory_space<vmem>>, vector<64x4xf32>
      %c0_94 = arith.constant 0 : index
      %c0_95 = arith.constant 0 : index
      %160 = vector.load %arg7[%c0_94, %c0_95] : memref<4x64xf32, #tpu.memory_space<vmem>>, vector<4x64xf32>
      %cst_96 = arith.constant dense<0.000000e+00> : vector<4x128xf32>
      %161 = tpu.matmul %160, %158, %cst_96 {dimension_numbers = #tpu.dot_dimension_numbers<[1], [0], [0], [1], [0, 0, 1, 1], [], []>} : vector<4x64xf32>, vector<64x128xf32>, vector<4x128xf32> -> vector<4x128xf32>
      %c0_97 = arith.constant 0 : index
      %c0_98 = arith.constant 0 : index
      %162 = vector.load %arg11[%c0_97, %c0_98] : memref<4x1xf32, #tpu.memory_space<vmem>>, vector<4x1xf32>
      %163 = vector.broadcast %162 : vector<4x1xf32> to vector<4x128xf32>
      %164 = arith.mulf %161, %163 : vector<4x128xf32>
      %165 = vector.extract_strided_slice %159 {offsets = [0, 0], sizes = [64, 1], strides = [1, 1]} : vector<64x4xf32> to vector<64x1xf32>
      %cst_99 = arith.constant 5.000000e-01 : f32
      %166 = vector.broadcast %cst_99 : f32 to vector<64x1xf32>
      %167 = arith.cmpf ogt, %165, %166 : vector<64x1xf32>
      %cst_100 = arith.constant -1.000000e+30 : f32
      %168 = vector.shape_cast %167 : vector<64x1xi1> to vector<64x1xi1>
      %169 = vector.broadcast %168 : vector<64x1xi1> to vector<64x128xi1>
      %170 = vector.broadcast %cst_100 : f32 to vector<64x128xf32>
      %171 = arith.select %169, %158, %170 : vector<64x128xi1>, vector<64x128xf32>
      %cst_101 = arith.constant dense<0xFF800000> : vector<128xf32>
      %172 = vector.multi_reduction <maximumf>, %171, %cst_101 [0] : vector<64x128xf32> to vector<128xf32>
      %173 = vector.shape_cast %172 : vector<128xf32> to vector<1x128xf32>
      %174 = vector.extract_strided_slice %159 {offsets = [0, 1], sizes = [64, 1], strides = [1, 1]} : vector<64x4xf32> to vector<64x1xf32>
      %cst_102 = arith.constant 5.000000e-01 : f32
      %175 = vector.broadcast %cst_102 : f32 to vector<64x1xf32>
      %176 = arith.cmpf ogt, %174, %175 : vector<64x1xf32>
      %cst_103 = arith.constant -1.000000e+30 : f32
      %177 = vector.shape_cast %176 : vector<64x1xi1> to vector<64x1xi1>
      %178 = vector.broadcast %177 : vector<64x1xi1> to vector<64x128xi1>
      %179 = vector.broadcast %cst_103 : f32 to vector<64x128xf32>
      %180 = arith.select %178, %158, %179 : vector<64x128xi1>, vector<64x128xf32>
      %cst_104 = arith.constant dense<0xFF800000> : vector<128xf32>
      %181 = vector.multi_reduction <maximumf>, %180, %cst_104 [0] : vector<64x128xf32> to vector<128xf32>
      %182 = vector.shape_cast %181 : vector<128xf32> to vector<1x128xf32>
      %183 = vector.extract_strided_slice %159 {offsets = [0, 2], sizes = [64, 1], strides = [1, 1]} : vector<64x4xf32> to vector<64x1xf32>
      %cst_105 = arith.constant 5.000000e-01 : f32
      %184 = vector.broadcast %cst_105 : f32 to vector<64x1xf32>
      %185 = arith.cmpf ogt, %183, %184 : vector<64x1xf32>
      %cst_106 = arith.constant -1.000000e+30 : f32
      %186 = vector.shape_cast %185 : vector<64x1xi1> to vector<64x1xi1>
      %187 = vector.broadcast %186 : vector<64x1xi1> to vector<64x128xi1>
      %188 = vector.broadcast %cst_106 : f32 to vector<64x128xf32>
      %189 = arith.select %187, %158, %188 : vector<64x128xi1>, vector<64x128xf32>
      %cst_107 = arith.constant dense<0xFF800000> : vector<128xf32>
      %190 = vector.multi_reduction <maximumf>, %189, %cst_107 [0] : vector<64x128xf32> to vector<128xf32>
      %191 = vector.shape_cast %190 : vector<128xf32> to vector<1x128xf32>
      %192 = vector.extract_strided_slice %159 {offsets = [0, 3], sizes = [64, 1], strides = [1, 1]} : vector<64x4xf32> to vector<64x1xf32>
      %cst_108 = arith.constant 5.000000e-01 : f32
      %193 = vector.broadcast %cst_108 : f32 to vector<64x1xf32>
      %194 = arith.cmpf ogt, %192, %193 : vector<64x1xf32>
      %cst_109 = arith.constant -1.000000e+30 : f32
      %195 = vector.shape_cast %194 : vector<64x1xi1> to vector<64x1xi1>
      %196 = vector.broadcast %195 : vector<64x1xi1> to vector<64x128xi1>
      %197 = vector.broadcast %cst_109 : f32 to vector<64x128xf32>
      %198 = arith.select %196, %158, %197 : vector<64x128xi1>, vector<64x128xf32>
      %cst_110 = arith.constant dense<0xFF800000> : vector<128xf32>
      %199 = vector.multi_reduction <maximumf>, %198, %cst_110 [0] : vector<64x128xf32> to vector<128xf32>
      %200 = vector.shape_cast %199 : vector<128xf32> to vector<1x128xf32>
      %201 = tpu.concatenate %173, %182, %191, %200 in 0 : vector<1x128xf32>, vector<1x128xf32>, vector<1x128xf32>, vector<1x128xf32> -> vector<4x128xf32>
      %c0_111 = arith.constant 0 : index
      %c0_112 = arith.constant 0 : index
      %202 = vector.load %arg12[%c0_111, %c0_112] : memref<4x1xf32, #tpu.memory_space<vmem>>, vector<4x1xf32>
      %cst_113 = arith.constant 5.000000e-01 : f32
      %203 = vector.broadcast %cst_113 : f32 to vector<4x1xf32>
      %204 = arith.cmpf ogt, %202, %203 : vector<4x1xf32>
      %cst_114 = arith.constant 0.000000e+00 : f32
      %205 = vector.shape_cast %204 : vector<4x1xi1> to vector<4x1xi1>
      %206 = vector.broadcast %205 : vector<4x1xi1> to vector<4x128xi1>
      %207 = vector.broadcast %cst_114 : f32 to vector<4x128xf32>
      %208 = arith.select %206, %201, %207 : vector<4x128xi1>, vector<4x128xf32>
      %c0_115 = arith.constant 0 : index
      %c0_116 = arith.constant 0 : index
      %209 = vector.load %arg31[%c0_115, %c0_116] : memref<1x2xf32, #tpu.memory_space<vmem>>, vector<1x2xf32>
      %210 = vector.extract_strided_slice %209 {offsets = [0, 0], sizes = [1, 1], strides = [1, 1]} : vector<1x2xf32> to vector<1x1xf32>
      %211 = vector.broadcast %210 : vector<1x1xf32> to vector<4x128xf32>
      %212 = arith.mulf %211, %208 : vector<4x128xf32>
      %213 = vector.extract_strided_slice %209 {offsets = [0, 1], sizes = [1, 1], strides = [1, 1]} : vector<1x2xf32> to vector<1x1xf32>
      %214 = vector.broadcast %213 : vector<1x1xf32> to vector<4x128xf32>
      %215 = arith.mulf %214, %164 : vector<4x128xf32>
      %216 = arith.addf %212, %215 : vector<4x128xf32>
      %c0_117 = arith.constant 0 : index
      %c0_118 = arith.constant 0 : index
      %217 = vector.load %arg32[%c0_117, %c0_118] : memref<1x1xf32, #tpu.memory_space<vmem>>, vector<1x1xf32>
      %218 = vector.broadcast %217 : vector<1x1xf32> to vector<4x128xf32>
      %219 = arith.addf %216, %218 : vector<4x128xf32>
      %cst_119 = arith.constant 0.000000e+00 : f32
      %220 = vector.broadcast %cst_119 : f32 to vector<4x128xf32>
      %221 = arith.cmpf ogt, %219, %220 : vector<4x128xf32>
      %cst_120 = arith.constant 0.000000e+00 : f32
      %222 = vector.broadcast %cst_120 : f32 to vector<4x128xf32>
      %223 = arith.minimumf %219, %222 : vector<4x128xf32>
      %224 = math.exp %223 : vector<4x128xf32>
      %cst_121 = arith.constant 1.000000e+00 : f32
      %225 = vector.broadcast %cst_121 : f32 to vector<4x128xf32>
      %226 = arith.subf %224, %225 : vector<4x128xf32>
      %227 = arith.select %221, %219, %226 : vector<4x128xi1>, vector<4x128xf32>
      %cst_122 = arith.constant dense<0.000000e+00> : vector<64x128xf32>
      %228 = tpu.matmul %159, %227, %cst_122 {dimension_numbers = #tpu.dot_dimension_numbers<[1], [0], [0], [1], [0, 0, 1, 1], [], []>} : vector<64x4xf32>, vector<4x128xf32>, vector<64x128xf32> -> vector<64x128xf32>
      %229 = arith.addf %145, %228 : vector<64x128xf32>
      %c0_123 = arith.constant 0 : index
      %c0_124 = arith.constant 0 : index
      %230 = vector.load %arg33[%c0_123, %c0_124] : memref<64x128xf32, #tpu.memory_space<vmem>>, vector<64x128xf32>
      tpu.vector_store %arg33[%c0_123, %c0_124], %229 {strides = array<i32>} : memref<64x128xf32, #tpu.memory_space<vmem>>, vector<64x128xf32>,
    } else {
    }
    return
  }
  func.func @transform_0(%arg0: i32) -> (i32, i32) {
    %c0_i32 = arith.constant 0 : i32
    %c0_i32_0 = arith.constant 0 : i32
    return %arg0, %c0_i32 : i32, i32
  }
  func.func @transform_1(%arg0: i32) -> (i32, i32) {
    %c0_i32 = arith.constant 0 : i32
    %c0_i32_0 = arith.constant 0 : i32
    return %arg0, %c0_i32 : i32, i32
  }
  func.func @transform_2(%arg0: i32) -> (i32, i32) {
    %c0_i32 = arith.constant 0 : i32
    %c0_i32_0 = arith.constant 0 : i32
    return %c0_i32, %arg0 : i32, i32
  }
  func.func @transform_3(%arg0: i32) -> (i32, i32) {
    %c0_i32 = arith.constant 0 : i32
    %c0_i32_0 = arith.constant 0 : i32
    %c0_i32_1 = arith.constant 0 : i32
    return %c0_i32, %c0_i32_0 : i32, i32
  }
  func.func @transform_4(%arg0: i32) -> (i32, i32) {
    %c0_i32 = arith.constant 0 : i32
    %c0_i32_0 = arith.constant 0 : i32
    %c0_i32_1 = arith.constant 0 : i32
    return %c0_i32, %c0_i32_0 : i32, i32
  }
  func.func @transform_5(%arg0: i32) -> (i32, i32) {
    %c0_i32 = arith.constant 0 : i32
    %c0_i32_0 = arith.constant 0 : i32
    %c0_i32_1 = arith.constant 0 : i32
    return %c0_i32, %c0_i32_0 : i32, i32
  }
  func.func @transform_6(%arg0: i32) -> (i32, i32) {
    %c0_i32 = arith.constant 0 : i32
    %c0_i32_0 = arith.constant 0 : i32
    %c0_i32_1 = arith.constant 0 : i32
    return %c0_i32, %c0_i32_0 : i32, i32
  }
  func.func @transform_7(%arg0: i32) -> (i32, i32) {
    %c0_i32 = arith.constant 0 : i32
    %c0_i32_0 = arith.constant 0 : i32
    %c0_i32_1 = arith.constant 0 : i32
    return %c0_i32, %c0_i32_0 : i32, i32
  }
  func.func @transform_8(%arg0: i32) -> (i32, i32) {
    %c0_i32 = arith.constant 0 : i32
    %c0_i32_0 = arith.constant 0 : i32
    %c0_i32_1 = arith.constant 0 : i32
    return %c0_i32, %c0_i32_0 : i32, i32
  }
  func.func @transform_9(%arg0: i32) -> (i32, i32) {
    %c0_i32 = arith.constant 0 : i32
    %c0_i32_0 = arith.constant 0 : i32
    %c0_i32_1 = arith.constant 0 : i32
    return %c0_i32, %c0_i32_0 : i32, i32
  }
  func.func @transform_10(%arg0: i32) -> (i32, i32) {
    %c0_i32 = arith.constant 0 : i32
    %c0_i32_0 = arith.constant 0 : i32
    %c0_i32_1 = arith.constant 0 : i32
    return %c0_i32, %c0_i32_0 : i32, i32
  }
  func.func @transform_11(%arg0: i32) -> (i32, i32) {
    %c0_i32 = arith.constant 0 : i32
    %c0_i32_0 = arith.constant 0 : i32
    %c0_i32_1 = arith.constant 0 : i32
    return %c0_i32, %c0_i32_0 : i32, i32
  }
  func.func @transform_12(%arg0: i32) -> (i32, i32) {
    %c0_i32 = arith.constant 0 : i32
    %c0_i32_0 = arith.constant 0 : i32
    %c0_i32_1 = arith.constant 0 : i32
    return %c0_i32, %c0_i32_0 : i32, i32
  }
  func.func @transform_13(%arg0: i32) -> (i32, i32) {
    %c0_i32 = arith.constant 0 : i32
    %c0_i32_0 = arith.constant 0 : i32
    %c0_i32_1 = arith.constant 0 : i32
    return %c0_i32, %c0_i32_0 : i32, i32
  }
  func.func @transform_14(%arg0: i32) -> (i32, i32) {
    %c0_i32 = arith.constant 0 : i32
    %c0_i32_0 = arith.constant 0 : i32
    %c0_i32_1 = arith.constant 0 : i32
    return %c0_i32, %c0_i32_0 : i32, i32
  }
  func.func @transform_15(%arg0: i32) -> (i32, i32) {
    %c0_i32 = arith.constant 0 : i32
    %c0_i32_0 = arith.constant 0 : i32
    %c0_i32_1 = arith.constant 0 : i32
    return %c0_i32, %c0_i32_0 : i32, i32
  }
  func.func @transform_16(%arg0: i32) -> (i32, i32) {
    %c0_i32 = arith.constant 0 : i32
    %c0_i32_0 = arith.constant 0 : i32
    %c0_i32_1 = arith.constant 0 : i32
    return %c0_i32, %c0_i32_0 : i32, i32
  }
  func.func @transform_17(%arg0: i32) -> (i32, i32) {
    %c0_i32 = arith.constant 0 : i32
    %c0_i32_0 = arith.constant 0 : i32
    %c0_i32_1 = arith.constant 0 : i32
    return %c0_i32, %c0_i32_0 : i32, i32
  }
  func.func @transform_18(%arg0: i32) -> (i32, i32) {
    %c0_i32 = arith.constant 0 : i32
    %c0_i32_0 = arith.constant 0 : i32
    %c0_i32_1 = arith.constant 0 : i32
    return %c0_i32, %c0_i32_0 : i32, i32
  }
  func.func @transform_19(%arg0: i32) -> (i32, i32) {
    %c0_i32 = arith.constant 0 : i32
    %c0_i32_0 = arith.constant 0 : i32
    %c0_i32_1 = arith.constant 0 : i32
    return %c0_i32, %c0_i32_0 : i32, i32
  }
  func.func @transform_20(%arg0: i32) -> (i32, i32) {
    %c0_i32 = arith.constant 0 : i32
    %c0_i32_0 = arith.constant 0 : i32
    %c0_i32_1 = arith.constant 0 : i32
    return %c0_i32, %c0_i32_0 : i32, i32
  }
  func.func @transform_21(%arg0: i32) -> (i32, i32) {
    %c0_i32 = arith.constant 0 : i32
    %c0_i32_0 = arith.constant 0 : i32
    %c0_i32_1 = arith.constant 0 : i32
    return %c0_i32, %c0_i32_0 : i32, i32
  }
  func.func @transform_22(%arg0: i32) -> (i32, i32) {
    %c0_i32 = arith.constant 0 : i32
    %c0_i32_0 = arith.constant 0 : i32
    %c0_i32_1 = arith.constant 0 : i32
    return %c0_i32, %c0_i32_0 : i32, i32
  }
  func.func @transform_23(%arg0: i32) -> (i32, i32) {
    %c0_i32 = arith.constant 0 : i32
    %c0_i32_0 = arith.constant 0 : i32
    %c0_i32_1 = arith.constant 0 : i32
    return %c0_i32, %c0_i32_0 : i32, i32
  }
  func.func @transform_24(%arg0: i32) -> (i32, i32) {
    %c0_i32 = arith.constant 0 : i32
    %c0_i32_0 = arith.constant 0 : i32
    %c0_i32_1 = arith.constant 0 : i32
    return %c0_i32, %c0_i32_0 : i32, i32
  }
  func.func @transform_25(%arg0: i32) -> (i32, i32) {
    %c0_i32 = arith.constant 0 : i32
    %c0_i32_0 = arith.constant 0 : i32
    %c0_i32_1 = arith.constant 0 : i32
    return %c0_i32, %c0_i32_0 : i32, i32
  }
  func.func @transform_26(%arg0: i32) -> (i32, i32) {
    %c0_i32 = arith.constant 0 : i32
    %c0_i32_0 = arith.constant 0 : i32
    %c0_i32_1 = arith.constant 0 : i32
    return %c0_i32, %c0_i32_0 : i32, i32
  }
  func.func @transform_27(%arg0: i32) -> (i32, i32) {
    %c0_i32 = arith.constant 0 : i32
    %c0_i32_0 = arith.constant 0 : i32
    %c0_i32_1 = arith.constant 0 : i32
    return %c0_i32, %c0_i32_0 : i32, i32
  }
  func.func @transform_28(%arg0: i32) -> (i32, i32) {
    %c0_i32 = arith.constant 0 : i32
    %c0_i32_0 = arith.constant 0 : i32
    %c0_i32_1 = arith.constant 0 : i32
    return %c0_i32, %c0_i32_0 : i32, i32
  }
  func.func @transform_29(%arg0: i32) -> (i32, i32) {
    %c0_i32 = arith.constant 0 : i32
    %c0_i32_0 = arith.constant 0 : i32
    %c0_i32_1 = arith.constant 0 : i32
    return %c0_i32, %c0_i32_0 : i32, i32
  }
  func.func @transform_30(%arg0: i32) -> (i32, i32) {
    %c0_i32 = arith.constant 0 : i32
    %c0_i32_0 = arith.constant 0 : i32
    %c0_i32_1 = arith.constant 0 : i32
    return %c0_i32, %c0_i32_0 : i32, i32
  }
  func.func @transform_31(%arg0: i32) -> (i32, i32) {
    %c0_i32 = arith.constant 0 : i32
    %c0_i32_0 = arith.constant 0 : i32
    %c0_i32_1 = arith.constant 0 : i32
    return %c0_i32, %c0_i32_0 : i32, i32
  }
  func.func @transform_32(%arg0: i32) -> (i32, i32) {
    %c0_i32 = arith.constant 0 : i32
    %c0_i32_0 = arith.constant 0 : i32
    %c0_i32_1 = arith.constant 0 : i32
    return %c0_i32, %c0_i32_0 : i32, i32
  }
  func.func @transform_33(%arg0: i32) -> (i32, i32) {
    %c0_i32 = arith.constant 0 : i32
    %c0_i32_0 = arith.constant 0 : i32
    %c0_i32_1 = arith.constant 0 : i32
    return %c0_i32, %c0_i32_0 : i32, i32
  }
}

</mosaic_0001>

<llo_original>
// kernel: tpu_custom_call.1
$region0: #{tpu_custom_call.1}
  #allocation0 [shape = 'u32[]', space=smem, size = 0x4, offset = 0x4, fixed_abs, tag = 'smem constant byte address 0x4 - core index']
  #allocation1 [shape = 'u32[144,128]{1,0:T(1,128)}', space=vmem, size = 0x12000, scoped, tag = 'internal scratch']
  #allocation2 [shape = 'f32[64,131]{1,0:T(8,128)}', space=vmem, size = 0x10000, scoped, tag = 'scratch operand']
  #allocation3 [shape = 'f32[64,131]{1,0:T(8,128)}', space=vmem, size = 0x10000, scoped, tag = 'scratch operand']
  #allocation4 [shape = 'f32[64,131]{1,0:T(8,128)}', space=vmem, size = 0x10000, scoped, tag = 'scratch operand']
  #allocation5 [shape = 'f32[1,1]{1,0:T(1,128)S(1)}', space=vmem, size = 0x200, scoped, tag = 'scoped memory for tpu_custom_call.1']
  #allocation6 [shape = 'f32[1,1]{1,0:T(1,128)S(1)}', space=vmem, size = 0x200, scoped, tag = 'scoped memory for tpu_custom_call.1']
  %s0 = inlined_call_operand.smem [shape: u32[34], index: -1, kind: input, shape index: {}]
  %s1 = sld [smem:[%s0]]
  %s2 = scalar_lea.smem %s0, 1
  %s3 = sld [smem:[%s2]]
  %s4 = scalar_lea.smem %s0, 2
  %s5 = sld [smem:[%s4]]
  %s6 = scalar_lea.smem %s0, 3
  %s7 = sld [smem:[%s6]]
  %s8 = scalar_lea.smem %s0, 4
  %s9 = sld [smem:[%s8]]
  %s10 = scalar_lea.smem %s0, 5
  %s11 = sld [smem:[%s10]]
  %s12 = scalar_lea.smem %s0, 6
  %s13 = sld [smem:[%s12]]
  %s14 = scalar_lea.smem %s0, 7
  %s15 = sld [smem:[%s14]]
  %s16 = scalar_lea.smem %s0, 8
  %s17 = sld [smem:[%s16]]
  %s18 = scalar_lea.smem %s0, 9
  %s19 = sld [smem:[%s18]]
  %s20 = scalar_lea.smem %s0, 10
  %s21 = sld [smem:[%s20]]
  %s22 = scalar_lea.smem %s0, 11
  %s23 = sld [smem:[%s22]]
  %s24 = scalar_lea.smem %s0, 12
  %s25 = sld [smem:[%s24]]
  %s26 = scalar_lea.smem %s0, 13
  %s27 = sld [smem:[%s26]]
  %s28 = scalar_lea.smem %s0, 14
  %s29 = sld [smem:[%s28]]
  %s30 = scalar_lea.smem %s0, 15
  %s31 = sld [smem:[%s30]]
  %s32 = scalar_lea.smem %s0, 16
  %s33 = sld [smem:[%s32]]
  %s34 = scalar_lea.smem %s0, 17
  %s35 = sld [smem:[%s34]]
  %s36 = scalar_lea.smem %s0, 18
  %s37 = sld [smem:[%s36]]
  %s38 = scalar_lea.smem %s0, 19
  %s39 = sld [smem:[%s38]]
  %s40 = scalar_lea.smem %s0, 20
  %s41 = sld [smem:[%s40]]
  %s42 = scalar_lea.smem %s0, 21
  %s43 = sld [smem:[%s42]]
  %s44 = scalar_lea.smem %s0, 22
  %s45 = sld [smem:[%s44]]
  %s46 = scalar_lea.smem %s0, 23
  %s47 = sld [smem:[%s46]]
  %s48 = scalar_lea.smem %s0, 24
  %s49 = sld [smem:[%s48]]
  %s50 = scalar_lea.smem %s0, 25
  %s51 = sld [smem:[%s50]]
  %s52 = scalar_lea.smem %s0, 26
  %s53 = sld [smem:[%s52]]
  %s54 = scalar_lea.smem %s0, 27
  %s55 = sld [smem:[%s54]]
  %s56 = scalar_lea.smem %s0, 28
  %s57 = sld [smem:[%s56]]
  %s58 = scalar_lea.smem %s0, 29
  %s59 = sld [smem:[%s58]]
  %s60 = scalar_lea.smem %s0, 30
  %s61 = sld [smem:[%s60]]
  %s62 = scalar_lea.smem %s0, 31
  %s63 = sld [smem:[%s62]]
  %s64 = scalar_lea.smem %s0, 32
  %s65 = sld [smem:[%s64]]
  %s66 = scalar_lea.smem %s0, 33
  %s67 = sld [smem:[%s66]]
  %68 = xla_tuple %s65, %s67
  %s69 = sld [smem:[#allocation0]]
  $region222: #{tpu_custom_call.1} parent=0
    _
  %s71 = ssub.s32 1, %s69
  %s72 = scalar_select 0, %s71, %s69
  %v73 = vstv %s17
  %74 = vst [vmem:[#allocation5] sm:$0x1] %v73
  %v75 = vstv %s63
  %76 = vst [vmem:[#allocation6] sm:$0x1] %v75
  $region1: #{tpu_custom_call.1} parent=0
    #allocation7 [shape = 'u8[32768]{0}', space=vmem, size = 0x8000, scoped, tag = 'input window, operand 2']
    #allocation8 [shape = 'u8[32768]{0}', space=vmem, size = 0x8000, scoped, tag = 'input window, operand 3, single buffered']
    #allocation9 [shape = 's32[2]{0}', space=sflag, size = 0x8, scoped, tag = 'scoped memory for tpu_custom_call.1']
    #allocation10 [shape = 's32[2]{0}', space=sflag, size = 0x8, scoped, tag = 'scoped memory for tpu_custom_call.1']
    #allocation11 [shape = 'u8[32768]{0}', space=vmem, size = 0x8000, scoped, tag = 'output window, operand 0, single buffered']
    %77 = vsyncpa [#allocation9], 0
    %78 = vsyncpa [#allocation10], 0
    loop: start=0, step=1, limit=6
    $region2: #{tpu_custom_call.1} parent=1 // loop_pre_header
      _
    $region3: #{tpu_custom_call.1} parent=1 // loop_header
      %s80 = sphi 0, %s84
      %p81 = scmp.ge.s32.totalorder %s80, 6
      %s90 = sphi 0, %s92
      %s93 = sphi 0, %s90
      %s94 = sphi 0, %s93
      %s110 = sphi 0, %s94
      %s116 = sphi 0, %s118
      %s119 = sphi 0, %s116
      %s120 = sphi 0, %s119
      %s136 = sphi 0, %s120
      %s142 = sphi 0, %s144
      %s145 = sphi 0, %s142
      %s146 = sphi 0, %s145
      %s162 = sphi 0, %s146
      %s166 = sphi 0, %s166
      %s168 = sphi 0, %s166
      %s169 = sphi 0, %s168
      %s183 = sphi 0, %s169
      %s187 = sphi 0, %s187
      %s189 = sphi 0, %s187
      %s190 = sphi 0, %s189
      %s204 = sphi 0, %s190
      %s208 = sphi 0, %s208
      %s210 = sphi 0, %s208
      %s211 = sphi 0, %s210
      %s225 = sphi 0, %s211
      %s229 = sphi 0, %s229
      %s231 = sphi 0, %s229
      %s232 = sphi 0, %s231
      %s246 = sphi 0, %s232
      %s250 = sphi 0, %s250
      %s252 = sphi 0, %s250
      %s253 = sphi 0, %s252
      %s267 = sphi 0, %s253
      %s271 = sphi 0, %s271
      %s273 = sphi 0, %s271
      %s274 = sphi 0, %s273
      %s288 = sphi 0, %s274
      %s292 = sphi 0, %s292
      %s294 = sphi 0, %s292
      %s295 = sphi 0, %s294
      %s309 = sphi 0, %s295
      %s313 = sphi 0, %s313
      %s315 = sphi 0, %s313
      %s316 = sphi 0, %s315
      %s330 = sphi 0, %s316
      %s334 = sphi 0, %s334
      %s336 = sphi 0, %s334
      %s337 = sphi 0, %s336
      %s351 = sphi 0, %s337
      %s355 = sphi 0, %s355
      %s357 = sphi 0, %s355
      %s358 = sphi 0, %s357
      %s372 = sphi 0, %s358
      %s376 = sphi 0, %s376
      %s378 = sphi 0, %s376
      %s379 = sphi 0, %s378
      %s393 = sphi 0, %s379
      %s397 = sphi 0, %s397
      %s399 = sphi 0, %s397
      %s400 = sphi 0, %s399
      %s414 = sphi 0, %s400
      %s418 = sphi 0, %s418
      %s420 = sphi 0, %s418
      %s421 = sphi 0, %s420
      %s435 = sphi 0, %s421
      %s439 = sphi 0, %s439
      %s441 = sphi 0, %s439
      %s442 = sphi 0, %s441
      %s456 = sphi 0, %s442
      %s460 = sphi 0, %s460
      %s462 = sphi 0, %s460
      %s463 = sphi 0, %s462
      %s477 = sphi 0, %s463
      %s481 = sphi 0, %s481
      %s483 = sphi 0, %s481
      %s484 = sphi 0, %s483
      %s498 = sphi 0, %s484
      %s502 = sphi 0, %s502
      %s504 = sphi 0, %s502
      %s505 = sphi 0, %s504
      %s519 = sphi 0, %s505
      %s523 = sphi 0, %s523
      %s525 = sphi 0, %s523
      %s526 = sphi 0, %s525
      %s540 = sphi 0, %s526
      %s544 = sphi 0, %s544
      %s546 = sphi 0, %s544
      %s547 = sphi 0, %s546
      %s561 = sphi 0, %s547
      %s565 = sphi 0, %s565
      %s567 = sphi 0, %s565
      %s568 = sphi 0, %s567
      %s582 = sphi 0, %s568
      %s586 = sphi 0, %s586
      %s588 = sphi 0, %s586
      %s589 = sphi 0, %s588
      %s603 = sphi 0, %s589
      %s607 = sphi 0, %s607
      %s609 = sphi 0, %s607
      %s610 = sphi 0, %s609
      %s624 = sphi 0, %s610
      %s628 = sphi 0, %s628
      %s630 = sphi 0, %s628
      %s631 = sphi 0, %s630
      %s645 = sphi 0, %s631
      %s649 = sphi 0, %s649
      %s651 = sphi 0, %s649
      %s652 = sphi 0, %s651
      %s666 = sphi 0, %s652
      %s670 = sphi 0, %s670
      %s672 = sphi 0, %s670
      %s673 = sphi 0, %s672
      %s687 = sphi 0, %s673
      %s691 = sphi 0, %s691
      %s693 = sphi 0, %s691
      %s694 = sphi 0, %s693
      %s708 = sphi 0, %s694
      %s712 = sphi 0, %s712
      %s714 = sphi 0, %s712
      %s715 = sphi 0, %s714
      %s729 = sphi 0, %s715
      %s733 = sphi 0, %s733
      %s735 = sphi 0, %s733
      %s736 = sphi 0, %s735
      %s750 = sphi 0, %s736
      %s754 = sphi 0, %s754
      %s756 = sphi 0, %s754
      %s757 = sphi 0, %s756
      %s771 = sphi 0, %s757
      %s775 = sphi 0, %s775
      %s777 = sphi 0, %s775
      %s778 = sphi 0, %s777
      %s792 = sphi 0, %s778
      %s796 = sphi 0, %s796
      %s798 = sphi 0, %s796
      %s799 = sphi 0, %s798
      %s813 = sphi 0, %s799
    $region4: #{tpu_custom_call.1} parent=1 // loop_header_branch
      %83 = sbr.rel (%p81) target = $region8
    $region5: #{tpu_custom_call.1} parent=1 // loop_body
      %s85 = ssub.s32 %s80, 1
      %s86 = ssub.s32 %s80, 2
      %s87 = sadd.s32 %s80, 1
      %s88 = ssub.s32 %s80, %s87
      %p89 = scmp.eq.s32.totalorder %s88, 0
      %s91 = sadd.s32 %s90, 1
      %s92 = scalar_select %p89, %s90, %s91
      %p95 = pneg %p89
      %p96 = scmp.eq.s32.totalorder %s80, 3
      %p97 = por %p95, %p96
      %p98 = scmp.ne.s32.totalorder %s90, %s93
      %p99 = scmp.eq.s32.totalorder %s80, 0
      %p100 = por %p98, %p99
      %p101 = scmp.ne.s32.totalorder %s90, %s93
      %p102 = scmp.eq.s32.totalorder %s85, 3
      %p103 = por %p101, %p102
      %p104 = scmp.ne.s32.totalorder %s93, %s94
      %p105 = scmp.eq.s32.totalorder %s85, 0
      %p106 = por %p104, %p105
      %p107 = scmp.ne.s32.totalorder %s93, %s94
      %p108 = scmp.eq.s32.totalorder %s86, 3
      %p109 = por %p107, %p108
      %p111 = scmp.ne.s32.totalorder %s94, %s110
      %p112 = scmp.eq.s32.totalorder %s86, 0
      %p113 = por %p111, %p112
      %s114 = ssub.s32 %s80, %s87
      %p115 = scmp.eq.s32.totalorder %s114, 0
      %s117 = sadd.s32 %s116, 1
      %s118 = scalar_select %p115, %s116, %s117
      %p121 = pneg %p115
      %p122 = scmp.eq.s32.totalorder %s80, 3
      %p123 = por %p121, %p122
      %p124 = scmp.ne.s32.totalorder %s116, %s119
      %p125 = scmp.eq.s32.totalorder %s80, 0
      %p126 = por %p124, %p125
      %p127 = scmp.ne.s32.totalorder %s116, %s119
      %p128 = scmp.eq.s32.totalorder %s85, 3
      %p129 = por %p127, %p128
      %p130 = scmp.ne.s32.totalorder %s119, %s120
      %p131 = scmp.eq.s32.totalorder %s85, 0
      %p132 = por %p130, %p131
      %p133 = scmp.ne.s32.totalorder %s119, %s120
      %p134 = scmp.eq.s32.totalorder %s86, 3
      %p135 = por %p133, %p134
      %p137 = scmp.ne.s32.totalorder %s120, %s136
      %p138 = scmp.eq.s32.totalorder %s86, 0
      %p139 = por %p137, %p138
      %s140 = ssub.s32 %s80, %s87
      %p141 = scmp.eq.s32.totalorder %s140, 0
      %s143 = sadd.s32 %s142, 1
      %s144 = scalar_select %p141, %s142, %s143
      %p147 = pneg %p141
      %p148 = scmp.eq.s32.totalorder %s80, 3
      %p149 = por %p147, %p148
      %p150 = scmp.ne.s32.totalorder %s142, %s145
      %p151 = scmp.eq.s32.totalorder %s80, 0
      %p152 = por %p150, %p151
      %p153 = scmp.ne.s32.totalorder %s142, %s145
      %p154 = scmp.eq.s32.totalorder %s85, 3
      %p155 = por %p153, %p154
      %p156 = scmp.ne.s32.totalorder %s145, %s146
      %p157 = scmp.eq.s32.totalorder %s85, 0
      %p158 = por %p156, %p157
      %p159 = scmp.ne.s32.totalorder %s145, %s146
      %p160 = scmp.eq.s32.totalorder %s86, 3
      %p161 = por %p159, %p160
      %p163 = scmp.ne.s32.totalorder %s146, %s162
      %p164 = scmp.eq.s32.totalorder %s86, 0
      %p165 = por %p163, %p164
      %s167 = sadd.s32 %s166, 1
      %p170 = scmp.eq.s32.totalorder %s80, 3
      %p171 = scmp.ne.s32.totalorder %s166, %s168
      %p172 = scmp.eq.s32.totalorder %s80, 0
      %p173 = por %p171, %p172
      %p174 = scmp.ne.s32.totalorder %s166, %s168
      %p175 = scmp.eq.s32.totalorder %s85, 3
      %p176 = por %p174, %p175
      %p177 = scmp.ne.s32.totalorder %s168, %s169
      %p178 = scmp.eq.s32.totalorder %s85, 0
      %p179 = por %p177, %p178
      %p180 = scmp.ne.s32.totalorder %s168, %s169
      %p181 = scmp.eq.s32.totalorder %s86, 3
      %p182 = por %p180, %p181
      %p184 = scmp.ne.s32.totalorder %s169, %s183
      %p185 = scmp.eq.s32.totalorder %s86, 0
      %p186 = por %p184, %p185
      %s188 = sadd.s32 %s187, 1
      %p191 = scmp.eq.s32.totalorder %s80, 3
      %p192 = scmp.ne.s32.totalorder %s187, %s189
      %p193 = scmp.eq.s32.totalorder %s80, 0
      %p194 = por %p192, %p193
      %p195 = scmp.ne.s32.totalorder %s187, %s189
      %p196 = scmp.eq.s32.totalorder %s85, 3
      %p197 = por %p195, %p196
      %p198 = scmp.ne.s32.totalorder %s189, %s190
      %p199 = scmp.eq.s32.totalorder %s85, 0
      %p200 = por %p198, %p199
      %p201 = scmp.ne.s32.totalorder %s189, %s190
      %p202 = scmp.eq.s32.totalorder %s86, 3
      %p203 = por %p201, %p202
      %p205 = scmp.ne.s32.totalorder %s190, %s204
      %p206 = scmp.eq.s32.totalorder %s86, 0
      %p207 = por %p205, %p206
      %s209 = sadd.s32 %s208, 1
      %p212 = scmp.eq.s32.totalorder %s80, 3
      %p213 = scmp.ne.s32.totalorder %s208, %s210
      %p214 = scmp.eq.s32.totalorder %s80, 0
      %p215 = por %p213, %p214
      %p216 = scmp.ne.s32.totalorder %s208, %s210
      %p217 = scmp.eq.s32.totalorder %s85, 3
      %p218 = por %p216, %p217
      %p219 = scmp.ne.s32.totalorder %s210, %s211
      %p220 = scmp.eq.s32.totalorder %s85, 0
      %p221 = por %p219, %p220
      %p222 = scmp.ne.s32.totalorder %s210, %s211
      %p223 = scmp.eq.s32.totalorder %s86, 3
      %p224 = por %p222, %p223
      %p226 = scmp.ne.s32.totalorder %s211, %s225
      %p227 = scmp.eq.s32.totalorder %s86, 0
      %p228 = por %p226, %p227
      %s230 = sadd.s32 %s229, 1
      %p233 = scmp.eq.s32.totalorder %s80, 3
      %p234 = scmp.ne.s32.totalorder %s229, %s231
      %p235 = scmp.eq.s32.totalorder %s80, 0
      %p236 = por %p234, %p235
      %p237 = scmp.ne.s32.totalorder %s229, %s231
      %p238 = scmp.eq.s32.totalorder %s85, 3
      %p239 = por %p237, %p238
      %p240 = scmp.ne.s32.totalorder %s231, %s232
      %p241 = scmp.eq.s32.totalorder %s85, 0
      %p242 = por %p240, %p241
      %p243 = scmp.ne.s32.totalorder %s231, %s232
      %p244 = scmp.eq.s32.totalorder %s86, 3
      %p245 = por %p243, %p244
      %p247 = scmp.ne.s32.totalorder %s232, %s246
      %p248 = scmp.eq.s32.totalorder %s86, 0
      %p249 = por %p247, %p248
      %s251 = sadd.s32 %s250, 1
      %p254 = scmp.eq.s32.totalorder %s80, 3
      %p255 = scmp.ne.s32.totalorder %s250, %s252
      %p256 = scmp.eq.s32.totalorder %s80, 0
      %p257 = por %p255, %p256
      %p258 = scmp.ne.s32.totalorder %s250, %s252
      %p259 = scmp.eq.s32.totalorder %s85, 3
      %p260 = por %p258, %p259
      %p261 = scmp.ne.s32.totalorder %s252, %s253
      %p262 = scmp.eq.s32.totalorder %s85, 0
      %p263 = por %p261, %p262
      %p264 = scmp.ne.s32.totalorder %s252, %s253
      %p265 = scmp.eq.s32.totalorder %s86, 3
      %p266 = por %p264, %p265
      %p268 = scmp.ne.s32.totalorder %s253, %s267
      %p269 = scmp.eq.s32.totalorder %s86, 0
      %p270 = por %p268, %p269
      %s272 = sadd.s32 %s271, 1
      %p275 = scmp.eq.s32.totalorder %s80, 3
      %p276 = scmp.ne.s32.totalorder %s271, %s273
      %p277 = scmp.eq.s32.totalorder %s80, 0
      %p278 = por %p276, %p277
      %p279 = scmp.ne.s32.totalorder %s271, %s273
      %p280 = scmp.eq.s32.totalorder %s85, 3
      %p281 = por %p279, %p280
      %p282 = scmp.ne.s32.totalorder %s273, %s274
      %p283 = scmp.eq.s32.totalorder %s85, 0
      %p284 = por %p282, %p283
      %p285 = scmp.ne.s32.totalorder %s273, %s274
      %p286 = scmp.eq.s32.totalorder %s86, 3
      %p287 = por %p285, %p286
      %p289 = scmp.ne.s32.totalorder %s274, %s288
      %p290 = scmp.eq.s32.totalorder %s86, 0
      %p291 = por %p289, %p290
      %s293 = sadd.s32 %s292, 1
      %p296 = scmp.eq.s32.totalorder %s80, 3
      %p297 = scmp.ne.s32.totalorder %s292, %s294
      %p298 = scmp.eq.s32.totalorder %s80, 0
      %p299 = por %p297, %p298
      %p300 = scmp.ne.s32.totalorder %s292, %s294
      %p301 = scmp.eq.s32.totalorder %s85, 3
      %p302 = por %p300, %p301
      %p303 = scmp.ne.s32.totalorder %s294, %s295
      %p304 = scmp.eq.s32.totalorder %s85, 0
      %p305 = por %p303, %p304
      %p306 = scmp.ne.s32.totalorder %s294, %s295
      %p307 = scmp.eq.s32.totalorder %s86, 3
      %p308 = por %p306, %p307
      %p310 = scmp.ne.s32.totalorder %s295, %s309
      %p311 = scmp.eq.s32.totalorder %s86, 0
      %p312 = por %p310, %p311
      %s314 = sadd.s32 %s313, 1
      %p317 = scmp.eq.s32.totalorder %s80, 3
      %p318 = scmp.ne.s32.totalorder %s313, %s315
      %p319 = scmp.eq.s32.totalorder %s80, 0
      %p320 = por %p318, %p319
      %p321 = scmp.ne.s32.totalorder %s313, %s315
      %p322 = scmp.eq.s32.totalorder %s85, 3
      %p323 = por %p321, %p322
      %p324 = scmp.ne.s32.totalorder %s315, %s316
      %p325 = scmp.eq.s32.totalorder %s85, 0
      %p326 = por %p324, %p325
      %p327 = scmp.ne.s32.totalorder %s315, %s316
      %p328 = scmp.eq.s32.totalorder %s86, 3
      %p329 = por %p327, %p328
      %p331 = scmp.ne.s32.totalorder %s316, %s330
      %p332 = scmp.eq.s32.totalorder %s86, 0
      %p333 = por %p331, %p332
      %s335 = sadd.s32 %s334, 1
      %p338 = scmp.eq.s32.totalorder %s80, 3
      %p339 = scmp.ne.s32.totalorder %s334, %s336
      %p340 = scmp.eq.s32.totalorder %s80, 0
      %p341 = por %p339, %p340
      %p342 = scmp.ne.s32.totalorder %s334, %s336
      %p343 = scmp.eq.s32.totalorder %s85, 3
      %p344 = por %p342, %p343
      %p345 = scmp.ne.s32.totalorder %s336, %s337
      %p346 = scmp.eq.s32.totalorder %s85, 0
      %p347 = por %p345, %p346
      %p348 = scmp.ne.s32.totalorder %s336, %s337
      %p349 = scmp.eq.s32.totalorder %s86, 3
      %p350 = por %p348, %p349
      %p352 = scmp.ne.s32.totalorder %s337, %s351
      %p353 = scmp.eq.s32.totalorder %s86, 0
      %p354 = por %p352, %p353
      %s356 = sadd.s32 %s355, 1
      %p359 = scmp.eq.s32.totalorder %s80, 3
      %p360 = scmp.ne.s32.totalorder %s355, %s357
      %p361 = scmp.eq.s32.totalorder %s80, 0
      %p362 = por %p360, %p361
      %p363 = scmp.ne.s32.totalorder %s355, %s357
      %p364 = scmp.eq.s32.totalorder %s85, 3
      %p365 = por %p363, %p364
      %p366 = scmp.ne.s32.totalorder %s357, %s358
      %p367 = scmp.eq.s32.totalorder %s85, 0
      %p368 = por %p366, %p367
      %p369 = scmp.ne.s32.totalorder %s357, %s358
      %p370 = scmp.eq.s32.totalorder %s86, 3
      %p371 = por %p369, %p370
      %p373 = scmp.ne.s32.totalorder %s358, %s372
      %p374 = scmp.eq.s32.totalorder %s86, 0
      %p375 = por %p373, %p374
      %s377 = sadd.s32 %s376, 1
      %p380 = scmp.eq.s32.totalorder %s80, 3
      %p381 = scmp.ne.s32.totalorder %s376, %s378
      %p382 = scmp.eq.s32.totalorder %s80, 0
      %p383 = por %p381, %p382
      %p384 = scmp.ne.s32.totalorder %s376, %s378
      %p385 = scmp.eq.s32.totalorder %s85, 3
      %p386 = por %p384, %p385
      %p387 = scmp.ne.s32.totalorder %s378, %s379
      %p388 = scmp.eq.s32.totalorder %s85, 0
      %p389 = por %p387, %p388
      %p390 = scmp.ne.s32.totalorder %s378, %s379
      %p391 = scmp.eq.s32.totalorder %s86, 3
      %p392 = por %p390, %p391
      %p394 = scmp.ne.s32.totalorder %s379, %s393
      %p395 = scmp.eq.s32.totalorder %s86, 0
      %p396 = por %p394, %p395
      %s398 = sadd.s32 %s397, 1
      %p401 = scmp.eq.s32.totalorder %s80, 3
      %p402 = scmp.ne.s32.totalorder %s397, %s399
      %p403 = scmp.eq.s32.totalorder %s80, 0
      %p404 = por %p402, %p403
      %p405 = scmp.ne.s32.totalorder %s397, %s399
      %p406 = scmp.eq.s32.totalorder %s85, 3
      %p407 = por %p405, %p406
      %p408 = scmp.ne.s32.totalorder %s399, %s400
      %p409 = scmp.eq.s32.totalorder %s85, 0
      %p410 = por %p408, %p409
      %p411 = scmp.ne.s32.totalorder %s399, %s400
      %p412 = scmp.eq.s32.totalorder %s86, 3
      %p413 = por %p411, %p412
      %p415 = scmp.ne.s32.totalorder %s400, %s414
      %p416 = scmp.eq.s32.totalorder %s86, 0
      %p417 = por %p415, %p416
      %s419 = sadd.s32 %s418, 1
      %p422 = scmp.eq.s32.totalorder %s80, 3
      %p423 = scmp.ne.s32.totalorder %s418, %s420
      %p424 = scmp.eq.s32.totalorder %s80, 0
      %p425 = por %p423, %p424
      %p426 = scmp.ne.s32.totalorder %s418, %s420
      %p427 = scmp.eq.s32.totalorder %s85, 3
      %p428 = por %p426, %p427
      %p429 = scmp.ne.s32.totalorder %s420, %s421
      %p430 = scmp.eq.s32.totalorder %s85, 0
      %p431 = por %p429, %p430
      %p432 = scmp.ne.s32.totalorder %s420, %s421
      %p433 = scmp.eq.s32.totalorder %s86, 3
      %p434 = por %p432, %p433
      %p436 = scmp.ne.s32.totalorder %s421, %s435
      %p437 = scmp.eq.s32.totalorder %s86, 0
      %p438 = por %p436, %p437
      %s440 = sadd.s32 %s439, 1
      %p443 = scmp.eq.s32.totalorder %s80, 3
      %p444 = scmp.ne.s32.totalorder %s439, %s441
      %p445 = scmp.eq.s32.totalorder %s80, 0
      %p446 = por %p444, %p445
      %p447 = scmp.ne.s32.totalorder %s439, %s441
      %p448 = scmp.eq.s32.totalorder %s85, 3
      %p449 = por %p447, %p448
      %p450 = scmp.ne.s32.totalorder %s441, %s442
      %p451 = scmp.eq.s32.totalorder %s85, 0
      %p452 = por %p450, %p451
      %p453 = scmp.ne.s32.totalorder %s441, %s442
      %p454 = scmp.eq.s32.totalorder %s86, 3
      %p455 = por %p453, %p454
      %p457 = scmp.ne.s32.totalorder %s442, %s456
      %p458 = scmp.eq.s32.totalorder %s86, 0
      %p459 = por %p457, %p458
      %s461 = sadd.s32 %s460, 1
      %p464 = scmp.eq.s32.totalorder %s80, 3
      %p465 = scmp.ne.s32.totalorder %s460, %s462
      %p466 = scmp.eq.s32.totalorder %s80, 0
      %p467 = por %p465, %p466
      %p468 = scmp.ne.s32.totalorder %s460, %s462
      %p469 = scmp.eq.s32.totalorder %s85, 3
      %p470 = por %p468, %p469
      %p471 = scmp.ne.s32.totalorder %s462, %s463
      %p472 = scmp.eq.s32.totalorder %s85, 0
      %p473 = por %p471, %p472
      %p474 = scmp.ne.s32.totalorder %s462, %s463
      %p475 = scmp.eq.s32.totalorder %s86, 3
      %p476 = por %p474, %p475
      %p478 = scmp.ne.s32.totalorder %s463, %s477
      %p479 = scmp.eq.s32.totalorder %s86, 0
      %p480 = por %p478, %p479
      %s482 = sadd.s32 %s481, 1
      %p485 = scmp.eq.s32.totalorder %s80, 3
      %p486 = scmp.ne.s32.totalorder %s481, %s483
      %p487 = scmp.eq.s32.totalorder %s80, 0
      %p488 = por %p486, %p487
      %p489 = scmp.ne.s32.totalorder %s481, %s483
      %p490 = scmp.eq.s32.totalorder %s85, 3
      %p491 = por %p489, %p490
      %p492 = scmp.ne.s32.totalorder %s483, %s484
      %p493 = scmp.eq.s32.totalorder %s85, 0
      %p494 = por %p492, %p493
      %p495 = scmp.ne.s32.totalorder %s483, %s484
      %p496 = scmp.eq.s32.totalorder %s86, 3
      %p497 = por %p495, %p496
      %p499 = scmp.ne.s32.totalorder %s484, %s498
      %p500 = scmp.eq.s32.totalorder %s86, 0
      %p501 = por %p499, %p500
      %s503 = sadd.s32 %s502, 1
      %p506 = scmp.eq.s32.totalorder %s80, 3
      %p507 = scmp.ne.s32.totalorder %s502, %s504
      %p508 = scmp.eq.s32.totalorder %s80, 0
      %p509 = por %p507, %p508
      %p510 = scmp.ne.s32.totalorder %s502, %s504
      %p511 = scmp.eq.s32.totalorder %s85, 3
      %p512 = por %p510, %p511
      %p513 = scmp.ne.s32.totalorder %s504, %s505
      %p514 = scmp.eq.s32.totalorder %s85, 0
      %p515 = por %p513, %p514
      %p516 = scmp.ne.s32.totalorder %s504, %s505
      %p517 = scmp.eq.s32.totalorder %s86, 3
      %p518 = por %p516, %p517
      %p520 = scmp.ne.s32.totalorder %s505, %s519
      %p521 = scmp.eq.s32.totalorder %s86, 0
      %p522 = por %p520, %p521
      %s524 = sadd.s32 %s523, 1
      %p527 = scmp.eq.s32.totalorder %s80, 3
      %p528 = scmp.ne.s32.totalorder %s523, %s525
      %p529 = scmp.eq.s32.totalorder %s80, 0
      %p530 = por %p528, %p529
      %p531 = scmp.ne.s32.totalorder %s523, %s525
      %p532 = scmp.eq.s32.totalorder %s85, 3
      %p533 = por %p531, %p532
      %p534 = scmp.ne.s32.totalorder %s525, %s526
      %p535 = scmp.eq.s32.totalorder %s85, 0
      %p536 = por %p534, %p535
      %p537 = scmp.ne.s32.totalorder %s525, %s526
      %p538 = scmp.eq.s32.totalorder %s86, 3
      %p539 = por %p537, %p538
      %p541 = scmp.ne.s32.totalorder %s526, %s540
      %p542 = scmp.eq.s32.totalorder %s86, 0
      %p543 = por %p541, %p542
      %s545 = sadd.s32 %s544, 1
      %p548 = scmp.eq.s32.totalorder %s80, 3
      %p549 = scmp.ne.s32.totalorder %s544, %s546
      %p550 = scmp.eq.s32.totalorder %s80, 0
      %p551 = por %p549, %p550
      %p552 = scmp.ne.s32.totalorder %s544, %s546
      %p553 = scmp.eq.s32.totalorder %s85, 3
      %p554 = por %p552, %p553
      %p555 = scmp.ne.s32.totalorder %s546, %s547
      %p556 = scmp.eq.s32.totalorder %s85, 0
      %p557 = por %p555, %p556
      %p558 = scmp.ne.s32.totalorder %s546, %s547
      %p559 = scmp.eq.s32.totalorder %s86, 3
      %p560 = por %p558, %p559
      %p562 = scmp.ne.s32.totalorder %s547, %s561
      %p563 = scmp.eq.s32.totalorder %s86, 0
      %p564 = por %p562, %p563
      %s566 = sadd.s32 %s565, 1
      %p569 = scmp.eq.s32.totalorder %s80, 3
      %p570 = scmp.ne.s32.totalorder %s565, %s567
      %p571 = scmp.eq.s32.totalorder %s80, 0
      %p572 = por %p570, %p571
      %p573 = scmp.ne.s32.totalorder %s565, %s567
      %p574 = scmp.eq.s32.totalorder %s85, 3
      %p575 = por %p573, %p574
      %p576 = scmp.ne.s32.totalorder %s567, %s568
      %p577 = scmp.eq.s32.totalorder %s85, 0
      %p578 = por %p576, %p577
      %p579 = scmp.ne.s32.totalorder %s567, %s568
      %p580 = scmp.eq.s32.totalorder %s86, 3
      %p581 = por %p579, %p580
      %p583 = scmp.ne.s32.totalorder %s568, %s582
      %p584 = scmp.eq.s32.totalorder %s86, 0
      %p585 = por %p583, %p584
      %s587 = sadd.s32 %s586, 1
      %p590 = scmp.eq.s32.totalorder %s80, 3
      %p591 = scmp.ne.s32.totalorder %s586, %s588
      %p592 = scmp.eq.s32.totalorder %s80, 0
      %p593 = por %p591, %p592
      %p594 = scmp.ne.s32.totalorder %s586, %s588
      %p595 = scmp.eq.s32.totalorder %s85, 3
      %p596 = por %p594, %p595
      %p597 = scmp.ne.s32.totalorder %s588, %s589
      %p598 = scmp.eq.s32.totalorder %s85, 0
      %p599 = por %p597, %p598
      %p600 = scmp.ne.s32.totalorder %s588, %s589
      %p601 = scmp.eq.s32.totalorder %s86, 3
      %p602 = por %p600, %p601
      %p604 = scmp.ne.s32.totalorder %s589, %s603
      %p605 = scmp.eq.s32.totalorder %s86, 0
      %p606 = por %p604, %p605
      %s608 = sadd.s32 %s607, 1
      %p611 = scmp.eq.s32.totalorder %s80, 3
      %p612 = scmp.ne.s32.totalorder %s607, %s609
      %p613 = scmp.eq.s32.totalorder %s80, 0
      %p614 = por %p612, %p613
      %p615 = scmp.ne.s32.totalorder %s607, %s609
      %p616 = scmp.eq.s32.totalorder %s85, 3
      %p617 = por %p615, %p616
      %p618 = scmp.ne.s32.totalorder %s609, %s610
      %p619 = scmp.eq.s32.totalorder %s85, 0
      %p620 = por %p618, %p619
      %p621 = scmp.ne.s32.totalorder %s609, %s610
      %p622 = scmp.eq.s32.totalorder %s86, 3
      %p623 = por %p621, %p622
      %p625 = scmp.ne.s32.totalorder %s610, %s624
      %p626 = scmp.eq.s32.totalorder %s86, 0
      %p627 = por %p625, %p626
      %s629 = sadd.s32 %s628, 1
      %p632 = scmp.eq.s32.totalorder %s80, 3
      %p633 = scmp.ne.s32.totalorder %s628, %s630
      %p634 = scmp.eq.s32.totalorder %s80, 0
      %p635 = por %p633, %p634
      %p636 = scmp.ne.s32.totalorder %s628, %s630
      %p637 = scmp.eq.s32.totalorder %s85, 3
      %p638 = por %p636, %p637
      %p639 = scmp.ne.s32.totalorder %s630, %s631
      %p640 = scmp.eq.s32.totalorder %s85, 0
      %p641 = por %p639, %p640
      %p642 = scmp.ne.s32.totalorder %s630, %s631
      %p643 = scmp.eq.s32.totalorder %s86, 3
      %p644 = por %p642, %p643
      %p646 = scmp.ne.s32.totalorder %s631, %s645
      %p647 = scmp.eq.s32.totalorder %s86, 0
      %p648 = por %p646, %p647
      %s650 = sadd.s32 %s649, 1
      %p653 = scmp.eq.s32.totalorder %s80, 3
      %p654 = scmp.ne.s32.totalorder %s649, %s651
      %p655 = scmp.eq.s32.totalorder %s80, 0
      %p656 = por %p654, %p655
      %p657 = scmp.ne.s32.totalorder %s649, %s651
      %p658 = scmp.eq.s32.totalorder %s85, 3
      %p659 = por %p657, %p658
      %p660 = scmp.ne.s32.totalorder %s651, %s652
      %p661 = scmp.eq.s32.totalorder %s85, 0
      %p662 = por %p660, %p661
      %p663 = scmp.ne.s32.totalorder %s651, %s652
      %p664 = scmp.eq.s32.totalorder %s86, 3
      %p665 = por %p663, %p664
      %p667 = scmp.ne.s32.totalorder %s652, %s666
      %p668 = scmp.eq.s32.totalorder %s86, 0
      %p669 = por %p667, %p668
      %s671 = sadd.s32 %s670, 1
      %p674 = scmp.eq.s32.totalorder %s80, 3
      %p675 = scmp.ne.s32.totalorder %s670, %s672
      %p676 = scmp.eq.s32.totalorder %s80, 0
      %p677 = por %p675, %p676
      %p678 = scmp.ne.s32.totalorder %s670, %s672
      %p679 = scmp.eq.s32.totalorder %s85, 3
      %p680 = por %p678, %p679
      %p681 = scmp.ne.s32.totalorder %s672, %s673
      %p682 = scmp.eq.s32.totalorder %s85, 0
      %p683 = por %p681, %p682
      %p684 = scmp.ne.s32.totalorder %s672, %s673
      %p685 = scmp.eq.s32.totalorder %s86, 3
      %p686 = por %p684, %p685
      %p688 = scmp.ne.s32.totalorder %s673, %s687
      %p689 = scmp.eq.s32.totalorder %s86, 0
      %p690 = por %p688, %p689
      %s692 = sadd.s32 %s691, 1
      %p695 = scmp.eq.s32.totalorder %s80, 3
      %p696 = scmp.ne.s32.totalorder %s691, %s693
      %p697 = scmp.eq.s32.totalorder %s80, 0
      %p698 = por %p696, %p697
      %p699 = scmp.ne.s32.totalorder %s691, %s693
      %p700 = scmp.eq.s32.totalorder %s85, 3
      %p701 = por %p699, %p700
      %p702 = scmp.ne.s32.totalorder %s693, %s694
      %p703 = scmp.eq.s32.totalorder %s85, 0
      %p704 = por %p702, %p703
      %p705 = scmp.ne.s32.totalorder %s693, %s694
      %p706 = scmp.eq.s32.totalorder %s86, 3
      %p707 = por %p705, %p706
      %p709 = scmp.ne.s32.totalorder %s694, %s708
      %p710 = scmp.eq.s32.totalorder %s86, 0
      %p711 = por %p709, %p710
      %s713 = sadd.s32 %s712, 1
      %p716 = scmp.eq.s32.totalorder %s80, 3
      %p717 = scmp.ne.s32.totalorder %s712, %s714
      %p718 = scmp.eq.s32.totalorder %s80, 0
      %p719 = por %p717, %p718
      %p720 = scmp.ne.s32.totalorder %s712, %s714
      %p721 = scmp.eq.s32.totalorder %s85, 3
      %p722 = por %p720, %p721
      %p723 = scmp.ne.s32.totalorder %s714, %s715
      %p724 = scmp.eq.s32.totalorder %s85, 0
      %p725 = por %p723, %p724
      %p726 = scmp.ne.s32.totalorder %s714, %s715
      %p727 = scmp.eq.s32.totalorder %s86, 3
      %p728 = por %p726, %p727
      %p730 = scmp.ne.s32.totalorder %s715, %s729
      %p731 = scmp.eq.s32.totalorder %s86, 0
      %p732 = por %p730, %p731
      %s734 = sadd.s32 %s733, 1
      %p737 = scmp.eq.s32.totalorder %s80, 3
      %p738 = scmp.ne.s32.totalorder %s733, %s735
      %p739 = scmp.eq.s32.totalorder %s80, 0
      %p740 = por %p738, %p739
      %p741 = scmp.ne.s32.totalorder %s733, %s735
      %p742 = scmp.eq.s32.totalorder %s85, 3
      %p743 = por %p741, %p742
      %p744 = scmp.ne.s32.totalorder %s735, %s736
      %p745 = scmp.eq.s32.totalorder %s85, 0
      %p746 = por %p744, %p745
      %p747 = scmp.ne.s32.totalorder %s735, %s736
      %p748 = scmp.eq.s32.totalorder %s86, 3
      %p749 = por %p747, %p748
      %p751 = scmp.ne.s32.totalorder %s736, %s750
      %p752 = scmp.eq.s32.totalorder %s86, 0
      %p753 = por %p751, %p752
      %s755 = sadd.s32 %s754, 1
      %p758 = scmp.eq.s32.totalorder %s80, 3
      %p759 = scmp.ne.s32.totalorder %s754, %s756
      %p760 = scmp.eq.s32.totalorder %s80, 0
      %p761 = por %p759, %p760
      %p762 = scmp.ne.s32.totalorder %s754, %s756
      %p763 = scmp.eq.s32.totalorder %s85, 3
      %p764 = por %p762, %p763
      %p765 = scmp.ne.s32.totalorder %s756, %s757
      %p766 = scmp.eq.s32.totalorder %s85, 0
      %p767 = por %p765, %p766
      %p768 = scmp.ne.s32.totalorder %s756, %s757
      %p769 = scmp.eq.s32.totalorder %s86, 3
      %p770 = por %p768, %p769
      %p772 = scmp.ne.s32.totalorder %s757, %s771
      %p773 = scmp.eq.s32.totalorder %s86, 0
      %p774 = por %p772, %p773
      %s776 = sadd.s32 %s775, 1
      %p779 = scmp.eq.s32.totalorder %s80, 3
      %p780 = scmp.ne.s32.totalorder %s775, %s777
      %p781 = scmp.eq.s32.totalorder %s80, 0
      %p782 = por %p780, %p781
      %p783 = scmp.ne.s32.totalorder %s775, %s777
      %p784 = scmp.eq.s32.totalorder %s85, 3
      %p785 = por %p783, %p784
      %p786 = scmp.ne.s32.totalorder %s777, %s778
      %p787 = scmp.eq.s32.totalorder %s85, 0
      %p788 = por %p786, %p787
      %p789 = scmp.ne.s32.totalorder %s777, %s778
      %p790 = scmp.eq.s32.totalorder %s86, 3
      %p791 = por %p789, %p790
      %p793 = scmp.ne.s32.totalorder %s778, %s792
      %p794 = scmp.eq.s32.totalorder %s86, 0
      %p795 = por %p793, %p794
      %s797 = sadd.s32 %s796, 1
      %p800 = scmp.eq.s32.totalorder %s80, 3
      %p801 = scmp.ne.s32.totalorder %s796, %s798
      %p802 = scmp.eq.s32.totalorder %s80, 0
      %p803 = por %p801, %p802
      %p804 = scmp.ne.s32.totalorder %s796, %s798
      %p805 = scmp.eq.s32.totalorder %s85, 3
      %p806 = por %p804, %p805
      %p807 = scmp.ne.s32.totalorder %s798, %s799
      %p808 = scmp.eq.s32.totalorder %s85, 0
      %p809 = por %p807, %p808
      %p810 = scmp.ne.s32.totalorder %s798, %s799
      %p811 = scmp.eq.s32.totalorder %s86, 3
      %p812 = por %p810, %p811
      %p814 = scmp.ne.s32.totalorder %s799, %s813
      %p815 = scmp.eq.s32.totalorder %s86, 0
      %p816 = por %p814, %p815
      %p817 = scmp.le.s32.totalorder 1, %s80
      %p818 = scmp.lt.s32.totalorder %s80, 5
      %p819 = pnand %p817, %p818
      %p820 = pneg %p819
      // Predicated region
      $region9: #{tpu_custom_call.1} parent=5 // pred_check
        _
      $region10: #{tpu_custom_call.1} parent=5 // pred_check_branch
        %822 = sbr.rel (%p819) target = $region12
      $region11: #{tpu_custom_call.1} parent=5 // pred_region
        %s823 = ssub.s32 %s80, 1
        // Predicated region
        $region13: #{tpu_custom_call.1} parent=11 // pred_check
          %p824 = pneg %p179
        $region14: #{tpu_custom_call.1} parent=11 // pred_check_branch
          %826 = sbr.rel (%p824) target = $region16
        $region15: #{tpu_custom_call.1} parent=11 // pred_region
          %s828 = ssub.s32 1024, 1024
          %829 = vsyncadd [#allocation9], %s828
          %s830 = sshll.u32 [#allocation8], 4
          %s831 = int_to_ptr.vmem [resolvable:$true] %s830
          %836 = dma.hbm_to_vmem [thread:$0]  %s7, 1024, %s831, [#allocation9], 128, 128, 8
        $region16: #{tpu_custom_call.1} parent=11 // pred_fallthru
          _
        // Predicated region
        $region17: #{tpu_custom_call.1} parent=11 // pred_check
          %p837 = pneg %p200
        $region18: #{tpu_custom_call.1} parent=11 // pred_check_branch
          %839 = sbr.rel (%p837) target = $region20
        $region19: #{tpu_custom_call.1} parent=11 // pred_region
          _
        $region20: #{tpu_custom_call.1} parent=11 // pred_fallthru
          _
        // Predicated region
        $region21: #{tpu_custom_call.1} parent=11 // pred_check
          %p840 = pneg %p221
        $region22: #{tpu_custom_call.1} parent=11 // pred_check_branch
          %842 = sbr.rel (%p840) target = $region24
        $region23: #{tpu_custom_call.1} parent=11 // pred_region
          _
        $region24: #{tpu_custom_call.1} parent=11 // pred_fallthru
          _
        // Predicated region
        $region25: #{tpu_custom_call.1} parent=11 // pred_check
          %p843 = pneg %p242
        $region26: #{tpu_custom_call.1} parent=11 // pred_check_branch
          %845 = sbr.rel (%p843) target = $region28
        $region27: #{tpu_custom_call.1} parent=11 // pred_region
          _
        $region28: #{tpu_custom_call.1} parent=11 // pred_fallthru
          _
        // Predicated region
        $region29: #{tpu_custom_call.1} parent=11 // pred_check
          %p846 = pneg %p263
        $region30: #{tpu_custom_call.1} parent=11 // pred_check_branch
          %848 = sbr.rel (%p846) target = $region32
        $region31: #{tpu_custom_call.1} parent=11 // pred_region
          _
        $region32: #{tpu_custom_call.1} parent=11 // pred_fallthru
          _
        // Predicated region
        $region33: #{tpu_custom_call.1} parent=11 // pred_check
          %p849 = pneg %p284
        $region34: #{tpu_custom_call.1} parent=11 // pred_check_branch
          %851 = sbr.rel (%p849) target = $region36
        $region35: #{tpu_custom_call.1} parent=11 // pred_region
          _
        $region36: #{tpu_custom_call.1} parent=11 // pred_fallthru
          _
        // Predicated region
        $region37: #{tpu_custom_call.1} parent=11 // pred_check
          %p852 = pneg %p305
        $region38: #{tpu_custom_call.1} parent=11 // pred_check_branch
          %854 = sbr.rel (%p852) target = $region40
        $region39: #{tpu_custom_call.1} parent=11 // pred_region
          _
        $region40: #{tpu_custom_call.1} parent=11 // pred_fallthru
          _
        // Predicated region
        $region41: #{tpu_custom_call.1} parent=11 // pred_check
          %p855 = pneg %p326
        $region42: #{tpu_custom_call.1} parent=11 // pred_check_branch
          %857 = sbr.rel (%p855) target = $region44
        $region43: #{tpu_custom_call.1} parent=11 // pred_region
          _
        $region44: #{tpu_custom_call.1} parent=11 // pred_fallthru
          _
        // Predicated region
        $region45: #{tpu_custom_call.1} parent=11 // pred_check
          %p858 = pneg %p347
        $region46: #{tpu_custom_call.1} parent=11 // pred_check_branch
          %860 = sbr.rel (%p858) target = $region48
        $region47: #{tpu_custom_call.1} parent=11 // pred_region
          _
        $region48: #{tpu_custom_call.1} parent=11 // pred_fallthru
          _
        // Predicated region
        $region49: #{tpu_custom_call.1} parent=11 // pred_check
          %p861 = pneg %p368
        $region50: #{tpu_custom_call.1} parent=11 // pred_check_branch
          %863 = sbr.rel (%p861) target = $region52
        $region51: #{tpu_custom_call.1} parent=11 // pred_region
          _
        $region52: #{tpu_custom_call.1} parent=11 // pred_fallthru
          _
        // Predicated region
        $region53: #{tpu_custom_call.1} parent=11 // pred_check
          %p864 = pneg %p389
        $region54: #{tpu_custom_call.1} parent=11 // pred_check_branch
          %866 = sbr.rel (%p864) target = $region56
        $region55: #{tpu_custom_call.1} parent=11 // pred_region
          _
        $region56: #{tpu_custom_call.1} parent=11 // pred_fallthru
          _
        // Predicated region
        $region57: #{tpu_custom_call.1} parent=11 // pred_check
          %p867 = pneg %p410
        $region58: #{tpu_custom_call.1} parent=11 // pred_check_branch
          %869 = sbr.rel (%p867) target = $region60
        $region59: #{tpu_custom_call.1} parent=11 // pred_region
          _
        $region60: #{tpu_custom_call.1} parent=11 // pred_fallthru
          _
        // Predicated region
        $region61: #{tpu_custom_call.1} parent=11 // pred_check
          %p870 = pneg %p431
        $region62: #{tpu_custom_call.1} parent=11 // pred_check_branch
          %872 = sbr.rel (%p870) target = $region64
        $region63: #{tpu_custom_call.1} parent=11 // pred_region
          _
        $region64: #{tpu_custom_call.1} parent=11 // pred_fallthru
          _
        // Predicated region
        $region65: #{tpu_custom_call.1} parent=11 // pred_check
          %p873 = pneg %p452
        $region66: #{tpu_custom_call.1} parent=11 // pred_check_branch
          %875 = sbr.rel (%p873) target = $region68
        $region67: #{tpu_custom_call.1} parent=11 // pred_region
          _
        $region68: #{tpu_custom_call.1} parent=11 // pred_fallthru
          _
        // Predicated region
        $region69: #{tpu_custom_call.1} parent=11 // pred_check
          %p876 = pneg %p473
        $region70: #{tpu_custom_call.1} parent=11 // pred_check_branch
          %878 = sbr.rel (%p876) target = $region72
        $region71: #{tpu_custom_call.1} parent=11 // pred_region
          _
        $region72: #{tpu_custom_call.1} parent=11 // pred_fallthru
          _
        // Predicated region
        $region73: #{tpu_custom_call.1} parent=11 // pred_check
          %p879 = pneg %p494
        $region74: #{tpu_custom_call.1} parent=11 // pred_check_branch
          %881 = sbr.rel (%p879) target = $region76
        $region75: #{tpu_custom_call.1} parent=11 // pred_region
          _
        $region76: #{tpu_custom_call.1} parent=11 // pred_fallthru
          _
        // Predicated region
        $region77: #{tpu_custom_call.1} parent=11 // pred_check
          %p882 = pneg %p515
        $region78: #{tpu_custom_call.1} parent=11 // pred_check_branch
          %884 = sbr.rel (%p882) target = $region80
        $region79: #{tpu_custom_call.1} parent=11 // pred_region
          _
        $region80: #{tpu_custom_call.1} parent=11 // pred_fallthru
          _
        // Predicated region
        $region81: #{tpu_custom_call.1} parent=11 // pred_check
          %p885 = pneg %p536
        $region82: #{tpu_custom_call.1} parent=11 // pred_check_branch
          %887 = sbr.rel (%p885) target = $region84
        $region83: #{tpu_custom_call.1} parent=11 // pred_region
          _
        $region84: #{tpu_custom_call.1} parent=11 // pred_fallthru
          _
        // Predicated region
        $region85: #{tpu_custom_call.1} parent=11 // pred_check
          %p888 = pneg %p557
        $region86: #{tpu_custom_call.1} parent=11 // pred_check_branch
          %890 = sbr.rel (%p888) target = $region88
        $region87: #{tpu_custom_call.1} parent=11 // pred_region
          _
        $region88: #{tpu_custom_call.1} parent=11 // pred_fallthru
          _
        // Predicated region
        $region89: #{tpu_custom_call.1} parent=11 // pred_check
          %p891 = pneg %p578
        $region90: #{tpu_custom_call.1} parent=11 // pred_check_branch
          %893 = sbr.rel (%p891) target = $region92
        $region91: #{tpu_custom_call.1} parent=11 // pred_region
          _
        $region92: #{tpu_custom_call.1} parent=11 // pred_fallthru
          _
        // Predicated region
        $region93: #{tpu_custom_call.1} parent=11 // pred_check
          %p894 = pneg %p599
        $region94: #{tpu_custom_call.1} parent=11 // pred_check_branch
          %896 = sbr.rel (%p894) target = $region96
        $region95: #{tpu_custom_call.1} parent=11 // pred_region
          _
        $region96: #{tpu_custom_call.1} parent=11 // pred_fallthru
          _
        // Predicated region
        $region97: #{tpu_custom_call.1} parent=11 // pred_check
          %p897 = pneg %p620
        $region98: #{tpu_custom_call.1} parent=11 // pred_check_branch
          %899 = sbr.rel (%p897) target = $region100
        $region99: #{tpu_custom_call.1} parent=11 // pred_region
          _
        $region100: #{tpu_custom_call.1} parent=11 // pred_fallthru
          _
        // Predicated region
        $region101: #{tpu_custom_call.1} parent=11 // pred_check
          %p900 = pneg %p641
        $region102: #{tpu_custom_call.1} parent=11 // pred_check_branch
          %902 = sbr.rel (%p900) target = $region104
        $region103: #{tpu_custom_call.1} parent=11 // pred_region
          _
        $region104: #{tpu_custom_call.1} parent=11 // pred_fallthru
          _
        // Predicated region
        $region105: #{tpu_custom_call.1} parent=11 // pred_check
          %p903 = pneg %p662
        $region106: #{tpu_custom_call.1} parent=11 // pred_check_branch
          %905 = sbr.rel (%p903) target = $region108
        $region107: #{tpu_custom_call.1} parent=11 // pred_region
          _
        $region108: #{tpu_custom_call.1} parent=11 // pred_fallthru
          _
        // Predicated region
        $region109: #{tpu_custom_call.1} parent=11 // pred_check
          %p906 = pneg %p683
        $region110: #{tpu_custom_call.1} parent=11 // pred_check_branch
          %908 = sbr.rel (%p906) target = $region112
        $region111: #{tpu_custom_call.1} parent=11 // pred_region
          _
        $region112: #{tpu_custom_call.1} parent=11 // pred_fallthru
          _
        // Predicated region
        $region113: #{tpu_custom_call.1} parent=11 // pred_check
          %p909 = pneg %p704
        $region114: #{tpu_custom_call.1} parent=11 // pred_check_branch
          %911 = sbr.rel (%p909) target = $region116
        $region115: #{tpu_custom_call.1} parent=11 // pred_region
          _
        $region116: #{tpu_custom_call.1} parent=11 // pred_fallthru
          _
        // Predicated region
        $region117: #{tpu_custom_call.1} parent=11 // pred_check
          %p912 = pneg %p725
        $region118: #{tpu_custom_call.1} parent=11 // pred_check_branch
          %914 = sbr.rel (%p912) target = $region120
        $region119: #{tpu_custom_call.1} parent=11 // pred_region
          _
        $region120: #{tpu_custom_call.1} parent=11 // pred_fallthru
          _
        // Predicated region
        $region121: #{tpu_custom_call.1} parent=11 // pred_check
          %p915 = pneg %p746
        $region122: #{tpu_custom_call.1} parent=11 // pred_check_branch
          %917 = sbr.rel (%p915) target = $region124
        $region123: #{tpu_custom_call.1} parent=11 // pred_region
          _
        $region124: #{tpu_custom_call.1} parent=11 // pred_fallthru
          _
        // Predicated region
        $region125: #{tpu_custom_call.1} parent=11 // pred_check
          %p918 = pneg %p767
        $region126: #{tpu_custom_call.1} parent=11 // pred_check_branch
          %920 = sbr.rel (%p918) target = $region128
        $region127: #{tpu_custom_call.1} parent=11 // pred_region
          _
        $region128: #{tpu_custom_call.1} parent=11 // pred_fallthru
          _
      $region12: #{tpu_custom_call.1} parent=5 // pred_fallthru
        _
      %p921 = scmp.lt.s32.totalorder %s80, 4
      // Predicated region
      $region129: #{tpu_custom_call.1} parent=5 // pred_check
        %p922 = pneg %p921
      $region130: #{tpu_custom_call.1} parent=5 // pred_check_branch
        %924 = sbr.rel (%p922) target = $region132
      $region131: #{tpu_custom_call.1} parent=5 // pred_region
        // Predicated region
        $region133: #{tpu_custom_call.1} parent=131 // pred_check
          %p925 = pneg %p100
        $region134: #{tpu_custom_call.1} parent=131 // pred_check_branch
          %927 = sbr.rel (%p925) target = $region136
        $region135: #{tpu_custom_call.1} parent=131 // pred_region
          %s928 = smul.u32 16, %s80
          %p929 = scmp.lt.s32.totalorder %s928, 63
          %s930 = scalar_select %p929, %s928, 63
          %s931 = smul.addr %s930, 4
          %s932 = scalar_lea.vmem %s1, %s931
          %s933 = smul.u32 16, %s80
        $region136: #{tpu_custom_call.1} parent=131 // pred_fallthru
          _
        // Predicated region
        $region137: #{tpu_custom_call.1} parent=131 // pred_check
          %p934 = pneg %p126
        $region138: #{tpu_custom_call.1} parent=131 // pred_check_branch
          %936 = sbr.rel (%p934) target = $region140
        $region139: #{tpu_custom_call.1} parent=131 // pred_region
          %s937 = smul.u32 16, %s80
          %p938 = scmp.lt.s32.totalorder %s937, 63
          %s939 = scalar_select %p938, %s937, 63
          %s940 = smul.addr %s939, 4
          %s941 = scalar_lea.vmem %s3, %s940
          %s942 = smul.u32 16, %s80
        $region140: #{tpu_custom_call.1} parent=131 // pred_fallthru
          _
        // Predicated region
        $region141: #{tpu_custom_call.1} parent=131 // pred_check
          %p943 = pneg %p152
        $region142: #{tpu_custom_call.1} parent=131 // pred_check_branch
          %945 = sbr.rel (%p943) target = $region144
        $region143: #{tpu_custom_call.1} parent=131 // pred_region
          %s946 = sand.u32 %s142, 1
          %s947 = sand.u32 %s142, 1
          %s948 = smul.addr %s947, 32
          %s949 = scalar_lea.vmem [#allocation7], %s948
          %s950 = smul.addr %s80, 4
          %s951 = scalar_lea.vmem %s5, %s950
          // Predicated region
          $region145: #{tpu_custom_call.1} parent=143 // pred_check
            _
          $region146: #{tpu_custom_call.1} parent=143 // pred_check_branch
            %953 = sbr.rel (0) target = $region148
          $region147: #{tpu_custom_call.1} parent=143 // pred_region
            // Predicated region
            $region149: #{tpu_custom_call.1} parent=147 // pred_check
              _
            $region150: #{tpu_custom_call.1} parent=147 // pred_check_branch
              %955 = sbr.rel target = $region152
            $region151: #{tpu_custom_call.1} parent=147 // pred_region
              // Predicated region
              $region164: #{tpu_custom_call.1} parent=151 // pred_check
                _
              $region165: #{tpu_custom_call.1} parent=151 // pred_check_branch
                %985 = sbr.rel (0) target = $region167
              $region166: #{tpu_custom_call.1} parent=151 // pred_region
                loop: start=0, step=1, limit=1
                $region168: #{tpu_custom_call.1} parent=166 // loop_pre_header
                  _
                $region169: #{tpu_custom_call.1} parent=166 // loop_header
                  %s987 = sphi 0, %s991
                  %p988 = scmp.ge.s32.totalorder %s987, 1
                  %s992 = sphi %s951, %s951
                  %s993 = sphi %s949, %s949
                $region170: #{tpu_custom_call.1} parent=166 // loop_header_branch
                  %990 = sbr.rel (%p988) target = $region174
                $region171: #{tpu_custom_call.1} parent=166 // loop_body
                  _
                $region172: #{tpu_custom_call.1} parent=166 // loop_footer
                  %s991 = sadd.s32 1, %s987
                $region173: #{tpu_custom_call.1} parent=166 // loop_footer_branch
                  %986 = sbr.rel target = $region169
                $region174: #{tpu_custom_call.1} parent=166 // loop_exit
                  _
                %s995 = ssub.s32 16, 1
                loop: start=0, step=1, limit=1
                $region175: #{tpu_custom_call.1} parent=166 // loop_pre_header
                  _
                $region176: #{tpu_custom_call.1} parent=166 // loop_header
                  %s997 = sphi 0, %s1001
                  %p998 = scmp.ge.s32.totalorder %s997, 1
                  %s1002 = sphi %s951, %s951
                  %s1003 = sphi %s949, %s949
                $region177: #{tpu_custom_call.1} parent=166 // loop_header_branch
                  %1000 = sbr.rel (%p998) target = $region181
                $region178: #{tpu_custom_call.1} parent=166 // loop_body
                  %v1004 = vld [vmem:[%s1002] sm:%s995]
                  %1005 = vst [vmem:[%s1003] sm:%s995] %v1004
                  %v1006 = vld [vmem:[%s1002 + $0x10] sm:%s995]
                  %1007 = vst [vmem:[%s1003 + $0x4] sm:%s995] %v1006
                  %v1008 = vld [vmem:[%s1002 + $0x20] sm:%s995]
                  %1009 = vst [vmem:[%s1003 + $0x8] sm:%s995] %v1008
                  %v1010 = vld [vmem:[%s1002 + $0x30] sm:%s995]
                  %1011 = vst [vmem:[%s1003 + $0xc] sm:%s995] %v1010
                  %v1012 = vld [vmem:[%s1002 + $0x40] sm:%s995]
                  %1013 = vst [vmem:[%s1003 + $0x10] sm:%s995] %v1012
                  %v1014 = vld [vmem:[%s1002 + $0x50] sm:%s995]
                  %1015 = vst [vmem:[%s1003 + $0x14] sm:%s995] %v1014
                  %v1016 = vld [vmem:[%s1002 + $0x60] sm:%s995]
                  %1017 = vst [vmem:[%s1003 + $0x18] sm:%s995] %v1016
                  %v1018 = vld [vmem:[%s1002 + $0x70] sm:%s995]
                  %1019 = vst [vmem:[%s1003 + $0x1c] sm:%s995] %v1018
                $region179: #{tpu_custom_call.1} parent=166 // loop_footer
                  %s1001 = sadd.s32 1, %s997
                $region180: #{tpu_custom_call.1} parent=166 // loop_footer_branch
                  %996 = sbr.rel target = $region176
                $region181: #{tpu_custom_call.1} parent=166 // loop_exit
                  _
              $region167: #{tpu_custom_call.1} parent=151 // pred_fallthru
                _
            $region152: #{tpu_custom_call.1} parent=147 // pred_fallthru
              _
            // Predicated region
            $region153: #{tpu_custom_call.1} parent=147 // pred_check
              _
            $region154: #{tpu_custom_call.1} parent=147 // pred_check_branch
              %957 = sbr.rel (0) target = $region156
            $region155: #{tpu_custom_call.1} parent=147 // pred_region
              %s959 = ssub.s32 16, 1
              loop: start=0, step=1, limit=1
              $region157: #{tpu_custom_call.1} parent=155 // loop_pre_header
                _
              $region158: #{tpu_custom_call.1} parent=155 // loop_header
                %s961 = sphi 0, %s965
                %p962 = scmp.ge.s32.totalorder %s961, 1
                %s966 = sphi %s951, %s951
                %s967 = sphi %s949, %s949
              $region159: #{tpu_custom_call.1} parent=155 // loop_header_branch
                %964 = sbr.rel (%p962) target = $region163
              $region160: #{tpu_custom_call.1} parent=155 // loop_body
                %v968 = vld [vmem:[%s966] sm:%s959]
                %969 = vst [vmem:[%s967] sm:%s959] %v968
                %v970 = vld [vmem:[%s966 + $0x10] sm:%s959]
                %971 = vst [vmem:[%s967 + $0x4] sm:%s959] %v970
                %v972 = vld [vmem:[%s966 + $0x20] sm:%s959]
                %973 = vst [vmem:[%s967 + $0x8] sm:%s959] %v972
                %v974 = vld [vmem:[%s966 + $0x30] sm:%s959]
                %975 = vst [vmem:[%s967 + $0xc] sm:%s959] %v974
                %v976 = vld [vmem:[%s966 + $0x40] sm:%s959]
                %977 = vst [vmem:[%s967 + $0x10] sm:%s959] %v976
                %v978 = vld [vmem:[%s966 + $0x50] sm:%s959]
                %979 = vst [vmem:[%s967 + $0x14] sm:%s959] %v978
                %v980 = vld [vmem:[%s966 + $0x60] sm:%s959]
                %981 = vst [vmem:[%s967 + $0x18] sm:%s959] %v980
                %v982 = vld [vmem:[%s966 + $0x70] sm:%s959]
                %983 = vst [vmem:[%s967 + $0x1c] sm:%s959] %v982
              $region161: #{tpu_custom_call.1} parent=155 // loop_footer
                %s965 = sadd.s32 1, %s961
              $region162: #{tpu_custom_call.1} parent=155 // loop_footer_branch
                %960 = sbr.rel target = $region158
              $region163: #{tpu_custom_call.1} parent=155 // loop_exit
                _
            $region156: #{tpu_custom_call.1} parent=147 // pred_fallthru
              _
          $region148: #{tpu_custom_call.1} parent=143 // pred_fallthru
            _
          %1020 = vnop
        $region144: #{tpu_custom_call.1} parent=131 // pred_fallthru
          _
      $region132: #{tpu_custom_call.1} parent=5 // pred_fallthru
        _
      %p1021 = scmp.le.s32.totalorder 1, %s80
      %p1022 = scmp.lt.s32.totalorder %s80, 5
      %p1023 = pnand %p1021, %p1022
      %p1024 = pneg %p1023
      // Predicated region
      $region182: #{tpu_custom_call.1} parent=5 // pred_check
        _
      $region183: #{tpu_custom_call.1} parent=5 // pred_check_branch
        %1026 = sbr.rel (%p1023) target = $region185
      $region184: #{tpu_custom_call.1} parent=5 // pred_region
        %s1027 = ssub.s32 %s80, 1
        %s1028 = sand.u32 %s145, 1
        %s1029 = sand.u32 %s145, 1
        %s1030 = smul.addr %s1029, 32
        %s1031 = scalar_lea.vmem [#allocation7], %s1030
        // Predicated region
        $region186: #{tpu_custom_call.1} parent=184 // pred_check
          %p1032 = pneg %p158
        $region187: #{tpu_custom_call.1} parent=184 // pred_check_branch
          %1034 = sbr.rel (%p1032) target = $region189
        $region188: #{tpu_custom_call.1} parent=184 // pred_region
          _
        $region189: #{tpu_custom_call.1} parent=184 // pred_fallthru
          _
        // Predicated region
        $region190: #{tpu_custom_call.1} parent=184 // pred_check
          %p1035 = pneg %p179
        $region191: #{tpu_custom_call.1} parent=184 // pred_check_branch
          %1037 = sbr.rel (%p1035) target = $region193
        $region192: #{tpu_custom_call.1} parent=184 // pred_region
          %1038 = dma.done [#allocation9], 1024
        $region193: #{tpu_custom_call.1} parent=184 // pred_fallthru
          _
        %s1039 = smul.u32 16, %s85
        %p1040 = scmp.lt.s32.totalorder %s1039, 63
        %s1041 = scalar_select %p1040, %s1039, 63
        %s1042 = smul.addr %s1041, 4
        %s1043 = scalar_lea.vmem %s1, %s1042
        %p1044 = pneg %p106
        %p1045 = pneg %p103
        %s1046 = smul.u32 16, %s85
        %p1047 = scmp.lt.s32.totalorder %s1046, 63
        %s1048 = scalar_select %p1047, %s1046, 63
        %s1049 = smul.addr %s1048, 4
        %s1050 = scalar_lea.vmem %s3, %s1049
        %p1051 = pneg %p132
        %p1052 = pneg %p129
        %s1053 = sand.u32 %s145, 1
        %s1054 = sand.u32 %s145, 1
        %s1055 = smul.addr %s1054, 32
        %s1056 = scalar_lea.vmem [#allocation7], %s1055
        %p1057 = pneg %p158
        %p1058 = pneg %p155
        %p1059 = pneg %p179
        %p1060 = pneg %p176
        %p1061 = pneg %p200
        %p1062 = pneg %p197
        %p1063 = pneg %p221
        %p1064 = pneg %p218
        %p1065 = pneg %p242
        %p1066 = pneg %p239
        %p1067 = pneg %p263
        %p1068 = pneg %p260
        %p1069 = pneg %p284
        %p1070 = pneg %p281
        %p1071 = pneg %p305
        %p1072 = pneg %p302
        %p1073 = pneg %p326
        %p1074 = pneg %p323
        %p1075 = pneg %p347
        %p1076 = pneg %p344
        %p1077 = pneg %p368
        %p1078 = pneg %p365
        %p1079 = pneg %p389
        %p1080 = pneg %p386
        %p1081 = pneg %p410
        %p1082 = pneg %p407
        %p1083 = pneg %p431
        %p1084 = pneg %p428
        %p1085 = pneg %p452
        %p1086 = pneg %p449
        %p1087 = pneg %p473
        %p1088 = pneg %p470
        %p1089 = pneg %p494
        %p1090 = pneg %p491
        %p1091 = pneg %p515
        %p1092 = pneg %p512
        %p1093 = pneg %p536
        %p1094 = pneg %p533
        %p1095 = pneg %p557
        %p1096 = pneg %p554
        %p1097 = pneg %p578
        %p1098 = pneg %p575
        %p1099 = pneg %p599
        %p1100 = pneg %p596
        %p1101 = pneg %p620
        %p1102 = pneg %p617
        %p1103 = pneg %p641
        %p1104 = pneg %p638
        %p1105 = pneg %p662
        %p1106 = pneg %p659
        %p1107 = pneg %p683
        %p1108 = pneg %p680
        %p1109 = pneg %p704
        %p1110 = pneg %p701
        %p1111 = pneg %p725
        %p1112 = pneg %p722
        %p1113 = pneg %p746
        %p1114 = pneg %p743
        %p1115 = pneg %p767
        %p1116 = pneg %p764
        %p1117 = pneg %p788
        %p1118 = pneg %p785
        %p1119 = pneg %p809
        %p1120 = pneg %p806
        %s1121 = smul.u32 16, %s85
        %p1122 = scmp.lt.s32.totalorder %s1121, 63
        %s1123 = scalar_select %p1122, %s1121, 63
        %s1124 = smul.addr %s1123, 4
        %s1125 = scalar_lea.vmem %s1, %s1124
        %s1126 = smul.u32 16, %s85
        %s1127 = smul.u32 16, %s85
        %p1128 = scmp.lt.s32.totalorder %s1127, 63
        %s1129 = scalar_select %p1128, %s1127, 63
        %s1130 = smul.addr %s1129, 4
        %s1131 = scalar_lea.vmem %s3, %s1130
        %s1132 = smul.u32 16, %s85
        %p1133 = scmp.eq.s32.totalorder %s85, 0
        // Predicated region
        $region194: #{tpu_custom_call.1} parent=184 // pred_check
          %p1134 = pneg %p1133
        $region195: #{tpu_custom_call.1} parent=184 // pred_check_branch
          %1136 = sbr.rel (%p1134) target = $region197
        $region196: #{tpu_custom_call.1} parent=184 // pred_region
          %v1137 = vld [vmem:[#allocation8] sm:$0xff]
          %v1138 = vld [vmem:[#allocation8 + $0x8] sm:$0xff]
          %v1139 = vld [vmem:[#allocation8 + $0x10] sm:$0xff]
          %v1140 = vld [vmem:[#allocation8 + $0x18] sm:$0xff]
          %v1141 = vld [vmem:[#allocation8 + $0x20] sm:$0xff]
          %v1142 = vld [vmem:[#allocation8 + $0x28] sm:$0xff]
          %v1143 = vld [vmem:[#allocation8 + $0x30] sm:$0xff]
          %v1144 = vld [vmem:[#allocation8 + $0x38] sm:$0xff]
          %v1145 = vld [vmem:[%s9] sm:$0xff]
          %v1146 = vld [vmem:[%s9 + $0x8] sm:$0xff]
          %v1147 = vld [vmem:[%s9 + $0x10] sm:$0xff]
          %v1148 = vld [vmem:[%s9 + $0x18] sm:$0xff]
          %v1149 = vld [vmem:[%s9 + $0x20] sm:$0xff]
          %v1150 = vld [vmem:[%s9 + $0x28] sm:$0xff]
          %v1151 = vld [vmem:[%s9 + $0x30] sm:$0xff]
          %v1152 = vld [vmem:[%s9 + $0x38] sm:$0xff]
          %v1153 = vld [vmem:[%s25] sm:$0xff]
          %v1154 = vld [vmem:[%s25 + $0x8] sm:$0xff]
          %v1155 = vld [vmem:[%s25 + $0x10] sm:$0xff]
          %v1156 = vld [vmem:[%s25 + $0x18] sm:$0xff]
          %v1157 = vld [vmem:[%s25 + $0x20] sm:$0xff]
          %v1158 = vld [vmem:[%s25 + $0x28] sm:$0xff]
          %v1159 = vld [vmem:[%s25 + $0x30] sm:$0xff]
          %v1160 = vld [vmem:[%s25 + $0x38] sm:$0xff]
          %v1161 = vld [vmem:[%s25 + $0x40] sm:$0xff]
          %v1162 = vld [vmem:[%s25 + $0x48] sm:$0xff]
          %v1163 = vld [vmem:[%s25 + $0x50] sm:$0xff]
          %v1164 = vld [vmem:[%s25 + $0x58] sm:$0xff]
          %v1165 = vld [vmem:[%s25 + $0x60] sm:$0xff]
          %v1166 = vld [vmem:[%s25 + $0x68] sm:$0xff]
          %v1167 = vld [vmem:[%s25 + $0x70] sm:$0xff]
          %v1168 = vld [vmem:[%s25 + $0x78] sm:$0xff]
          %1169 = vmatprep.subr.mxu0 0.0
          %1170 = vmatpush1.msra.mxu0 %v1168
          %1171 = vmatprep.subr.mxu0 0.0
          %1172 = vmatpush1.msra.mxu0 %v1167
          %1173 = vmatprep.subr.mxu0 0.0
          %1174 = vmatpush1.msra.mxu0 %v1166
          %1175 = vmatprep.subr.mxu0 0.0
          %1176 = vmatpush1.msra.mxu0 %v1165
          %1177 = vmatprep.subr.mxu0 0.0
          %1178 = vmatpush1.msra.mxu0 %v1164
          %1179 = vmatprep.subr.mxu0 0.0
          %1180 = vmatpush1.msra.mxu0 %v1163
          %1181 = vmatprep.subr.mxu0 0.0
          %1182 = vmatpush1.msra.mxu0 %v1162
          %1183 = vmatprep.subr.mxu0 0.0
          %1184 = vmatpush1.msra.mxu0 %v1161
          %1185 = vmatprep.subr.mxu0 0.0
          %1186 = vmatpush1.msra.mxu0 %v1160
          %1187 = vmatprep.subr.mxu0 0.0
          %1188 = vmatpush1.msra.mxu0 %v1159
          %1189 = vmatprep.subr.mxu0 0.0
          %1190 = vmatpush1.msra.mxu0 %v1158
          %1191 = vmatprep.subr.mxu0 0.0
          %1192 = vmatpush1.msra.mxu0 %v1157
          %1193 = vmatprep.subr.mxu0 0.0
          %1194 = vmatpush1.msra.mxu0 %v1156
          %1195 = vmatprep.subr.mxu0 0.0
          %1196 = vmatpush1.msra.mxu0 %v1155
          %1197 = vmatprep.subr.mxu0 0.0
          %1198 = vmatpush1.msra.mxu0 %v1154
          %1199 = vmatprep.subr.mxu0 0.0
          %1200 = vmatpush1.msra.mxu0 %v1153
          %1201 = vmatprep.subr.mxu0 0.0
          %1202 = vmatpush2.msra.mxu0 0.0
          %1203 = vmatprep.subr.mxu0 0.0
          %1204 = vmatpush2.msra.mxu0 0.0
          %1205 = vmatprep.subr.mxu0 0.0
          %1206 = vmatpush2.msra.mxu0 0.0
          %1207 = vmatprep.subr.mxu0 0.0
          %1208 = vmatpush2.msra.mxu0 0.0
          %1209 = vmatprep.subr.mxu0 0.0
          %1210 = vmatpush2.msra.mxu0 0.0
          %1211 = vmatprep.subr.mxu0 0.0
          %1212 = vmatpush2.msra.mxu0 0.0
          %1213 = vmatprep.subr.mxu0 0.0
          %1214 = vmatpush2.msra.mxu0 0.0
          %1215 = vmatprep.subr.mxu0 0.0
          %1216 = vmatpush2.msra.mxu0 0.0
          %1217 = vmatprep.subr.mxu0 0.0
          %1218 = vmatpush2.msra.mxu0 0.0
          %1219 = vmatprep.subr.mxu0 0.0
          %1220 = vmatpush2.msra.mxu0 0.0
          %1221 = vmatprep.subr.mxu0 0.0
          %1222 = vmatpush2.msra.mxu0 0.0
          %1223 = vmatprep.subr.mxu0 0.0
          %1224 = vmatpush2.msra.mxu0 0.0
          %1225 = vmatprep.subr.mxu0 0.0
          %1226 = vmatpush2.msra.mxu0 0.0
          %1227 = vmatprep.subr.mxu0 0.0
          %1228 = vmatpush2.msra.mxu0 0.0
          %1229 = vmatprep.subr.mxu0 0.0
          %1230 = vmatpush2.msra.mxu0 0.0
          %1231 = vmatprep.subr.mxu0 0.0
          %1232 = vmatpush2.msra.mxu0 0.0
          %1233 = vmatprep.mubr.f32.mxu0 0.0
          %1234 = vmatmul.mubr.f32.gmra.mxu0 %v1137
          %v1235 = vpop.f32.mrf.mxu0
          %v1236 = vadd.f32 0.0, %v1235
          %v1237 = vpop.f32.mrf.mxu0
          %1238 = vmatprep.mubr.f32.mxu0 0.0
          %1239 = vmatmul.mubr.f32.gmra.mxu0 %v1138
          %v1240 = vpop.f32.mrf.mxu0
          %v1241 = vadd.f32 0.0, %v1240
          %v1242 = vpop.f32.mrf.mxu0
          %1243 = vmatprep.mubr.f32.mxu0 0.0
          %1244 = vmatmul.mubr.f32.gmra.mxu0 %v1139
          %v1245 = vpop.f32.mrf.mxu0
          %v1246 = vadd.f32 0.0, %v1245
          %v1247 = vpop.f32.mrf.mxu0
          %1248 = vmatprep.mubr.f32.mxu0 0.0
          %1249 = vmatmul.mubr.f32.gmra.mxu0 %v1140
          %v1250 = vpop.f32.mrf.mxu0
          %v1251 = vadd.f32 0.0, %v1250
          %v1252 = vpop.f32.mrf.mxu0
          %1253 = vmatprep.mubr.f32.mxu0 0.0
          %1254 = vmatmul.mubr.f32.gmra.mxu0 %v1141
          %v1255 = vpop.f32.mrf.mxu0
          %v1256 = vadd.f32 0.0, %v1255
          %v1257 = vpop.f32.mrf.mxu0
          %1258 = vmatprep.mubr.f32.mxu0 0.0
          %1259 = vmatmul.mubr.f32.gmra.mxu0 %v1142
          %v1260 = vpop.f32.mrf.mxu0
          %v1261 = vadd.f32 0.0, %v1260
          %v1262 = vpop.f32.mrf.mxu0
          %1263 = vmatprep.mubr.f32.mxu0 0.0
          %1264 = vmatmul.mubr.f32.gmra.mxu0 %v1143
          %v1265 = vpop.f32.mrf.mxu0
          %v1266 = vadd.f32 0.0, %v1265
          %v1267 = vpop.f32.mrf.mxu0
          %1268 = vmatprep.mubr.f32.mxu0 0.0
          %1269 = vmatmul.mubr.f32.gmra.mxu0 %v1144
          %v1270 = vpop.f32.mrf.mxu0
          %v1271 = vadd.f32 0.0, %v1270
          %v1272 = vpop.f32.mrf.mxu0
          %1273 = vdwg.mxu0
          %1274 = vst [vmem:[#allocation2] sm:$0xff] %v1236
          %vm1275 = vcmask 23552
          %1276 = vst.msk [vmem:[#allocation2 + $0x8] sm:$0xff] %vm1275, %v1145
          %1277 = vst [vmem:[#allocation2 + $0x10] sm:$0xff] %v1241
          %1278 = vst.msk [vmem:[#allocation2 + $0x18] sm:$0xff] %vm1275, %v1146
          %1279 = vst [vmem:[#allocation2 + $0x20] sm:$0xff] %v1246
          %1280 = vst.msk [vmem:[#allocation2 + $0x28] sm:$0xff] %vm1275, %v1147
          %1281 = vst [vmem:[#allocation2 + $0x30] sm:$0xff] %v1251
          %1282 = vst.msk [vmem:[#allocation2 + $0x38] sm:$0xff] %vm1275, %v1148
          %1283 = vst [vmem:[#allocation2 + $0x40] sm:$0xff] %v1256
          %1284 = vst.msk [vmem:[#allocation2 + $0x48] sm:$0xff] %vm1275, %v1149
          %1285 = vst [vmem:[#allocation2 + $0x50] sm:$0xff] %v1261
          %1286 = vst.msk [vmem:[#allocation2 + $0x58] sm:$0xff] %vm1275, %v1150
          %1287 = vst [vmem:[#allocation2 + $0x60] sm:$0xff] %v1266
          %1288 = vst.msk [vmem:[#allocation2 + $0x68] sm:$0xff] %vm1275, %v1151
          %1289 = vst [vmem:[#allocation2 + $0x70] sm:$0xff] %v1271
          %1290 = vst.msk [vmem:[#allocation2 + $0x78] sm:$0xff] %vm1275, %v1152
          %v1291 = vld [vmem:[%s27] sm:$0xff]
          %v1292 = vld [vmem:[%s27 + $0x8] sm:$0xff]
          %v1293 = vld [vmem:[%s27 + $0x10] sm:$0xff]
          %v1294 = vld [vmem:[%s27 + $0x18] sm:$0xff]
          %v1295 = vld [vmem:[%s27 + $0x20] sm:$0xff]
          %v1296 = vld [vmem:[%s27 + $0x28] sm:$0xff]
          %v1297 = vld [vmem:[%s27 + $0x30] sm:$0xff]
          %v1298 = vld [vmem:[%s27 + $0x38] sm:$0xff]
          %v1299 = vld [vmem:[%s27 + $0x40] sm:$0xff]
          %v1300 = vld [vmem:[%s27 + $0x48] sm:$0xff]
          %v1301 = vld [vmem:[%s27 + $0x50] sm:$0xff]
          %v1302 = vld [vmem:[%s27 + $0x58] sm:$0xff]
          %v1303 = vld [vmem:[%s27 + $0x60] sm:$0xff]
          %v1304 = vld [vmem:[%s27 + $0x68] sm:$0xff]
          %v1305 = vld [vmem:[%s27 + $0x70] sm:$0xff]
          %v1306 = vld [vmem:[%s27 + $0x78] sm:$0xff]
          %1307 = vmatprep.subr.mxu0 0.0
          %1308 = vmatpush1.msra.mxu0 %v1306
          %1309 = vmatprep.subr.mxu0 0.0
          %1310 = vmatpush1.msra.mxu0 %v1305
          %1311 = vmatprep.subr.mxu0 0.0
          %1312 = vmatpush1.msra.mxu0 %v1304
          %1313 = vmatprep.subr.mxu0 0.0
          %1314 = vmatpush1.msra.mxu0 %v1303
          %1315 = vmatprep.subr.mxu0 0.0
          %1316 = vmatpush1.msra.mxu0 %v1302
          %1317 = vmatprep.subr.mxu0 0.0
          %1318 = vmatpush1.msra.mxu0 %v1301
          %1319 = vmatprep.subr.mxu0 0.0
          %1320 = vmatpush1.msra.mxu0 %v1300
          %1321 = vmatprep.subr.mxu0 0.0
          %1322 = vmatpush1.msra.mxu0 %v1299
          %1323 = vmatprep.subr.mxu0 0.0
          %1324 = vmatpush1.msra.mxu0 %v1298
          %1325 = vmatprep.subr.mxu0 0.0
          %1326 = vmatpush1.msra.mxu0 %v1297
          %1327 = vmatprep.subr.mxu0 0.0
          %1328 = vmatpush1.msra.mxu0 %v1296
          %1329 = vmatprep.subr.mxu0 0.0
          %1330 = vmatpush1.msra.mxu0 %v1295
          %1331 = vmatprep.subr.mxu0 0.0
          %1332 = vmatpush1.msra.mxu0 %v1294
          %1333 = vmatprep.subr.mxu0 0.0
          %1334 = vmatpush1.msra.mxu0 %v1293
          %1335 = vmatprep.subr.mxu0 0.0
          %1336 = vmatpush1.msra.mxu0 %v1292
          %1337 = vmatprep.subr.mxu0 0.0
          %1338 = vmatpush1.msra.mxu0 %v1291
          %1339 = vmatprep.subr.mxu0 0.0
          %1340 = vmatpush2.msra.mxu0 0.0
          %1341 = vmatprep.subr.mxu0 0.0
          %1342 = vmatpush2.msra.mxu0 0.0
          %1343 = vmatprep.subr.mxu0 0.0
          %1344 = vmatpush2.msra.mxu0 0.0
          %1345 = vmatprep.subr.mxu0 0.0
          %1346 = vmatpush2.msra.mxu0 0.0
          %1347 = vmatprep.subr.mxu0 0.0
          %1348 = vmatpush2.msra.mxu0 0.0
          %1349 = vmatprep.subr.mxu0 0.0
          %1350 = vmatpush2.msra.mxu0 0.0
          %1351 = vmatprep.subr.mxu0 0.0
          %1352 = vmatpush2.msra.mxu0 0.0
          %1353 = vmatprep.subr.mxu0 0.0
          %1354 = vmatpush2.msra.mxu0 0.0
          %1355 = vmatprep.subr.mxu0 0.0
          %1356 = vmatpush2.msra.mxu0 0.0
          %1357 = vmatprep.subr.mxu0 0.0
          %1358 = vmatpush2.msra.mxu0 0.0
          %1359 = vmatprep.subr.mxu0 0.0
          %1360 = vmatpush2.msra.mxu0 0.0
          %1361 = vmatprep.subr.mxu0 0.0
          %1362 = vmatpush2.msra.mxu0 0.0
          %1363 = vmatprep.subr.mxu0 0.0
          %1364 = vmatpush2.msra.mxu0 0.0
          %1365 = vmatprep.subr.mxu0 0.0
          %1366 = vmatpush2.msra.mxu0 0.0
          %1367 = vmatprep.subr.mxu0 0.0
          %1368 = vmatpush2.msra.mxu0 0.0
          %1369 = vmatprep.subr.mxu0 0.0
          %1370 = vmatpush2.msra.mxu0 0.0
          %1371 = vmatprep.mubr.f32.mxu0 0.0
          %1372 = vmatmul.mubr.f32.gmra.mxu0 %v1137
          %v1373 = vpop.f32.mrf.mxu0
          %v1374 = vadd.f32 0.0, %v1373
          %v1375 = vpop.f32.mrf.mxu0
          %1376 = vmatprep.mubr.f32.mxu0 0.0
          %1377 = vmatmul.mubr.f32.gmra.mxu0 %v1138
          %v1378 = vpop.f32.mrf.mxu0
          %v1379 = vadd.f32 0.0, %v1378
          %v1380 = vpop.f32.mrf.mxu0
          %1381 = vmatprep.mubr.f32.mxu0 0.0
          %1382 = vmatmul.mubr.f32.gmra.mxu0 %v1139
          %v1383 = vpop.f32.mrf.mxu0
          %v1384 = vadd.f32 0.0, %v1383
          %v1385 = vpop.f32.mrf.mxu0
          %1386 = vmatprep.mubr.f32.mxu0 0.0
          %1387 = vmatmul.mubr.f32.gmra.mxu0 %v1140
          %v1388 = vpop.f32.mrf.mxu0
          %v1389 = vadd.f32 0.0, %v1388
          %v1390 = vpop.f32.mrf.mxu0
          %1391 = vmatprep.mubr.f32.mxu0 0.0
          %1392 = vmatmul.mubr.f32.gmra.mxu0 %v1141
          %v1393 = vpop.f32.mrf.mxu0
          %v1394 = vadd.f32 0.0, %v1393
          %v1395 = vpop.f32.mrf.mxu0
          %1396 = vmatprep.mubr.f32.mxu0 0.0
          %1397 = vmatmul.mubr.f32.gmra.mxu0 %v1142
          %v1398 = vpop.f32.mrf.mxu0
          %v1399 = vadd.f32 0.0, %v1398
          %v1400 = vpop.f32.mrf.mxu0
          %1401 = vmatprep.mubr.f32.mxu0 0.0
          %1402 = vmatmul.mubr.f32.gmra.mxu0 %v1143
          %v1403 = vpop.f32.mrf.mxu0
          %v1404 = vadd.f32 0.0, %v1403
          %v1405 = vpop.f32.mrf.mxu0
          %1406 = vmatprep.mubr.f32.mxu0 0.0
          %1407 = vmatmul.mubr.f32.gmra.mxu0 %v1144
          %v1408 = vpop.f32.mrf.mxu0
          %v1409 = vadd.f32 0.0, %v1408
          %v1410 = vpop.f32.mrf.mxu0
          %1411 = vdwg.mxu0
          %1412 = vst [vmem:[#allocation3] sm:$0xff] %v1374
          %1413 = vst.msk [vmem:[#allocation3 + $0x8] sm:$0xff] %vm1275, %v1145
          %1414 = vst [vmem:[#allocation3 + $0x10] sm:$0xff] %v1379
          %1415 = vst.msk [vmem:[#allocation3 + $0x18] sm:$0xff] %vm1275, %v1146
          %1416 = vst [vmem:[#allocation3 + $0x20] sm:$0xff] %v1384
          %1417 = vst.msk [vmem:[#allocation3 + $0x28] sm:$0xff] %vm1275, %v1147
          %1418 = vst [vmem:[#allocation3 + $0x30] sm:$0xff] %v1389
          %1419 = vst.msk [vmem:[#allocation3 + $0x38] sm:$0xff] %vm1275, %v1148
          %1420 = vst [vmem:[#allocation3 + $0x40] sm:$0xff] %v1394
          %1421 = vst.msk [vmem:[#allocation3 + $0x48] sm:$0xff] %vm1275, %v1149
          %1422 = vst [vmem:[#allocation3 + $0x50] sm:$0xff] %v1399
          %1423 = vst.msk [vmem:[#allocation3 + $0x58] sm:$0xff] %vm1275, %v1150
          %1424 = vst [vmem:[#allocation3 + $0x60] sm:$0xff] %v1404
          %1425 = vst.msk [vmem:[#allocation3 + $0x68] sm:$0xff] %vm1275, %v1151
          %1426 = vst [vmem:[#allocation3 + $0x70] sm:$0xff] %v1409
          %1427 = vst.msk [vmem:[#allocation3 + $0x78] sm:$0xff] %vm1275, %v1152
          %1428 = vst [vmem:[#allocation4] sm:$0xff] 0.0
          %1429 = vst.msk [vmem:[#allocation4 + $0x8] sm:$0xff] %vm1275, 0.0
          %1430 = vst [vmem:[#allocation4 + $0x10] sm:$0xff] 0.0
          %1431 = vst.msk [vmem:[#allocation4 + $0x18] sm:$0xff] %vm1275, 0.0
          %1432 = vst [vmem:[#allocation4 + $0x20] sm:$0xff] 0.0
          %1433 = vst.msk [vmem:[#allocation4 + $0x28] sm:$0xff] %vm1275, 0.0
          %1434 = vst [vmem:[#allocation4 + $0x30] sm:$0xff] 0.0
          %1435 = vst.msk [vmem:[#allocation4 + $0x38] sm:$0xff] %vm1275, 0.0
          %1436 = vst [vmem:[#allocation4 + $0x40] sm:$0xff] 0.0
          %1437 = vst.msk [vmem:[#allocation4 + $0x48] sm:$0xff] %vm1275, 0.0
          %1438 = vst [vmem:[#allocation4 + $0x50] sm:$0xff] 0.0
          %1439 = vst.msk [vmem:[#allocation4 + $0x58] sm:$0xff] %vm1275, 0.0
          %1440 = vst [vmem:[#allocation4 + $0x60] sm:$0xff] 0.0
          %1441 = vst.msk [vmem:[#allocation4 + $0x68] sm:$0xff] %vm1275, 0.0
          %1442 = vst [vmem:[#allocation4 + $0x70] sm:$0xff] 0.0
          %1443 = vst.msk [vmem:[#allocation4 + $0x78] sm:$0xff] %vm1275, 0.0
        $region197: #{tpu_custom_call.1} parent=184 // pred_fallthru
          _
        %v1444 = vld [vmem:[%s1125] sm:$0xf]
        %v1445 = vld [vmem:[%s1125 + $0x4] sm:$0xf]
        %v1446 = vld [vmem:[%s1125 + $0x8] sm:$0xf]
        %v1447 = vld [vmem:[%s1125 + $0xc] sm:$0xf]
        %v1448 = vld [vmem:[%s1125 + $0x10] sm:$0xf]
        %v1449 = vld [vmem:[%s1125 + $0x14] sm:$0xf]
        %v1450 = vld [vmem:[%s1125 + $0x18] sm:$0xf]
        %v1451 = vld [vmem:[%s1125 + $0x1c] sm:$0xf]
        %v1452 = vld [vmem:[%s1125 + $0x20] sm:$0xf]
        %v1453 = vld [vmem:[%s1125 + $0x24] sm:$0xf]
        %v1454 = vld [vmem:[%s1125 + $0x28] sm:$0xf]
        %v1455 = vld [vmem:[%s1125 + $0x2c] sm:$0xf]
        %v1456 = vld [vmem:[%s1125 + $0x30] sm:$0xf]
        %v1457 = vld [vmem:[%s1125 + $0x34] sm:$0xf]
        %v1458 = vld [vmem:[%s1125 + $0x38] sm:$0xf]
        %v1459 = vld [vmem:[%s1125 + $0x3c] sm:$0xf]
        %v1460 = vunpack.c.l.bf16 %v1444
        %v1461 = vunpack.c.l.bf16 %v1445
        %v1462 = vunpack.c.l.bf16 %v1446
        %v1463 = vunpack.c.l.bf16 %v1447
        %v1464 = vunpack.c.l.bf16 %v1448
        %v1465 = vunpack.c.l.bf16 %v1449
        %v1466 = vunpack.c.l.bf16 %v1450
        %v1467 = vunpack.c.l.bf16 %v1451
        %v1468 = vunpack.c.l.bf16 %v1452
        %v1469 = vunpack.c.l.bf16 %v1453
        %v1470 = vunpack.c.l.bf16 %v1454
        %v1471 = vunpack.c.l.bf16 %v1455
        %v1472 = vunpack.c.l.bf16 %v1456
        %v1473 = vunpack.c.l.bf16 %v1457
        %v1474 = vunpack.c.l.bf16 %v1458
        %v1475 = vunpack.c.l.bf16 %v1459
        %v1476 = vld [vmem:[%s1131] sm:$0xf]
        %v1477 = vld [vmem:[%s1131 + $0x4] sm:$0xf]
        %v1478 = vld [vmem:[%s1131 + $0x8] sm:$0xf]
        %v1479 = vld [vmem:[%s1131 + $0xc] sm:$0xf]
        %v1480 = vld [vmem:[%s1131 + $0x10] sm:$0xf]
        %v1481 = vld [vmem:[%s1131 + $0x14] sm:$0xf]
        %v1482 = vld [vmem:[%s1131 + $0x18] sm:$0xf]
        %v1483 = vld [vmem:[%s1131 + $0x1c] sm:$0xf]
        %v1484 = vld [vmem:[%s1131 + $0x20] sm:$0xf]
        %v1485 = vld [vmem:[%s1131 + $0x24] sm:$0xf]
        %v1486 = vld [vmem:[%s1131 + $0x28] sm:$0xf]
        %v1487 = vld [vmem:[%s1131 + $0x2c] sm:$0xf]
        %v1488 = vld [vmem:[%s1131 + $0x30] sm:$0xf]
        %v1489 = vld [vmem:[%s1131 + $0x34] sm:$0xf]
        %v1490 = vld [vmem:[%s1131 + $0x38] sm:$0xf]
        %v1491 = vld [vmem:[%s1131 + $0x3c] sm:$0xf]
        %v1492 = vunpack.c.l.bf16 %v1476
        %v1493 = vunpack.c.l.bf16 %v1477
        %v1494 = vunpack.c.l.bf16 %v1478
        %v1495 = vunpack.c.l.bf16 %v1479
        %v1496 = vunpack.c.l.bf16 %v1480
        %v1497 = vunpack.c.l.bf16 %v1481
        %v1498 = vunpack.c.l.bf16 %v1482
        %v1499 = vunpack.c.l.bf16 %v1483
        %v1500 = vunpack.c.l.bf16 %v1484
        %v1501 = vunpack.c.l.bf16 %v1485
        %v1502 = vunpack.c.l.bf16 %v1486
        %v1503 = vunpack.c.l.bf16 %v1487
        %v1504 = vunpack.c.l.bf16 %v1488
        %v1505 = vunpack.c.l.bf16 %v1489
        %v1506 = vunpack.c.l.bf16 %v1490
        %v1507 = vunpack.c.l.bf16 %v1491
        %v1508 = vld [vmem:[%s1031] sm:$0xf]
        %v1509 = vld [vmem:[%s1031 + $0x4] sm:$0xf]
        %v1510 = vld [vmem:[%s1031 + $0x8] sm:$0xf]
        %v1511 = vld [vmem:[%s1031 + $0xc] sm:$0xf]
        %v1512 = vld [vmem:[%s1031 + $0x10] sm:$0xf]
        %v1513 = vld [vmem:[%s1031 + $0x14] sm:$0xf]
        %v1514 = vld [vmem:[%s1031 + $0x18] sm:$0xf]
        %v1515 = vld [vmem:[%s1031 + $0x1c] sm:$0xf]
        %v1516 = vunpack.c.l.bf16 %v1508
        %v1517 = vunpack.c.l.bf16 %v1509
        %v1518 = vunpack.c.l.bf16 %v1510
        %v1519 = vunpack.c.l.bf16 %v1511
        %v1520 = vunpack.c.l.bf16 %v1512
        %v1521 = vunpack.c.l.bf16 %v1513
        %v1522 = vunpack.c.l.bf16 %v1514
        %v1523 = vunpack.c.l.bf16 %v1515
        %v1524 = vld [vmem:[#allocation2] sm:$0xff]
        %v1525 = vld [vmem:[#allocation2 + $0x8] sm:$0xff]
        %v1526 = vld [vmem:[#allocation2 + $0x10] sm:$0xff]
        %v1527 = vld [vmem:[#allocation2 + $0x18] sm:$0xff]
        %v1528 = vld [vmem:[#allocation2 + $0x20] sm:$0xff]
        %v1529 = vld [vmem:[#allocation2 + $0x28] sm:$0xff]
        %v1530 = vld [vmem:[#allocation2 + $0x30] sm:$0xff]
        %v1531 = vld [vmem:[#allocation2 + $0x38] sm:$0xff]
        %v1532 = vld [vmem:[#allocation2 + $0x40] sm:$0xff]
        %v1533 = vld [vmem:[#allocation2 + $0x48] sm:$0xff]
        %v1534 = vld [vmem:[#allocation2 + $0x50] sm:$0xff]
        %v1535 = vld [vmem:[#allocation2 + $0x58] sm:$0xff]
        %v1536 = vld [vmem:[#allocation2 + $0x60] sm:$0xff]
        %v1537 = vld [vmem:[#allocation2 + $0x68] sm:$0xff]
        %v1538 = vld [vmem:[#allocation2 + $0x70] sm:$0xff]
        %v1539 = vld [vmem:[#allocation2 + $0x78] sm:$0xff]
        %vm1540 = vcmask 523264
        %v1542 = vsel %vm1540, %v1460, 0
        %v1545 = vsel %vm1540, %v1461, 0
        %v1548 = vsel %vm1540, %v1462, 0
        %v1551 = vsel %vm1540, %v1463, 0
        %v1554 = vsel %vm1540, %v1464, 0
        %v1557 = vsel %vm1540, %v1465, 0
        %v1560 = vsel %vm1540, %v1466, 0
        %v1563 = vsel %vm1540, %v1467, 0
        %v1566 = vsel %vm1540, %v1468, 0
        %v1569 = vsel %vm1540, %v1469, 0
        %v1572 = vsel %vm1540, %v1470, 0
        %v1575 = vsel %vm1540, %v1471, 0
        %v1578 = vsel %vm1540, %v1472, 0
        %v1581 = vsel %vm1540, %v1473, 0
        %v1584 = vsel %vm1540, %v1474, 0
        %v1587 = vsel %vm1540, %v1475, 0
        %1589 = vmatprep.subr.mxu0 0.0
        %1590 = vmatpush1.msra.mxu0 0.0
        %1591 = vmatprep.subr.mxu0 0.0
        %1592 = vmatpush1.msra.mxu0 0.0
        %1593 = vmatprep.subr.mxu0 0.0
        %1594 = vmatpush1.msra.mxu0 0.0
        %1595 = vmatprep.subr.mxu0 0.0
        %1596 = vmatpush1.msra.mxu0 0.0
        %1597 = vmatprep.subr.mxu0 0.0
        %1598 = vmatpush1.msra.mxu0 0.0
        %1599 = vmatprep.subr.mxu0 0.0
        %1600 = vmatpush1.msra.mxu0 0.0
        %1601 = vmatprep.subr.mxu0 0.0
        %1602 = vmatpush1.msra.mxu0 0.0
        %1603 = vmatprep.subr.mxu0 0.0
        %1604 = vmatpush1.msra.mxu0 0.0
        %1605 = vmatprep.subr.mxu0 %v1539
        %1606 = vmatpush1.msra.mxu0 %v1538
        %1607 = vmatprep.subr.mxu0 %v1537
        %1608 = vmatpush1.msra.mxu0 %v1536
        %1609 = vmatprep.subr.mxu0 %v1535
        %1610 = vmatpush1.msra.mxu0 %v1534
        %1611 = vmatprep.subr.mxu0 %v1533
        %1612 = vmatpush1.msra.mxu0 %v1532
        %1613 = vmatprep.subr.mxu0 %v1531
        %1614 = vmatpush1.msra.mxu0 %v1530
        %1615 = vmatprep.subr.mxu0 %v1529
        %1616 = vmatpush1.msra.mxu0 %v1528
        %1617 = vmatprep.subr.mxu0 %v1527
        %1618 = vmatpush1.msra.mxu0 %v1526
        %1619 = vmatprep.subr.mxu0 %v1525
        %1620 = vmatpush1.msra.mxu0 %v1524
        %1621 = vmatprep.subr.mxu0 0.0
        %1622 = vmatpush2.msra.mxu0 0.0
        %1623 = vmatprep.subr.mxu0 0.0
        %1624 = vmatpush2.msra.mxu0 0.0
        %1625 = vmatprep.subr.mxu0 0.0
        %1626 = vmatpush2.msra.mxu0 0.0
        %1627 = vmatprep.subr.mxu0 0.0
        %1628 = vmatpush2.msra.mxu0 0.0
        %1629 = vmatprep.subr.mxu0 0.0
        %1630 = vmatpush2.msra.mxu0 0.0
        %1631 = vmatprep.subr.mxu0 0.0
        %1632 = vmatpush2.msra.mxu0 0.0
        %1633 = vmatprep.subr.mxu0 0.0
        %1634 = vmatpush2.msra.mxu0 0.0
        %1635 = vmatprep.subr.mxu0 0.0
        %1636 = vmatpush2.msra.mxu0 0.0
        %1637 = vmatprep.subr.mxu0 0.0
        %1638 = vmatpush2.msra.mxu0 0.0
        %1639 = vmatprep.subr.mxu0 0.0
        %1640 = vmatpush2.msra.mxu0 0.0
        %1641 = vmatprep.subr.mxu0 0.0
        %1642 = vmatpush2.msra.mxu0 0.0
        %1643 = vmatprep.subr.mxu0 0.0
        %1644 = vmatpush2.msra.mxu0 0.0
        %1645 = vmatprep.subr.mxu0 0.0
        %1646 = vmatpush2.msra.mxu0 0.0
        %1647 = vmatprep.subr.mxu0 0.0
        %1648 = vmatpush2.msra.mxu0 0.0
        %1649 = vmatprep.subr.mxu0 0.0
        %1650 = vmatpush2.msra.mxu0 0.0
        %1651 = vmatprep.subr.mxu0 0.0
        %1652 = vmatpush2.msra.mxu0 0.0
        %1653 = vmatprep.mubr.f32.mxu0 0.0
        %1654 = vmatmul.mubr.f32.gmra.mxu0 %v1542
        %v1655 = vpop.f32.mrf.mxu0
        %v1656 = vadd.f32 0.0, %v1655
        %v1657 = vpop.f32.mrf.mxu0
        %v1658 = vadd.f32 0.0, %v1657
        %1659 = vmatprep.mubr.f32.mxu0 0.0
        %1660 = vmatmul.mubr.f32.gmra.mxu0 %v1545
        %v1661 = vpop.f32.mrf.mxu0
        %v1662 = vadd.f32 0.0, %v1661
        %v1663 = vpop.f32.mrf.mxu0
        %v1664 = vadd.f32 0.0, %v1663
        %1665 = vmatprep.mubr.f32.mxu0 0.0
        %1666 = vmatmul.mubr.f32.gmra.mxu0 %v1548
        %v1667 = vpop.f32.mrf.mxu0
        %v1668 = vadd.f32 0.0, %v1667
        %v1669 = vpop.f32.mrf.mxu0
        %v1670 = vadd.f32 0.0, %v1669
        %1671 = vmatprep.mubr.f32.mxu0 0.0
        %1672 = vmatmul.mubr.f32.gmra.mxu0 %v1551
        %v1673 = vpop.f32.mrf.mxu0
        %v1674 = vadd.f32 0.0, %v1673
        %v1675 = vpop.f32.mrf.mxu0
        %v1676 = vadd.f32 0.0, %v1675
        %1677 = vmatprep.mubr.f32.mxu0 0.0
        %1678 = vmatmul.mubr.f32.gmra.mxu0 %v1554
        %v1679 = vpop.f32.mrf.mxu0
        %v1680 = vadd.f32 0.0, %v1679
        %v1681 = vpop.f32.mrf.mxu0
        %v1682 = vadd.f32 0.0, %v1681
        %1683 = vmatprep.mubr.f32.mxu0 0.0
        %1684 = vmatmul.mubr.f32.gmra.mxu0 %v1557
        %v1685 = vpop.f32.mrf.mxu0
        %v1686 = vadd.f32 0.0, %v1685
        %v1687 = vpop.f32.mrf.mxu0
        %v1688 = vadd.f32 0.0, %v1687
        %1689 = vmatprep.mubr.f32.mxu0 0.0
        %1690 = vmatmul.mubr.f32.gmra.mxu0 %v1560
        %v1691 = vpop.f32.mrf.mxu0
        %v1692 = vadd.f32 0.0, %v1691
        %v1693 = vpop.f32.mrf.mxu0
        %v1694 = vadd.f32 0.0, %v1693
        %1695 = vmatprep.mubr.f32.mxu0 0.0
        %1696 = vmatmul.mubr.f32.gmra.mxu0 %v1563
        %v1697 = vpop.f32.mrf.mxu0
        %v1698 = vadd.f32 0.0, %v1697
        %v1699 = vpop.f32.mrf.mxu0
        %v1700 = vadd.f32 0.0, %v1699
        %1701 = vmatprep.mubr.f32.mxu0 0.0
        %1702 = vmatmul.mubr.f32.gmra.mxu0 %v1566
        %v1703 = vpop.f32.mrf.mxu0
        %v1704 = vadd.f32 0.0, %v1703
        %v1705 = vpop.f32.mrf.mxu0
        %v1706 = vadd.f32 0.0, %v1705
        %1707 = vmatprep.mubr.f32.mxu0 0.0
        %1708 = vmatmul.mubr.f32.gmra.mxu0 %v1569
        %v1709 = vpop.f32.mrf.mxu0
        %v1710 = vadd.f32 0.0, %v1709
        %v1711 = vpop.f32.mrf.mxu0
        %v1712 = vadd.f32 0.0, %v1711
        %1713 = vmatprep.mubr.f32.mxu0 0.0
        %1714 = vmatmul.mubr.f32.gmra.mxu0 %v1572
        %v1715 = vpop.f32.mrf.mxu0
        %v1716 = vadd.f32 0.0, %v1715
        %v1717 = vpop.f32.mrf.mxu0
        %v1718 = vadd.f32 0.0, %v1717
        %1719 = vmatprep.mubr.f32.mxu0 0.0
        %1720 = vmatmul.mubr.f32.gmra.mxu0 %v1575
        %v1721 = vpop.f32.mrf.mxu0
        %v1722 = vadd.f32 0.0, %v1721
        %v1723 = vpop.f32.mrf.mxu0
        %v1724 = vadd.f32 0.0, %v1723
        %1725 = vmatprep.mubr.f32.mxu0 0.0
        %1726 = vmatmul.mubr.f32.gmra.mxu0 %v1578
        %v1727 = vpop.f32.mrf.mxu0
        %v1728 = vadd.f32 0.0, %v1727
        %v1729 = vpop.f32.mrf.mxu0
        %v1730 = vadd.f32 0.0, %v1729
        %1731 = vmatprep.mubr.f32.mxu0 0.0
        %1732 = vmatmul.mubr.f32.gmra.mxu0 %v1581
        %v1733 = vpop.f32.mrf.mxu0
        %v1734 = vadd.f32 0.0, %v1733
        %v1735 = vpop.f32.mrf.mxu0
        %v1736 = vadd.f32 0.0, %v1735
        %1737 = vmatprep.mubr.f32.mxu0 0.0
        %1738 = vmatmul.mubr.f32.gmra.mxu0 %v1584
        %v1739 = vpop.f32.mrf.mxu0
        %v1740 = vadd.f32 0.0, %v1739
        %v1741 = vpop.f32.mrf.mxu0
        %v1742 = vadd.f32 0.0, %v1741
        %1743 = vmatprep.mubr.f32.mxu0 0.0
        %1744 = vmatmul.mubr.f32.gmra.mxu0 %v1587
        %v1745 = vpop.f32.mrf.mxu0
        %v1746 = vadd.f32 0.0, %v1745
        %v1747 = vpop.f32.mrf.mxu0
        %v1748 = vadd.f32 0.0, %v1747
        %1749 = vdwg.mxu0
        %v1750 = vld [vmem:[#allocation3] sm:$0xff]
        %v1751 = vld [vmem:[#allocation3 + $0x8] sm:$0xff]
        %v1752 = vld [vmem:[#allocation3 + $0x10] sm:$0xff]
        %v1753 = vld [vmem:[#allocation3 + $0x18] sm:$0xff]
        %v1754 = vld [vmem:[#allocation3 + $0x20] sm:$0xff]
        %v1755 = vld [vmem:[#allocation3 + $0x28] sm:$0xff]
        %v1756 = vld [vmem:[#allocation3 + $0x30] sm:$0xff]
        %v1757 = vld [vmem:[#allocation3 + $0x38] sm:$0xff]
        %v1758 = vld [vmem:[#allocation3 + $0x40] sm:$0xff]
        %v1759 = vld [vmem:[#allocation3 + $0x48] sm:$0xff]
        %v1760 = vld [vmem:[#allocation3 + $0x50] sm:$0xff]
        %v1761 = vld [vmem:[#allocation3 + $0x58] sm:$0xff]
        %v1762 = vld [vmem:[#allocation3 + $0x60] sm:$0xff]
        %v1763 = vld [vmem:[#allocation3 + $0x68] sm:$0xff]
        %v1764 = vld [vmem:[#allocation3 + $0x70] sm:$0xff]
        %v1765 = vld [vmem:[#allocation3 + $0x78] sm:$0xff]
        %v1767 = vsel %vm1540, %v1492, 0
        %v1770 = vsel %vm1540, %v1493, 0
        %v1773 = vsel %vm1540, %v1494, 0
        %v1776 = vsel %vm1540, %v1495, 0
        %v1779 = vsel %vm1540, %v1496, 0
        %v1782 = vsel %vm1540, %v1497, 0
        %v1785 = vsel %vm1540, %v1498, 0
        %v1788 = vsel %vm1540, %v1499, 0
        %v1791 = vsel %vm1540, %v1500, 0
        %v1794 = vsel %vm1540, %v1501, 0
        %v1797 = vsel %vm1540, %v1502, 0
        %v1800 = vsel %vm1540, %v1503, 0
        %v1803 = vsel %vm1540, %v1504, 0
        %v1806 = vsel %vm1540, %v1505, 0
        %v1809 = vsel %vm1540, %v1506, 0
        %v1812 = vsel %vm1540, %v1507, 0
        %1814 = vmatprep.subr.mxu0 0.0
        %1815 = vmatpush1.msra.mxu0 0.0
        %1816 = vmatprep.subr.mxu0 0.0
        %1817 = vmatpush1.msra.mxu0 0.0
        %1818 = vmatprep.subr.mxu0 0.0
        %1819 = vmatpush1.msra.mxu0 0.0
        %1820 = vmatprep.subr.mxu0 0.0
        %1821 = vmatpush1.msra.mxu0 0.0
        %1822 = vmatprep.subr.mxu0 0.0
        %1823 = vmatpush1.msra.mxu0 0.0
        %1824 = vmatprep.subr.mxu0 0.0
        %1825 = vmatpush1.msra.mxu0 0.0
        %1826 = vmatprep.subr.mxu0 0.0
        %1827 = vmatpush1.msra.mxu0 0.0
        %1828 = vmatprep.subr.mxu0 0.0
        %1829 = vmatpush1.msra.mxu0 0.0
        %1830 = vmatprep.subr.mxu0 %v1765
        %1831 = vmatpush1.msra.mxu0 %v1764
        %1832 = vmatprep.subr.mxu0 %v1763
        %1833 = vmatpush1.msra.mxu0 %v1762
        %1834 = vmatprep.subr.mxu0 %v1761
        %1835 = vmatpush1.msra.mxu0 %v1760
        %1836 = vmatprep.subr.mxu0 %v1759
        %1837 = vmatpush1.msra.mxu0 %v1758
        %1838 = vmatprep.subr.mxu0 %v1757
        %1839 = vmatpush1.msra.mxu0 %v1756
        %1840 = vmatprep.subr.mxu0 %v1755
        %1841 = vmatpush1.msra.mxu0 %v1754
        %1842 = vmatprep.subr.mxu0 %v1753
        %1843 = vmatpush1.msra.mxu0 %v1752
        %1844 = vmatprep.subr.mxu0 %v1751
        %1845 = vmatpush1.msra.mxu0 %v1750
        %1846 = vmatprep.subr.mxu0 0.0
        %1847 = vmatpush2.msra.mxu0 0.0
        %1848 = vmatprep.subr.mxu0 0.0
        %1849 = vmatpush2.msra.mxu0 0.0
        %1850 = vmatprep.subr.mxu0 0.0
        %1851 = vmatpush2.msra.mxu0 0.0
        %1852 = vmatprep.subr.mxu0 0.0
        %1853 = vmatpush2.msra.mxu0 0.0
        %1854 = vmatprep.subr.mxu0 0.0
        %1855 = vmatpush2.msra.mxu0 0.0
        %1856 = vmatprep.subr.mxu0 0.0
        %1857 = vmatpush2.msra.mxu0 0.0
        %1858 = vmatprep.subr.mxu0 0.0
        %1859 = vmatpush2.msra.mxu0 0.0
        %1860 = vmatprep.subr.mxu0 0.0
        %1861 = vmatpush2.msra.mxu0 0.0
        %1862 = vmatprep.subr.mxu0 0.0
        %1863 = vmatpush2.msra.mxu0 0.0
        %1864 = vmatprep.subr.mxu0 0.0
        %1865 = vmatpush2.msra.mxu0 0.0
        %1866 = vmatprep.subr.mxu0 0.0
        %1867 = vmatpush2.msra.mxu0 0.0
        %1868 = vmatprep.subr.mxu0 0.0
        %1869 = vmatpush2.msra.mxu0 0.0
        %1870 = vmatprep.subr.mxu0 0.0
        %1871 = vmatpush2.msra.mxu0 0.0
        %1872 = vmatprep.subr.mxu0 0.0
        %1873 = vmatpush2.msra.mxu0 0.0
        %1874 = vmatprep.subr.mxu0 0.0
        %1875 = vmatpush2.msra.mxu0 0.0
        %1876 = vmatprep.subr.mxu0 0.0
        %1877 = vmatpush2.msra.mxu0 0.0
        %1878 = vmatprep.mubr.f32.mxu0 0.0
        %1879 = vmatmul.mubr.f32.gmra.mxu0 %v1767
        %v1880 = vpop.f32.mrf.mxu0
        %v1881 = vadd.f32 0.0, %v1880
        %v1882 = vpop.f32.mrf.mxu0
        %v1883 = vadd.f32 0.0, %v1882
        %1884 = vmatprep.mubr.f32.mxu0 0.0
        %1885 = vmatmul.mubr.f32.gmra.mxu0 %v1770
        %v1886 = vpop.f32.mrf.mxu0
        %v1887 = vadd.f32 0.0, %v1886
        %v1888 = vpop.f32.mrf.mxu0
        %v1889 = vadd.f32 0.0, %v1888
        %1890 = vmatprep.mubr.f32.mxu0 0.0
        %1891 = vmatmul.mubr.f32.gmra.mxu0 %v1773
        %v1892 = vpop.f32.mrf.mxu0
        %v1893 = vadd.f32 0.0, %v1892
        %v1894 = vpop.f32.mrf.mxu0
        %v1895 = vadd.f32 0.0, %v1894
        %1896 = vmatprep.mubr.f32.mxu0 0.0
        %1897 = vmatmul.mubr.f32.gmra.mxu0 %v1776
        %v1898 = vpop.f32.mrf.mxu0
        %v1899 = vadd.f32 0.0, %v1898
        %v1900 = vpop.f32.mrf.mxu0
        %v1901 = vadd.f32 0.0, %v1900
        %1902 = vmatprep.mubr.f32.mxu0 0.0
        %1903 = vmatmul.mubr.f32.gmra.mxu0 %v1779
        %v1904 = vpop.f32.mrf.mxu0
        %v1905 = vadd.f32 0.0, %v1904
        %v1906 = vpop.f32.mrf.mxu0
        %v1907 = vadd.f32 0.0, %v1906
        %1908 = vmatprep.mubr.f32.mxu0 0.0
        %1909 = vmatmul.mubr.f32.gmra.mxu0 %v1782
        %v1910 = vpop.f32.mrf.mxu0
        %v1911 = vadd.f32 0.0, %v1910
        %v1912 = vpop.f32.mrf.mxu0
        %v1913 = vadd.f32 0.0, %v1912
        %1914 = vmatprep.mubr.f32.mxu0 0.0
        %1915 = vmatmul.mubr.f32.gmra.mxu0 %v1785
        %v1916 = vpop.f32.mrf.mxu0
        %v1917 = vadd.f32 0.0, %v1916
        %v1918 = vpop.f32.mrf.mxu0
        %v1919 = vadd.f32 0.0, %v1918
        %1920 = vmatprep.mubr.f32.mxu0 0.0
        %1921 = vmatmul.mubr.f32.gmra.mxu0 %v1788
        %v1922 = vpop.f32.mrf.mxu0
        %v1923 = vadd.f32 0.0, %v1922
        %v1924 = vpop.f32.mrf.mxu0
        %v1925 = vadd.f32 0.0, %v1924
        %1926 = vmatprep.mubr.f32.mxu0 0.0
        %1927 = vmatmul.mubr.f32.gmra.mxu0 %v1791
        %v1928 = vpop.f32.mrf.mxu0
        %v1929 = vadd.f32 0.0, %v1928
        %v1930 = vpop.f32.mrf.mxu0
        %v1931 = vadd.f32 0.0, %v1930
        %1932 = vmatprep.mubr.f32.mxu0 0.0
        %1933 = vmatmul.mubr.f32.gmra.mxu0 %v1794
        %v1934 = vpop.f32.mrf.mxu0
        %v1935 = vadd.f32 0.0, %v1934
        %v1936 = vpop.f32.mrf.mxu0
        %v1937 = vadd.f32 0.0, %v1936
        %1938 = vmatprep.mubr.f32.mxu0 0.0
        %1939 = vmatmul.mubr.f32.gmra.mxu0 %v1797
        %v1940 = vpop.f32.mrf.mxu0
        %v1941 = vadd.f32 0.0, %v1940
        %v1942 = vpop.f32.mrf.mxu0
        %v1943 = vadd.f32 0.0, %v1942
        %1944 = vmatprep.mubr.f32.mxu0 0.0
        %1945 = vmatmul.mubr.f32.gmra.mxu0 %v1800
        %v1946 = vpop.f32.mrf.mxu0
        %v1947 = vadd.f32 0.0, %v1946
        %v1948 = vpop.f32.mrf.mxu0
        %v1949 = vadd.f32 0.0, %v1948
        %1950 = vmatprep.mubr.f32.mxu0 0.0
        %1951 = vmatmul.mubr.f32.gmra.mxu0 %v1803
        %v1952 = vpop.f32.mrf.mxu0
        %v1953 = vadd.f32 0.0, %v1952
        %v1954 = vpop.f32.mrf.mxu0
        %v1955 = vadd.f32 0.0, %v1954
        %1956 = vmatprep.mubr.f32.mxu0 0.0
        %1957 = vmatmul.mubr.f32.gmra.mxu0 %v1806
        %v1958 = vpop.f32.mrf.mxu0
        %v1959 = vadd.f32 0.0, %v1958
        %v1960 = vpop.f32.mrf.mxu0
        %v1961 = vadd.f32 0.0, %v1960
        %1962 = vmatprep.mubr.f32.mxu0 0.0
        %1963 = vmatmul.mubr.f32.gmra.mxu0 %v1809
        %v1964 = vpop.f32.mrf.mxu0
        %v1965 = vadd.f32 0.0, %v1964
        %v1966 = vpop.f32.mrf.mxu0
        %v1967 = vadd.f32 0.0, %v1966
        %1968 = vmatprep.mubr.f32.mxu0 0.0
        %1969 = vmatmul.mubr.f32.gmra.mxu0 %v1812
        %v1970 = vpop.f32.mrf.mxu0
        %v1971 = vadd.f32 0.0, %v1970
        %v1972 = vpop.f32.mrf.mxu0
        %v1973 = vadd.f32 0.0, %v1972
        %1974 = vdwg.mxu0
        %v1975 = vsub.f32 %v1658, %v1883
        %v1976 = vsub.f32 %v1664, %v1889
        %v1977 = vsub.f32 %v1670, %v1895
        %v1978 = vsub.f32 %v1676, %v1901
        %v1979 = vsub.f32 %v1682, %v1907
        %v1980 = vsub.f32 %v1688, %v1913
        %v1981 = vsub.f32 %v1694, %v1919
        %v1982 = vsub.f32 %v1700, %v1925
        %v1983 = vsub.f32 %v1706, %v1931
        %v1984 = vsub.f32 %v1712, %v1937
        %v1985 = vsub.f32 %v1718, %v1943
        %v1986 = vsub.f32 %v1724, %v1949
        %v1987 = vsub.f32 %v1730, %v1955
        %v1988 = vsub.f32 %v1736, %v1961
        %v1989 = vsub.f32 %v1742, %v1967
        %v1990 = vsub.f32 %v1748, %v1973
        %v1991 = vmul.f32 %v1975, %v1975
        %v1992 = vmul.f32 %v1976, %v1976
        %v1993 = vmul.f32 %v1977, %v1977
        %v1994 = vmul.f32 %v1978, %v1978
        %v1995 = vmul.f32 %v1979, %v1979
        %v1996 = vmul.f32 %v1980, %v1980
        %v1997 = vmul.f32 %v1981, %v1981
        %v1998 = vmul.f32 %v1982, %v1982
        %v1999 = vmul.f32 %v1983, %v1983
        %v2000 = vmul.f32 %v1984, %v1984
        %v2001 = vmul.f32 %v1985, %v1985
        %v2002 = vmul.f32 %v1986, %v1986
        %v2003 = vmul.f32 %v1987, %v1987
        %v2004 = vmul.f32 %v1988, %v1988
        %v2005 = vmul.f32 %v1989, %v1989
        %v2006 = vmul.f32 %v1990, %v1990
        %vm2007 = vcmask 23552
        %v2008 = vsel %vm2007, %v1991, 0.0
        %2009 = vadd.xlane.f32.xlu0 %v2008
        %v2010 = vpop.xlane.xlu0 %2009
        %v2011 = vsel %vm2007, %v1992, 0.0
        %2012 = vadd.xlane.f32.xlu0 %v2011
        %v2013 = vpop.xlane.xlu0 %2012
        %v2014 = vsel %vm2007, %v1993, 0.0
        %2015 = vadd.xlane.f32.xlu0 %v2014
        %v2016 = vpop.xlane.xlu0 %2015
        %v2017 = vsel %vm2007, %v1994, 0.0
        %2018 = vadd.xlane.f32.xlu0 %v2017
        %v2019 = vpop.xlane.xlu0 %2018
        %v2020 = vsel %vm2007, %v1995, 0.0
        %2021 = vadd.xlane.f32.xlu0 %v2020
        %v2022 = vpop.xlane.xlu0 %2021
        %v2023 = vsel %vm2007, %v1996, 0.0
        %2024 = vadd.xlane.f32.xlu0 %v2023
        %v2025 = vpop.xlane.xlu0 %2024
        %v2026 = vsel %vm2007, %v1997, 0.0
        %2027 = vadd.xlane.f32.xlu0 %v2026
        %v2028 = vpop.xlane.xlu0 %2027
        %v2029 = vsel %vm2007, %v1998, 0.0
        %2030 = vadd.xlane.f32.xlu0 %v2029
        %v2031 = vpop.xlane.xlu0 %2030
        %v2032 = vsel %vm2007, %v1999, 0.0
        %2033 = vadd.xlane.f32.xlu0 %v2032
        %v2034 = vpop.xlane.xlu0 %2033
        %v2035 = vsel %vm2007, %v2000, 0.0
        %2036 = vadd.xlane.f32.xlu0 %v2035
        %v2037 = vpop.xlane.xlu0 %2036
        %v2038 = vsel %vm2007, %v2001, 0.0
        %2039 = vadd.xlane.f32.xlu0 %v2038
        %v2040 = vpop.xlane.xlu0 %2039
        %v2041 = vsel %vm2007, %v2002, 0.0
        %2042 = vadd.xlane.f32.xlu0 %v2041
        %v2043 = vpop.xlane.xlu0 %2042
        %v2044 = vsel %vm2007, %v2003, 0.0
        %2045 = vadd.xlane.f32.xlu0 %v2044
        %v2046 = vpop.xlane.xlu0 %2045
        %v2047 = vsel %vm2007, %v2004, 0.0
        %2048 = vadd.xlane.f32.xlu0 %v2047
        %v2049 = vpop.xlane.xlu0 %2048
        %v2050 = vsel %vm2007, %v2005, 0.0
        %2051 = vadd.xlane.f32.xlu0 %v2050
        %v2052 = vpop.xlane.xlu0 %2051
        %v2053 = vsel %vm2007, %v2006, 0.0
        %2054 = vadd.xlane.f32.xlu0 %v2053
        %v2055 = vpop.xlane.xlu0 %2054
        %v2056 = vadd.f32 %v1656, %v1881
        %v2057 = vadd.f32 %v1662, %v1887
        %v2058 = vadd.f32 %v1668, %v1893
        %v2059 = vadd.f32 %v1674, %v1899
        %v2060 = vadd.f32 %v1680, %v1905
        %v2061 = vadd.f32 %v1686, %v1911
        %v2062 = vadd.f32 %v1692, %v1917
        %v2063 = vadd.f32 %v1698, %v1923
        %v2064 = vadd.f32 %v1704, %v1929
        %v2065 = vadd.f32 %v1710, %v1935
        %v2066 = vadd.f32 %v1716, %v1941
        %v2067 = vadd.f32 %v1722, %v1947
        %v2068 = vadd.f32 %v1728, %v1953
        %v2069 = vadd.f32 %v1734, %v1959
        %v2070 = vadd.f32 %v1740, %v1965
        %v2071 = vadd.f32 %v1746, %v1971
        %v2072 = vld [vmem:[%s29] sm:$0x1]
        %v2074 = vlaneseq
        %v2075 = vshrl.u32 %v2074, 7
        %v2076 = vsub.s32 0, %v2075
        %v2077 = vrot.slane %v2072, %v2076
        %v2079 = vmul.f32 %v2010, %v2077
        %v2080 = vmul.f32 %v2013, %v2077
        %v2081 = vmul.f32 %v2016, %v2077
        %v2082 = vmul.f32 %v2019, %v2077
        %v2083 = vmul.f32 %v2022, %v2077
        %v2084 = vmul.f32 %v2025, %v2077
        %v2085 = vmul.f32 %v2028, %v2077
        %v2086 = vmul.f32 %v2031, %v2077
        %v2087 = vmul.f32 %v2034, %v2077
        %v2088 = vmul.f32 %v2037, %v2077
        %v2089 = vmul.f32 %v2040, %v2077
        %v2090 = vmul.f32 %v2043, %v2077
        %v2091 = vmul.f32 %v2046, %v2077
        %v2092 = vmul.f32 %v2049, %v2077
        %v2093 = vmul.f32 %v2052, %v2077
        %v2094 = vmul.f32 %v2055, %v2077
        %v2095 = vadd.f32 %v2056, %v2079
        %v2096 = vadd.f32 %v2057, %v2080
        %v2097 = vadd.f32 %v2058, %v2081
        %v2098 = vadd.f32 %v2059, %v2082
        %v2099 = vadd.f32 %v2060, %v2083
        %v2100 = vadd.f32 %v2061, %v2084
        %v2101 = vadd.f32 %v2062, %v2085
        %v2102 = vadd.f32 %v2063, %v2086
        %v2103 = vadd.f32 %v2064, %v2087
        %v2104 = vadd.f32 %v2065, %v2088
        %v2105 = vadd.f32 %v2066, %v2089
        %v2106 = vadd.f32 %v2067, %v2090
        %v2107 = vadd.f32 %v2068, %v2091
        %v2108 = vadd.f32 %v2069, %v2092
        %v2109 = vadd.f32 %v2070, %v2093
        %v2110 = vadd.f32 %v2071, %v2094
        %v2111 = vld [vmem:[%s31] sm:$0x1]
        %v2113 = vlaneseq
        %v2114 = vshrl.u32 %v2113, 7
        %v2115 = vsub.s32 0, %v2114
        %v2116 = vrot.slane %v2111, %v2115
        %v2118 = vadd.f32 %v2095, %v2116
        %v2119 = vadd.f32 %v2096, %v2116
        %v2120 = vadd.f32 %v2097, %v2116
        %v2121 = vadd.f32 %v2098, %v2116
        %v2122 = vadd.f32 %v2099, %v2116
        %v2123 = vadd.f32 %v2100, %v2116
        %v2124 = vadd.f32 %v2101, %v2116
        %v2125 = vadd.f32 %v2102, %v2116
        %v2126 = vadd.f32 %v2103, %v2116
        %v2127 = vadd.f32 %v2104, %v2116
        %v2128 = vadd.f32 %v2105, %v2116
        %v2129 = vadd.f32 %v2106, %v2116
        %v2130 = vadd.f32 %v2107, %v2116
        %v2131 = vadd.f32 %v2108, %v2116
        %v2132 = vadd.f32 %v2109, %v2116
        %v2133 = vadd.f32 %v2110, %v2116
        %v2134 = vsub.f32 0.0, %v2118
        %v2135 = vsub.f32 0.0, %v2119
        %v2136 = vsub.f32 0.0, %v2120
        %v2137 = vsub.f32 0.0, %v2121
        %v2138 = vsub.f32 0.0, %v2122
        %v2139 = vsub.f32 0.0, %v2123
        %v2140 = vsub.f32 0.0, %v2124
        %v2141 = vsub.f32 0.0, %v2125
        %v2142 = vsub.f32 0.0, %v2126
        %v2143 = vsub.f32 0.0, %v2127
        %v2144 = vsub.f32 0.0, %v2128
        %v2145 = vsub.f32 0.0, %v2129
        %v2146 = vsub.f32 0.0, %v2130
        %v2147 = vsub.f32 0.0, %v2131
        %v2148 = vsub.f32 0.0, %v2132
        %v2149 = vsub.f32 0.0, %v2133
        %v2150 = vmul.f32 %v2134, 1.442695
        %v2151 = vpow.pop %v2150
        %v2152 = vmul.f32 %v2135, 1.442695
        %v2153 = vpow.pop %v2152
        %v2154 = vmul.f32 %v2136, 1.442695
        %v2155 = vpow.pop %v2154
        %v2156 = vmul.f32 %v2137, 1.442695
        %v2157 = vpow.pop %v2156
        %v2158 = vmul.f32 %v2138, 1.442695
        %v2159 = vpow.pop %v2158
        %v2160 = vmul.f32 %v2139, 1.442695
        %v2161 = vpow.pop %v2160
        %v2162 = vmul.f32 %v2140, 1.442695
        %v2163 = vpow.pop %v2162
        %v2164 = vmul.f32 %v2141, 1.442695
        %v2165 = vpow.pop %v2164
        %v2166 = vmul.f32 %v2142, 1.442695
        %v2167 = vpow.pop %v2166
        %v2168 = vmul.f32 %v2143, 1.442695
        %v2169 = vpow.pop %v2168
        %v2170 = vmul.f32 %v2144, 1.442695
        %v2171 = vpow.pop %v2170
        %v2172 = vmul.f32 %v2145, 1.442695
        %v2173 = vpow.pop %v2172
        %v2174 = vmul.f32 %v2146, 1.442695
        %v2175 = vpow.pop %v2174
        %v2176 = vmul.f32 %v2147, 1.442695
        %v2177 = vpow.pop %v2176
        %v2178 = vmul.f32 %v2148, 1.442695
        %v2179 = vpow.pop %v2178
        %v2180 = vmul.f32 %v2149, 1.442695
        %v2181 = vpow.pop %v2180
        %v2182 = vadd.f32 %v2151, 1.0
        %v2183 = vadd.f32 %v2153, 1.0
        %v2184 = vadd.f32 %v2155, 1.0
        %v2185 = vadd.f32 %v2157, 1.0
        %v2186 = vadd.f32 %v2159, 1.0
        %v2187 = vadd.f32 %v2161, 1.0
        %v2188 = vadd.f32 %v2163, 1.0
        %v2189 = vadd.f32 %v2165, 1.0
        %v2190 = vadd.f32 %v2167, 1.0
        %v2191 = vadd.f32 %v2169, 1.0
        %v2192 = vadd.f32 %v2171, 1.0
        %v2193 = vadd.f32 %v2173, 1.0
        %v2194 = vadd.f32 %v2175, 1.0
        %v2195 = vadd.f32 %v2177, 1.0
        %v2196 = vadd.f32 %v2179, 1.0
        %v2197 = vadd.f32 %v2181, 1.0
        %v2198 = vrcp.pop %v2182
        %v2199 = vmul.f32 1.0, %v2198
        %v2200 = vrcp.pop %v2183
        %v2201 = vmul.f32 1.0, %v2200
        %v2202 = vrcp.pop %v2184
        %v2203 = vmul.f32 1.0, %v2202
        %v2204 = vrcp.pop %v2185
        %v2205 = vmul.f32 1.0, %v2204
        %v2206 = vrcp.pop %v2186
        %v2207 = vmul.f32 1.0, %v2206
        %v2208 = vrcp.pop %v2187
        %v2209 = vmul.f32 1.0, %v2208
        %v2210 = vrcp.pop %v2188
        %v2211 = vmul.f32 1.0, %v2210
        %v2212 = vrcp.pop %v2189
        %v2213 = vmul.f32 1.0, %v2212
        %v2214 = vrcp.pop %v2190
        %v2215 = vmul.f32 1.0, %v2214
        %v2216 = vrcp.pop %v2191
        %v2217 = vmul.f32 1.0, %v2216
        %v2218 = vrcp.pop %v2192
        %v2219 = vmul.f32 1.0, %v2218
        %v2220 = vrcp.pop %v2193
        %v2221 = vmul.f32 1.0, %v2220
        %v2222 = vrcp.pop %v2194
        %v2223 = vmul.f32 1.0, %v2222
        %v2224 = vrcp.pop %v2195
        %v2225 = vmul.f32 1.0, %v2224
        %v2226 = vrcp.pop %v2196
        %v2227 = vmul.f32 1.0, %v2226
        %v2228 = vrcp.pop %v2197
        %v2229 = vmul.f32 1.0, %v2228
        %v2230 = vmul.f32 %v2118, %v2199
        %v2231 = vmul.f32 %v2119, %v2201
        %v2232 = vmul.f32 %v2120, %v2203
        %v2233 = vmul.f32 %v2121, %v2205
        %v2234 = vmul.f32 %v2122, %v2207
        %v2235 = vmul.f32 %v2123, %v2209
        %v2236 = vmul.f32 %v2124, %v2211
        %v2237 = vmul.f32 %v2125, %v2213
        %v2238 = vmul.f32 %v2126, %v2215
        %v2239 = vmul.f32 %v2127, %v2217
        %v2240 = vmul.f32 %v2128, %v2219
        %v2241 = vmul.f32 %v2129, %v2221
        %v2242 = vmul.f32 %v2130, %v2223
        %v2243 = vmul.f32 %v2131, %v2225
        %v2244 = vmul.f32 %v2132, %v2227
        %v2245 = vmul.f32 %v2133, %v2229
        %v2246 = vld [vmem:[%s33] sm:$0xff]
        %v2247 = vld [vmem:[%s33 + $0x8] sm:$0xff]
        %v2248 = vld [vmem:[%s33 + $0x10] sm:$0xff]
        %v2249 = vld [vmem:[%s33 + $0x18] sm:$0xff]
        %v2250 = vld [vmem:[%s33 + $0x20] sm:$0xff]
        %v2251 = vld [vmem:[%s33 + $0x28] sm:$0xff]
        %v2252 = vld [vmem:[%s33 + $0x30] sm:$0xff]
        %v2253 = vld [vmem:[%s33 + $0x38] sm:$0xff]
        %v2254 = vld [vmem:[%s33 + $0x40] sm:$0xff]
        %v2255 = vld [vmem:[%s33 + $0x48] sm:$0xff]
        %v2256 = vld [vmem:[%s33 + $0x50] sm:$0xff]
        %v2257 = vld [vmem:[%s33 + $0x58] sm:$0xff]
        %v2258 = vld [vmem:[%s33 + $0x60] sm:$0xff]
        %v2259 = vld [vmem:[%s33 + $0x68] sm:$0xff]
        %v2260 = vld [vmem:[%s33 + $0x70] sm:$0xff]
        %v2261 = vld [vmem:[%s33 + $0x78] sm:$0xff]
        %v2262 = vld [vmem:[%s35] sm:$0x1]
        %v2264 = vlaneseq
        %v2265 = vshrl.u32 %v2264, 7
        %v2266 = vsub.s32 0, %v2265
        %v2267 = vrot.slane %v2262, %v2266
        %2269 = vmatprep.subr.mxu0 0.0
        %2270 = vmatpush1.msra.mxu0 %v2261
        %2271 = vmatprep.subr.mxu0 0.0
        %2272 = vmatpush1.msra.mxu0 %v2260
        %2273 = vmatprep.subr.mxu0 0.0
        %2274 = vmatpush1.msra.mxu0 %v2259
        %2275 = vmatprep.subr.mxu0 0.0
        %2276 = vmatpush1.msra.mxu0 %v2258
        %2277 = vmatprep.subr.mxu0 0.0
        %2278 = vmatpush1.msra.mxu0 %v2257
        %2279 = vmatprep.subr.mxu0 0.0
        %2280 = vmatpush1.msra.mxu0 %v2256
        %2281 = vmatprep.subr.mxu0 0.0
        %2282 = vmatpush1.msra.mxu0 %v2255
        %2283 = vmatprep.subr.mxu0 0.0
        %2284 = vmatpush1.msra.mxu0 %v2254
        %2285 = vmatprep.subr.mxu0 0.0
        %2286 = vmatpush1.msra.mxu0 %v2253
        %2287 = vmatprep.subr.mxu0 0.0
        %2288 = vmatpush1.msra.mxu0 %v2252
        %2289 = vmatprep.subr.mxu0 0.0
        %2290 = vmatpush1.msra.mxu0 %v2251
        %2291 = vmatprep.subr.mxu0 0.0
        %2292 = vmatpush1.msra.mxu0 %v2250
        %2293 = vmatprep.subr.mxu0 0.0
        %2294 = vmatpush1.msra.mxu0 %v2249
        %2295 = vmatprep.subr.mxu0 0.0
        %2296 = vmatpush1.msra.mxu0 %v2248
        %2297 = vmatprep.subr.mxu0 0.0
        %2298 = vmatpush1.msra.mxu0 %v2247
        %2299 = vmatprep.subr.mxu0 0.0
        %2300 = vmatpush1.msra.mxu0 %v2246
        %2301 = vmatprep.subr.mxu0 0.0
        %2302 = vmatpush2.msra.mxu0 0.0
        %2303 = vmatprep.subr.mxu0 0.0
        %2304 = vmatpush2.msra.mxu0 0.0
        %2305 = vmatprep.subr.mxu0 0.0
        %2306 = vmatpush2.msra.mxu0 0.0
        %2307 = vmatprep.subr.mxu0 0.0
        %2308 = vmatpush2.msra.mxu0 0.0
        %2309 = vmatprep.subr.mxu0 0.0
        %2310 = vmatpush2.msra.mxu0 0.0
        %2311 = vmatprep.subr.mxu0 0.0
        %2312 = vmatpush2.msra.mxu0 0.0
        %2313 = vmatprep.subr.mxu0 0.0
        %2314 = vmatpush2.msra.mxu0 0.0
        %2315 = vmatprep.subr.mxu0 0.0
        %2316 = vmatpush2.msra.mxu0 0.0
        %2317 = vmatprep.subr.mxu0 0.0
        %2318 = vmatpush2.msra.mxu0 0.0
        %2319 = vmatprep.subr.mxu0 0.0
        %2320 = vmatpush2.msra.mxu0 0.0
        %2321 = vmatprep.subr.mxu0 0.0
        %2322 = vmatpush2.msra.mxu0 0.0
        %2323 = vmatprep.subr.mxu0 0.0
        %2324 = vmatpush2.msra.mxu0 0.0
        %2325 = vmatprep.subr.mxu0 0.0
        %2326 = vmatpush2.msra.mxu0 0.0
        %2327 = vmatprep.subr.mxu0 0.0
        %2328 = vmatpush2.msra.mxu0 0.0
        %2329 = vmatprep.subr.mxu0 0.0
        %2330 = vmatpush2.msra.mxu0 0.0
        %2331 = vmatprep.subr.mxu0 0.0
        %2332 = vmatpush2.msra.mxu0 0.0
        %2333 = vmatprep.mubr.f32.mxu0 0.0
        %2334 = vmatmul.mubr.f32.gmra.mxu0 %v2230
        %v2335 = vpop.f32.mrf.mxu0
        %v2336 = vadd.f32 %v2267, %v2335
        %v2337 = vpop.f32.mrf.mxu0
        %2338 = vmatprep.mubr.f32.mxu0 0.0
        %2339 = vmatmul.mubr.f32.gmra.mxu0 %v2231
        %v2340 = vpop.f32.mrf.mxu0
        %v2341 = vadd.f32 %v2267, %v2340
        %v2342 = vpop.f32.mrf.mxu0
        %2343 = vmatprep.mubr.f32.mxu0 0.0
        %2344 = vmatmul.mubr.f32.gmra.mxu0 %v2232
        %v2345 = vpop.f32.mrf.mxu0
        %v2346 = vadd.f32 %v2267, %v2345
        %v2347 = vpop.f32.mrf.mxu0
        %2348 = vmatprep.mubr.f32.mxu0 0.0
        %2349 = vmatmul.mubr.f32.gmra.mxu0 %v2233
        %v2350 = vpop.f32.mrf.mxu0
        %v2351 = vadd.f32 %v2267, %v2350
        %v2352 = vpop.f32.mrf.mxu0
        %2353 = vmatprep.mubr.f32.mxu0 0.0
        %2354 = vmatmul.mubr.f32.gmra.mxu0 %v2234
        %v2355 = vpop.f32.mrf.mxu0
        %v2356 = vadd.f32 %v2267, %v2355
        %v2357 = vpop.f32.mrf.mxu0
        %2358 = vmatprep.mubr.f32.mxu0 0.0
        %2359 = vmatmul.mubr.f32.gmra.mxu0 %v2235
        %v2360 = vpop.f32.mrf.mxu0
        %v2361 = vadd.f32 %v2267, %v2360
        %v2362 = vpop.f32.mrf.mxu0
        %2363 = vmatprep.mubr.f32.mxu0 0.0
        %2364 = vmatmul.mubr.f32.gmra.mxu0 %v2236
        %v2365 = vpop.f32.mrf.mxu0
        %v2366 = vadd.f32 %v2267, %v2365
        %v2367 = vpop.f32.mrf.mxu0
        %2368 = vmatprep.mubr.f32.mxu0 0.0
        %2369 = vmatmul.mubr.f32.gmra.mxu0 %v2237
        %v2370 = vpop.f32.mrf.mxu0
        %v2371 = vadd.f32 %v2267, %v2370
        %v2372 = vpop.f32.mrf.mxu0
        %2373 = vmatprep.mubr.f32.mxu0 0.0
        %2374 = vmatmul.mubr.f32.gmra.mxu0 %v2238
        %v2375 = vpop.f32.mrf.mxu0
        %v2376 = vadd.f32 %v2267, %v2375
        %v2377 = vpop.f32.mrf.mxu0
        %2378 = vmatprep.mubr.f32.mxu0 0.0
        %2379 = vmatmul.mubr.f32.gmra.mxu0 %v2239
        %v2380 = vpop.f32.mrf.mxu0
        %v2381 = vadd.f32 %v2267, %v2380
        %v2382 = vpop.f32.mrf.mxu0
        %2383 = vmatprep.mubr.f32.mxu0 0.0
        %2384 = vmatmul.mubr.f32.gmra.mxu0 %v2240
        %v2385 = vpop.f32.mrf.mxu0
        %v2386 = vadd.f32 %v2267, %v2385
        %v2387 = vpop.f32.mrf.mxu0
        %2388 = vmatprep.mubr.f32.mxu0 0.0
        %2389 = vmatmul.mubr.f32.gmra.mxu0 %v2241
        %v2390 = vpop.f32.mrf.mxu0
        %v2391 = vadd.f32 %v2267, %v2390
        %v2392 = vpop.f32.mrf.mxu0
        %2393 = vmatprep.mubr.f32.mxu0 0.0
        %2394 = vmatmul.mubr.f32.gmra.mxu0 %v2242
        %v2395 = vpop.f32.mrf.mxu0
        %v2396 = vadd.f32 %v2267, %v2395
        %v2397 = vpop.f32.mrf.mxu0
        %2398 = vmatprep.mubr.f32.mxu0 0.0
        %2399 = vmatmul.mubr.f32.gmra.mxu0 %v2243
        %v2400 = vpop.f32.mrf.mxu0
        %v2401 = vadd.f32 %v2267, %v2400
        %v2402 = vpop.f32.mrf.mxu0
        %2403 = vmatprep.mubr.f32.mxu0 0.0
        %2404 = vmatmul.mubr.f32.gmra.mxu0 %v2244
        %v2405 = vpop.f32.mrf.mxu0
        %v2406 = vadd.f32 %v2267, %v2405
        %v2407 = vpop.f32.mrf.mxu0
        %2408 = vmatprep.mubr.f32.mxu0 0.0
        %2409 = vmatmul.mubr.f32.gmra.mxu0 %v2245
        %v2410 = vpop.f32.mrf.mxu0
        %v2411 = vadd.f32 %v2267, %v2410
        %v2412 = vpop.f32.mrf.mxu0
        %2413 = vdwg.mxu0
        %v2414 = vsub.f32 0.0, %v2336
        %v2415 = vsub.f32 0.0, %v2341
        %v2416 = vsub.f32 0.0, %v2346
        %v2417 = vsub.f32 0.0, %v2351
        %v2418 = vsub.f32 0.0, %v2356
        %v2419 = vsub.f32 0.0, %v2361
        %v2420 = vsub.f32 0.0, %v2366
        %v2421 = vsub.f32 0.0, %v2371
        %v2422 = vsub.f32 0.0, %v2376
        %v2423 = vsub.f32 0.0, %v2381
        %v2424 = vsub.f32 0.0, %v2386
        %v2425 = vsub.f32 0.0, %v2391
        %v2426 = vsub.f32 0.0, %v2396
        %v2427 = vsub.f32 0.0, %v2401
        %v2428 = vsub.f32 0.0, %v2406
        %v2429 = vsub.f32 0.0, %v2411
        %v2430 = vmul.f32 %v2414, 1.442695
        %v2431 = vpow.pop %v2430
        %v2432 = vmul.f32 %v2415, 1.442695
        %v2433 = vpow.pop %v2432
        %v2434 = vmul.f32 %v2416, 1.442695
        %v2435 = vpow.pop %v2434
        %v2436 = vmul.f32 %v2417, 1.442695
        %v2437 = vpow.pop %v2436
        %v2438 = vmul.f32 %v2418, 1.442695
        %v2439 = vpow.pop %v2438
        %v2440 = vmul.f32 %v2419, 1.442695
        %v2441 = vpow.pop %v2440
        %v2442 = vmul.f32 %v2420, 1.442695
        %v2443 = vpow.pop %v2442
        %v2444 = vmul.f32 %v2421, 1.442695
        %v2445 = vpow.pop %v2444
        %v2446 = vmul.f32 %v2422, 1.442695
        %v2447 = vpow.pop %v2446
        %v2448 = vmul.f32 %v2423, 1.442695
        %v2449 = vpow.pop %v2448
        %v2450 = vmul.f32 %v2424, 1.442695
        %v2451 = vpow.pop %v2450
        %v2452 = vmul.f32 %v2425, 1.442695
        %v2453 = vpow.pop %v2452
        %v2454 = vmul.f32 %v2426, 1.442695
        %v2455 = vpow.pop %v2454
        %v2456 = vmul.f32 %v2427, 1.442695
        %v2457 = vpow.pop %v2456
        %v2458 = vmul.f32 %v2428, 1.442695
        %v2459 = vpow.pop %v2458
        %v2460 = vmul.f32 %v2429, 1.442695
        %v2461 = vpow.pop %v2460
        %v2462 = vadd.f32 %v2431, 1.0
        %v2463 = vadd.f32 %v2433, 1.0
        %v2464 = vadd.f32 %v2435, 1.0
        %v2465 = vadd.f32 %v2437, 1.0
        %v2466 = vadd.f32 %v2439, 1.0
        %v2467 = vadd.f32 %v2441, 1.0
        %v2468 = vadd.f32 %v2443, 1.0
        %v2469 = vadd.f32 %v2445, 1.0
        %v2470 = vadd.f32 %v2447, 1.0
        %v2471 = vadd.f32 %v2449, 1.0
        %v2472 = vadd.f32 %v2451, 1.0
        %v2473 = vadd.f32 %v2453, 1.0
        %v2474 = vadd.f32 %v2455, 1.0
        %v2475 = vadd.f32 %v2457, 1.0
        %v2476 = vadd.f32 %v2459, 1.0
        %v2477 = vadd.f32 %v2461, 1.0
        %v2478 = vrcp.pop %v2462
        %v2479 = vmul.f32 1.0, %v2478
        %v2480 = vrcp.pop %v2463
        %v2481 = vmul.f32 1.0, %v2480
        %v2482 = vrcp.pop %v2464
        %v2483 = vmul.f32 1.0, %v2482
        %v2484 = vrcp.pop %v2465
        %v2485 = vmul.f32 1.0, %v2484
        %v2486 = vrcp.pop %v2466
        %v2487 = vmul.f32 1.0, %v2486
        %v2488 = vrcp.pop %v2467
        %v2489 = vmul.f32 1.0, %v2488
        %v2490 = vrcp.pop %v2468
        %v2491 = vmul.f32 1.0, %v2490
        %v2492 = vrcp.pop %v2469
        %v2493 = vmul.f32 1.0, %v2492
        %v2494 = vrcp.pop %v2470
        %v2495 = vmul.f32 1.0, %v2494
        %v2496 = vrcp.pop %v2471
        %v2497 = vmul.f32 1.0, %v2496
        %v2498 = vrcp.pop %v2472
        %v2499 = vmul.f32 1.0, %v2498
        %v2500 = vrcp.pop %v2473
        %v2501 = vmul.f32 1.0, %v2500
        %v2502 = vrcp.pop %v2474
        %v2503 = vmul.f32 1.0, %v2502
        %v2504 = vrcp.pop %v2475
        %v2505 = vmul.f32 1.0, %v2504
        %v2506 = vrcp.pop %v2476
        %v2507 = vmul.f32 1.0, %v2506
        %v2508 = vrcp.pop %v2477
        %v2509 = vmul.f32 1.0, %v2508
        %v2510 = vmul.f32 %v2336, %v2479
        %v2511 = vmul.f32 %v2341, %v2481
        %v2512 = vmul.f32 %v2346, %v2483
        %v2513 = vmul.f32 %v2351, %v2485
        %v2514 = vmul.f32 %v2356, %v2487
        %v2515 = vmul.f32 %v2361, %v2489
        %v2516 = vmul.f32 %v2366, %v2491
        %v2517 = vmul.f32 %v2371, %v2493
        %v2518 = vmul.f32 %v2376, %v2495
        %v2519 = vmul.f32 %v2381, %v2497
        %v2520 = vmul.f32 %v2386, %v2499
        %v2521 = vmul.f32 %v2391, %v2501
        %v2522 = vmul.f32 %v2396, %v2503
        %v2523 = vmul.f32 %v2401, %v2505
        %v2524 = vmul.f32 %v2406, %v2507
        %v2525 = vmul.f32 %v2411, %v2509
        %v2526 = vld [vmem:[%s37] sm:$0xff]
        %v2527 = vld [vmem:[%s37 + $0x8] sm:$0xff]
        %v2528 = vld [vmem:[%s37 + $0x10] sm:$0xff]
        %v2529 = vld [vmem:[%s37 + $0x18] sm:$0xff]
        %v2530 = vld [vmem:[%s37 + $0x20] sm:$0xff]
        %v2531 = vld [vmem:[%s37 + $0x28] sm:$0xff]
        %v2532 = vld [vmem:[%s37 + $0x30] sm:$0xff]
        %v2533 = vld [vmem:[%s37 + $0x38] sm:$0xff]
        %v2534 = vld [vmem:[%s37 + $0x40] sm:$0xff]
        %v2535 = vld [vmem:[%s37 + $0x48] sm:$0xff]
        %v2536 = vld [vmem:[%s37 + $0x50] sm:$0xff]
        %v2537 = vld [vmem:[%s37 + $0x58] sm:$0xff]
        %v2538 = vld [vmem:[%s37 + $0x60] sm:$0xff]
        %v2539 = vld [vmem:[%s37 + $0x68] sm:$0xff]
        %v2540 = vld [vmem:[%s37 + $0x70] sm:$0xff]
        %v2541 = vld [vmem:[%s37 + $0x78] sm:$0xff]
        %v2542 = vld [vmem:[%s39] sm:$0x1]
        %v2544 = vlaneseq
        %v2545 = vshrl.u32 %v2544, 7
        %v2546 = vsub.s32 0, %v2545
        %v2547 = vrot.slane %v2542, %v2546
        %2549 = vmatprep.subr.mxu0 0.0
        %2550 = vmatpush1.msra.mxu0 %v2541
        %2551 = vmatprep.subr.mxu0 0.0
        %2552 = vmatpush1.msra.mxu0 %v2540
        %2553 = vmatprep.subr.mxu0 0.0
        %2554 = vmatpush1.msra.mxu0 %v2539
        %2555 = vmatprep.subr.mxu0 0.0
        %2556 = vmatpush1.msra.mxu0 %v2538
        %2557 = vmatprep.subr.mxu0 0.0
        %2558 = vmatpush1.msra.mxu0 %v2537
        %2559 = vmatprep.subr.mxu0 0.0
        %2560 = vmatpush1.msra.mxu0 %v2536
        %2561 = vmatprep.subr.mxu0 0.0
        %2562 = vmatpush1.msra.mxu0 %v2535
        %2563 = vmatprep.subr.mxu0 0.0
        %2564 = vmatpush1.msra.mxu0 %v2534
        %2565 = vmatprep.subr.mxu0 0.0
        %2566 = vmatpush1.msra.mxu0 %v2533
        %2567 = vmatprep.subr.mxu0 0.0
        %2568 = vmatpush1.msra.mxu0 %v2532
        %2569 = vmatprep.subr.mxu0 0.0
        %2570 = vmatpush1.msra.mxu0 %v2531
        %2571 = vmatprep.subr.mxu0 0.0
        %2572 = vmatpush1.msra.mxu0 %v2530
        %2573 = vmatprep.subr.mxu0 0.0
        %2574 = vmatpush1.msra.mxu0 %v2529
        %2575 = vmatprep.subr.mxu0 0.0
        %2576 = vmatpush1.msra.mxu0 %v2528
        %2577 = vmatprep.subr.mxu0 0.0
        %2578 = vmatpush1.msra.mxu0 %v2527
        %2579 = vmatprep.subr.mxu0 0.0
        %2580 = vmatpush1.msra.mxu0 %v2526
        %2581 = vmatprep.subr.mxu0 0.0
        %2582 = vmatpush2.msra.mxu0 0.0
        %2583 = vmatprep.subr.mxu0 0.0
        %2584 = vmatpush2.msra.mxu0 0.0
        %2585 = vmatprep.subr.mxu0 0.0
        %2586 = vmatpush2.msra.mxu0 0.0
        %2587 = vmatprep.subr.mxu0 0.0
        %2588 = vmatpush2.msra.mxu0 0.0
        %2589 = vmatprep.subr.mxu0 0.0
        %2590 = vmatpush2.msra.mxu0 0.0
        %2591 = vmatprep.subr.mxu0 0.0
        %2592 = vmatpush2.msra.mxu0 0.0
        %2593 = vmatprep.subr.mxu0 0.0
        %2594 = vmatpush2.msra.mxu0 0.0
        %2595 = vmatprep.subr.mxu0 0.0
        %2596 = vmatpush2.msra.mxu0 0.0
        %2597 = vmatprep.subr.mxu0 0.0
        %2598 = vmatpush2.msra.mxu0 0.0
        %2599 = vmatprep.subr.mxu0 0.0
        %2600 = vmatpush2.msra.mxu0 0.0
        %2601 = vmatprep.subr.mxu0 0.0
        %2602 = vmatpush2.msra.mxu0 0.0
        %2603 = vmatprep.subr.mxu0 0.0
        %2604 = vmatpush2.msra.mxu0 0.0
        %2605 = vmatprep.subr.mxu0 0.0
        %2606 = vmatpush2.msra.mxu0 0.0
        %2607 = vmatprep.subr.mxu0 0.0
        %2608 = vmatpush2.msra.mxu0 0.0
        %2609 = vmatprep.subr.mxu0 0.0
        %2610 = vmatpush2.msra.mxu0 0.0
        %2611 = vmatprep.subr.mxu0 0.0
        %2612 = vmatpush2.msra.mxu0 0.0
        %2613 = vmatprep.mubr.f32.mxu0 0.0
        %2614 = vmatmul.mubr.f32.gmra.mxu0 %v2510
        %v2615 = vpop.f32.mrf.mxu0
        %v2616 = vadd.f32 %v2547, %v2615
        %v2617 = vpop.f32.mrf.mxu0
        %2618 = vmatprep.mubr.f32.mxu0 0.0
        %2619 = vmatmul.mubr.f32.gmra.mxu0 %v2511
        %v2620 = vpop.f32.mrf.mxu0
        %v2621 = vadd.f32 %v2547, %v2620
        %v2622 = vpop.f32.mrf.mxu0
        %2623 = vmatprep.mubr.f32.mxu0 0.0
        %2624 = vmatmul.mubr.f32.gmra.mxu0 %v2512
        %v2625 = vpop.f32.mrf.mxu0
        %v2626 = vadd.f32 %v2547, %v2625
        %v2627 = vpop.f32.mrf.mxu0
        %2628 = vmatprep.mubr.f32.mxu0 0.0
        %2629 = vmatmul.mubr.f32.gmra.mxu0 %v2513
        %v2630 = vpop.f32.mrf.mxu0
        %v2631 = vadd.f32 %v2547, %v2630
        %v2632 = vpop.f32.mrf.mxu0
        %2633 = vmatprep.mubr.f32.mxu0 0.0
        %2634 = vmatmul.mubr.f32.gmra.mxu0 %v2514
        %v2635 = vpop.f32.mrf.mxu0
        %v2636 = vadd.f32 %v2547, %v2635
        %v2637 = vpop.f32.mrf.mxu0
        %2638 = vmatprep.mubr.f32.mxu0 0.0
        %2639 = vmatmul.mubr.f32.gmra.mxu0 %v2515
        %v2640 = vpop.f32.mrf.mxu0
        %v2641 = vadd.f32 %v2547, %v2640
        %v2642 = vpop.f32.mrf.mxu0
        %2643 = vmatprep.mubr.f32.mxu0 0.0
        %2644 = vmatmul.mubr.f32.gmra.mxu0 %v2516
        %v2645 = vpop.f32.mrf.mxu0
        %v2646 = vadd.f32 %v2547, %v2645
        %v2647 = vpop.f32.mrf.mxu0
        %2648 = vmatprep.mubr.f32.mxu0 0.0
        %2649 = vmatmul.mubr.f32.gmra.mxu0 %v2517
        %v2650 = vpop.f32.mrf.mxu0
        %v2651 = vadd.f32 %v2547, %v2650
        %v2652 = vpop.f32.mrf.mxu0
        %2653 = vmatprep.mubr.f32.mxu0 0.0
        %2654 = vmatmul.mubr.f32.gmra.mxu0 %v2518
        %v2655 = vpop.f32.mrf.mxu0
        %v2656 = vadd.f32 %v2547, %v2655
        %v2657 = vpop.f32.mrf.mxu0
        %2658 = vmatprep.mubr.f32.mxu0 0.0
        %2659 = vmatmul.mubr.f32.gmra.mxu0 %v2519
        %v2660 = vpop.f32.mrf.mxu0
        %v2661 = vadd.f32 %v2547, %v2660
        %v2662 = vpop.f32.mrf.mxu0
        %2663 = vmatprep.mubr.f32.mxu0 0.0
        %2664 = vmatmul.mubr.f32.gmra.mxu0 %v2520
        %v2665 = vpop.f32.mrf.mxu0
        %v2666 = vadd.f32 %v2547, %v2665
        %v2667 = vpop.f32.mrf.mxu0
        %2668 = vmatprep.mubr.f32.mxu0 0.0
        %2669 = vmatmul.mubr.f32.gmra.mxu0 %v2521
        %v2670 = vpop.f32.mrf.mxu0
        %v2671 = vadd.f32 %v2547, %v2670
        %v2672 = vpop.f32.mrf.mxu0
        %2673 = vmatprep.mubr.f32.mxu0 0.0
        %2674 = vmatmul.mubr.f32.gmra.mxu0 %v2522
        %v2675 = vpop.f32.mrf.mxu0
        %v2676 = vadd.f32 %v2547, %v2675
        %v2677 = vpop.f32.mrf.mxu0
        %2678 = vmatprep.mubr.f32.mxu0 0.0
        %2679 = vmatmul.mubr.f32.gmra.mxu0 %v2523
        %v2680 = vpop.f32.mrf.mxu0
        %v2681 = vadd.f32 %v2547, %v2680
        %v2682 = vpop.f32.mrf.mxu0
        %2683 = vmatprep.mubr.f32.mxu0 0.0
        %2684 = vmatmul.mubr.f32.gmra.mxu0 %v2524
        %v2685 = vpop.f32.mrf.mxu0
        %v2686 = vadd.f32 %v2547, %v2685
        %v2687 = vpop.f32.mrf.mxu0
        %2688 = vmatprep.mubr.f32.mxu0 0.0
        %2689 = vmatmul.mubr.f32.gmra.mxu0 %v2525
        %v2690 = vpop.f32.mrf.mxu0
        %v2691 = vadd.f32 %v2547, %v2690
        %v2692 = vpop.f32.mrf.mxu0
        %2693 = vdwg.mxu0
        %v2694 = vsub.f32 0.0, %v2616
        %v2695 = vsub.f32 0.0, %v2621
        %v2696 = vsub.f32 0.0, %v2626
        %v2697 = vsub.f32 0.0, %v2631
        %v2698 = vsub.f32 0.0, %v2636
        %v2699 = vsub.f32 0.0, %v2641
        %v2700 = vsub.f32 0.0, %v2646
        %v2701 = vsub.f32 0.0, %v2651
        %v2702 = vsub.f32 0.0, %v2656
        %v2703 = vsub.f32 0.0, %v2661
        %v2704 = vsub.f32 0.0, %v2666
        %v2705 = vsub.f32 0.0, %v2671
        %v2706 = vsub.f32 0.0, %v2676
        %v2707 = vsub.f32 0.0, %v2681
        %v2708 = vsub.f32 0.0, %v2686
        %v2709 = vsub.f32 0.0, %v2691
        %v2710 = vmul.f32 %v2694, 1.442695
        %v2711 = vpow.pop %v2710
        %v2712 = vmul.f32 %v2695, 1.442695
        %v2713 = vpow.pop %v2712
        %v2714 = vmul.f32 %v2696, 1.442695
        %v2715 = vpow.pop %v2714
        %v2716 = vmul.f32 %v2697, 1.442695
        %v2717 = vpow.pop %v2716
        %v2718 = vmul.f32 %v2698, 1.442695
        %v2719 = vpow.pop %v2718
        %v2720 = vmul.f32 %v2699, 1.442695
        %v2721 = vpow.pop %v2720
        %v2722 = vmul.f32 %v2700, 1.442695
        %v2723 = vpow.pop %v2722
        %v2724 = vmul.f32 %v2701, 1.442695
        %v2725 = vpow.pop %v2724
        %v2726 = vmul.f32 %v2702, 1.442695
        %v2727 = vpow.pop %v2726
        %v2728 = vmul.f32 %v2703, 1.442695
        %v2729 = vpow.pop %v2728
        %v2730 = vmul.f32 %v2704, 1.442695
        %v2731 = vpow.pop %v2730
        %v2732 = vmul.f32 %v2705, 1.442695
        %v2733 = vpow.pop %v2732
        %v2734 = vmul.f32 %v2706, 1.442695
        %v2735 = vpow.pop %v2734
        %v2736 = vmul.f32 %v2707, 1.442695
        %v2737 = vpow.pop %v2736
        %v2738 = vmul.f32 %v2708, 1.442695
        %v2739 = vpow.pop %v2738
        %v2740 = vmul.f32 %v2709, 1.442695
        %v2741 = vpow.pop %v2740
        %v2742 = vadd.f32 %v2711, 1.0
        %v2743 = vadd.f32 %v2713, 1.0
        %v2744 = vadd.f32 %v2715, 1.0
        %v2745 = vadd.f32 %v2717, 1.0
        %v2746 = vadd.f32 %v2719, 1.0
        %v2747 = vadd.f32 %v2721, 1.0
        %v2748 = vadd.f32 %v2723, 1.0
        %v2749 = vadd.f32 %v2725, 1.0
        %v2750 = vadd.f32 %v2727, 1.0
        %v2751 = vadd.f32 %v2729, 1.0
        %v2752 = vadd.f32 %v2731, 1.0
        %v2753 = vadd.f32 %v2733, 1.0
        %v2754 = vadd.f32 %v2735, 1.0
        %v2755 = vadd.f32 %v2737, 1.0
        %v2756 = vadd.f32 %v2739, 1.0
        %v2757 = vadd.f32 %v2741, 1.0
        %v2758 = vrcp.pop %v2742
        %v2759 = vmul.f32 1.0, %v2758
        %v2760 = vrcp.pop %v2743
        %v2761 = vmul.f32 1.0, %v2760
        %v2762 = vrcp.pop %v2744
        %v2763 = vmul.f32 1.0, %v2762
        %v2764 = vrcp.pop %v2745
        %v2765 = vmul.f32 1.0, %v2764
        %v2766 = vrcp.pop %v2746
        %v2767 = vmul.f32 1.0, %v2766
        %v2768 = vrcp.pop %v2747
        %v2769 = vmul.f32 1.0, %v2768
        %v2770 = vrcp.pop %v2748
        %v2771 = vmul.f32 1.0, %v2770
        %v2772 = vrcp.pop %v2749
        %v2773 = vmul.f32 1.0, %v2772
        %v2774 = vrcp.pop %v2750
        %v2775 = vmul.f32 1.0, %v2774
        %v2776 = vrcp.pop %v2751
        %v2777 = vmul.f32 1.0, %v2776
        %v2778 = vrcp.pop %v2752
        %v2779 = vmul.f32 1.0, %v2778
        %v2780 = vrcp.pop %v2753
        %v2781 = vmul.f32 1.0, %v2780
        %v2782 = vrcp.pop %v2754
        %v2783 = vmul.f32 1.0, %v2782
        %v2784 = vrcp.pop %v2755
        %v2785 = vmul.f32 1.0, %v2784
        %v2786 = vrcp.pop %v2756
        %v2787 = vmul.f32 1.0, %v2786
        %v2788 = vrcp.pop %v2757
        %v2789 = vmul.f32 1.0, %v2788
        %v2790 = vmul.f32 %v2616, %v2759
        %v2791 = vmul.f32 %v2621, %v2761
        %v2792 = vmul.f32 %v2626, %v2763
        %v2793 = vmul.f32 %v2631, %v2765
        %v2794 = vmul.f32 %v2636, %v2767
        %v2795 = vmul.f32 %v2641, %v2769
        %v2796 = vmul.f32 %v2646, %v2771
        %v2797 = vmul.f32 %v2651, %v2773
        %v2798 = vmul.f32 %v2656, %v2775
        %v2799 = vmul.f32 %v2661, %v2777
        %v2800 = vmul.f32 %v2666, %v2779
        %v2801 = vmul.f32 %v2671, %v2781
        %v2802 = vmul.f32 %v2676, %v2783
        %v2803 = vmul.f32 %v2681, %v2785
        %v2804 = vmul.f32 %v2686, %v2787
        %v2805 = vmul.f32 %v2691, %v2789
        %v2806 = vld [vmem:[%s41] sm:$0xff]
        %v2807 = vld [vmem:[%s41 + $0x8] sm:$0xff]
        %v2808 = vld [vmem:[%s41 + $0x10] sm:$0xff]
        %v2809 = vld [vmem:[%s41 + $0x18] sm:$0xff]
        %v2810 = vld [vmem:[%s41 + $0x20] sm:$0xff]
        %v2811 = vld [vmem:[%s41 + $0x28] sm:$0xff]
        %v2812 = vld [vmem:[%s41 + $0x30] sm:$0xff]
        %v2813 = vld [vmem:[%s41 + $0x38] sm:$0xff]
        %v2814 = vld [vmem:[%s41 + $0x40] sm:$0xff]
        %v2815 = vld [vmem:[%s41 + $0x48] sm:$0xff]
        %v2816 = vld [vmem:[%s41 + $0x50] sm:$0xff]
        %v2817 = vld [vmem:[%s41 + $0x58] sm:$0xff]
        %v2818 = vld [vmem:[%s41 + $0x60] sm:$0xff]
        %v2819 = vld [vmem:[%s41 + $0x68] sm:$0xff]
        %v2820 = vld [vmem:[%s41 + $0x70] sm:$0xff]
        %v2821 = vld [vmem:[%s41 + $0x78] sm:$0xff]
        %2822 = vmatprep.subr.mxu0 0.0
        %2823 = vmatpush1.msra.mxu0 %v2821
        %2824 = vmatprep.subr.mxu0 0.0
        %2825 = vmatpush1.msra.mxu0 %v2820
        %2826 = vmatprep.subr.mxu0 0.0
        %2827 = vmatpush1.msra.mxu0 %v2819
        %2828 = vmatprep.subr.mxu0 0.0
        %2829 = vmatpush1.msra.mxu0 %v2818
        %2830 = vmatprep.subr.mxu0 0.0
        %2831 = vmatpush1.msra.mxu0 %v2817
        %2832 = vmatprep.subr.mxu0 0.0
        %2833 = vmatpush1.msra.mxu0 %v2816
        %2834 = vmatprep.subr.mxu0 0.0
        %2835 = vmatpush1.msra.mxu0 %v2815
        %2836 = vmatprep.subr.mxu0 0.0
        %2837 = vmatpush1.msra.mxu0 %v2814
        %2838 = vmatprep.subr.mxu0 0.0
        %2839 = vmatpush1.msra.mxu0 %v2813
        %2840 = vmatprep.subr.mxu0 0.0
        %2841 = vmatpush1.msra.mxu0 %v2812
        %2842 = vmatprep.subr.mxu0 0.0
        %2843 = vmatpush1.msra.mxu0 %v2811
        %2844 = vmatprep.subr.mxu0 0.0
        %2845 = vmatpush1.msra.mxu0 %v2810
        %2846 = vmatprep.subr.mxu0 0.0
        %2847 = vmatpush1.msra.mxu0 %v2809
        %2848 = vmatprep.subr.mxu0 0.0
        %2849 = vmatpush1.msra.mxu0 %v2808
        %2850 = vmatprep.subr.mxu0 0.0
        %2851 = vmatpush1.msra.mxu0 %v2807
        %2852 = vmatprep.subr.mxu0 0.0
        %2853 = vmatpush1.msra.mxu0 %v2806
        %2854 = vmatprep.subr.mxu0 0.0
        %2855 = vmatpush2.msra.mxu0 0.0
        %2856 = vmatprep.subr.mxu0 0.0
        %2857 = vmatpush2.msra.mxu0 0.0
        %2858 = vmatprep.subr.mxu0 0.0
        %2859 = vmatpush2.msra.mxu0 0.0
        %2860 = vmatprep.subr.mxu0 0.0
        %2861 = vmatpush2.msra.mxu0 0.0
        %2862 = vmatprep.subr.mxu0 0.0
        %2863 = vmatpush2.msra.mxu0 0.0
        %2864 = vmatprep.subr.mxu0 0.0
        %2865 = vmatpush2.msra.mxu0 0.0
        %2866 = vmatprep.subr.mxu0 0.0
        %2867 = vmatpush2.msra.mxu0 0.0
        %2868 = vmatprep.subr.mxu0 0.0
        %2869 = vmatpush2.msra.mxu0 0.0
        %2870 = vmatprep.subr.mxu0 0.0
        %2871 = vmatpush2.msra.mxu0 0.0
        %2872 = vmatprep.subr.mxu0 0.0
        %2873 = vmatpush2.msra.mxu0 0.0
        %2874 = vmatprep.subr.mxu0 0.0
        %2875 = vmatpush2.msra.mxu0 0.0
        %2876 = vmatprep.subr.mxu0 0.0
        %2877 = vmatpush2.msra.mxu0 0.0
        %2878 = vmatprep.subr.mxu0 0.0
        %2879 = vmatpush2.msra.mxu0 0.0
        %2880 = vmatprep.subr.mxu0 0.0
        %2881 = vmatpush2.msra.mxu0 0.0
        %2882 = vmatprep.subr.mxu0 0.0
        %2883 = vmatpush2.msra.mxu0 0.0
        %2884 = vmatprep.subr.mxu0 0.0
        %2885 = vmatpush2.msra.mxu0 0.0
        %2886 = vmatprep.mubr.f32.mxu0 0.0
        %2887 = vmatmul.mubr.f32.gmra.mxu0 %v2790
        %v2888 = vpop.f32.mrf.mxu0
        %v2889 = vadd.f32 0.0, %v2888
        %v2890 = vpop.f32.mrf.mxu0
        %2891 = vmatprep.mubr.f32.mxu0 0.0
        %2892 = vmatmul.mubr.f32.gmra.mxu0 %v2791
        %v2893 = vpop.f32.mrf.mxu0
        %v2894 = vadd.f32 0.0, %v2893
        %v2895 = vpop.f32.mrf.mxu0
        %2896 = vmatprep.mubr.f32.mxu0 0.0
        %2897 = vmatmul.mubr.f32.gmra.mxu0 %v2792
        %v2898 = vpop.f32.mrf.mxu0
        %v2899 = vadd.f32 0.0, %v2898
        %v2900 = vpop.f32.mrf.mxu0
        %2901 = vmatprep.mubr.f32.mxu0 0.0
        %2902 = vmatmul.mubr.f32.gmra.mxu0 %v2793
        %v2903 = vpop.f32.mrf.mxu0
        %v2904 = vadd.f32 0.0, %v2903
        %v2905 = vpop.f32.mrf.mxu0
        %2906 = vmatprep.mubr.f32.mxu0 0.0
        %2907 = vmatmul.mubr.f32.gmra.mxu0 %v2794
        %v2908 = vpop.f32.mrf.mxu0
        %v2909 = vadd.f32 0.0, %v2908
        %v2910 = vpop.f32.mrf.mxu0
        %2911 = vmatprep.mubr.f32.mxu0 0.0
        %2912 = vmatmul.mubr.f32.gmra.mxu0 %v2795
        %v2913 = vpop.f32.mrf.mxu0
        %v2914 = vadd.f32 0.0, %v2913
        %v2915 = vpop.f32.mrf.mxu0
        %2916 = vmatprep.mubr.f32.mxu0 0.0
        %2917 = vmatmul.mubr.f32.gmra.mxu0 %v2796
        %v2918 = vpop.f32.mrf.mxu0
        %v2919 = vadd.f32 0.0, %v2918
        %v2920 = vpop.f32.mrf.mxu0
        %2921 = vmatprep.mubr.f32.mxu0 0.0
        %2922 = vmatmul.mubr.f32.gmra.mxu0 %v2797
        %v2923 = vpop.f32.mrf.mxu0
        %v2924 = vadd.f32 0.0, %v2923
        %v2925 = vpop.f32.mrf.mxu0
        %2926 = vmatprep.mubr.f32.mxu0 0.0
        %2927 = vmatmul.mubr.f32.gmra.mxu0 %v2798
        %v2928 = vpop.f32.mrf.mxu0
        %v2929 = vadd.f32 0.0, %v2928
        %v2930 = vpop.f32.mrf.mxu0
        %2931 = vmatprep.mubr.f32.mxu0 0.0
        %2932 = vmatmul.mubr.f32.gmra.mxu0 %v2799
        %v2933 = vpop.f32.mrf.mxu0
        %v2934 = vadd.f32 0.0, %v2933
        %v2935 = vpop.f32.mrf.mxu0
        %2936 = vmatprep.mubr.f32.mxu0 0.0
        %2937 = vmatmul.mubr.f32.gmra.mxu0 %v2800
        %v2938 = vpop.f32.mrf.mxu0
        %v2939 = vadd.f32 0.0, %v2938
        %v2940 = vpop.f32.mrf.mxu0
        %2941 = vmatprep.mubr.f32.mxu0 0.0
        %2942 = vmatmul.mubr.f32.gmra.mxu0 %v2801
        %v2943 = vpop.f32.mrf.mxu0
        %v2944 = vadd.f32 0.0, %v2943
        %v2945 = vpop.f32.mrf.mxu0
        %2946 = vmatprep.mubr.f32.mxu0 0.0
        %2947 = vmatmul.mubr.f32.gmra.mxu0 %v2802
        %v2948 = vpop.f32.mrf.mxu0
        %v2949 = vadd.f32 0.0, %v2948
        %v2950 = vpop.f32.mrf.mxu0
        %2951 = vmatprep.mubr.f32.mxu0 0.0
        %2952 = vmatmul.mubr.f32.gmra.mxu0 %v2803
        %v2953 = vpop.f32.mrf.mxu0
        %v2954 = vadd.f32 0.0, %v2953
        %v2955 = vpop.f32.mrf.mxu0
        %2956 = vmatprep.mubr.f32.mxu0 0.0
        %2957 = vmatmul.mubr.f32.gmra.mxu0 %v2804
        %v2958 = vpop.f32.mrf.mxu0
        %v2959 = vadd.f32 0.0, %v2958
        %v2960 = vpop.f32.mrf.mxu0
        %2961 = vmatprep.mubr.f32.mxu0 0.0
        %2962 = vmatmul.mubr.f32.gmra.mxu0 %v2805
        %v2963 = vpop.f32.mrf.mxu0
        %v2964 = vadd.f32 0.0, %v2963
        %v2965 = vpop.f32.mrf.mxu0
        %2966 = vdwg.mxu0
        %2968 = vset.pattern.permute.xlu0 0
        %2969 = vperm.xlu0 %2968, %v2889
        %v2970 = vpop.permute.xlu0 %2969
        %2973 = vset.pattern.permute.xlu0 0
        %2974 = vperm.xlu0 %2973, %v2894
        %v2975 = vpop.permute.xlu0 %2974
        %2978 = vset.pattern.permute.xlu0 0
        %2979 = vperm.xlu0 %2978, %v2899
        %v2980 = vpop.permute.xlu0 %2979
        %2983 = vset.pattern.permute.xlu0 0
        %2984 = vperm.xlu0 %2983, %v2904
        %v2985 = vpop.permute.xlu0 %2984
        %2988 = vset.pattern.permute.xlu0 0
        %2989 = vperm.xlu0 %2988, %v2909
        %v2990 = vpop.permute.xlu0 %2989
        %2993 = vset.pattern.permute.xlu0 0
        %2994 = vperm.xlu0 %2993, %v2914
        %v2995 = vpop.permute.xlu0 %2994
        %2998 = vset.pattern.permute.xlu0 0
        %2999 = vperm.xlu0 %2998, %v2919
        %v3000 = vpop.permute.xlu0 %2999
        %3003 = vset.pattern.permute.xlu0 0
        %3004 = vperm.xlu0 %3003, %v2924
        %v3005 = vpop.permute.xlu0 %3004
        %3008 = vset.pattern.permute.xlu0 0
        %3009 = vperm.xlu0 %3008, %v2929
        %v3010 = vpop.permute.xlu0 %3009
        %3013 = vset.pattern.permute.xlu0 0
        %3014 = vperm.xlu0 %3013, %v2934
        %v3015 = vpop.permute.xlu0 %3014
        %3018 = vset.pattern.permute.xlu0 0
        %3019 = vperm.xlu0 %3018, %v2939
        %v3020 = vpop.permute.xlu0 %3019
        %3023 = vset.pattern.permute.xlu0 0
        %3024 = vperm.xlu0 %3023, %v2944
        %v3025 = vpop.permute.xlu0 %3024
        %3028 = vset.pattern.permute.xlu0 0
        %3029 = vperm.xlu0 %3028, %v2949
        %v3030 = vpop.permute.xlu0 %3029
        %3033 = vset.pattern.permute.xlu0 0
        %3034 = vperm.xlu0 %3033, %v2954
        %v3035 = vpop.permute.xlu0 %3034
        %3038 = vset.pattern.permute.xlu0 0
        %3039 = vperm.xlu0 %3038, %v2959
        %v3040 = vpop.permute.xlu0 %3039
        %3043 = vset.pattern.permute.xlu0 0
        %3044 = vperm.xlu0 %3043, %v2964
        %v3045 = vpop.permute.xlu0 %3044
        %v3047 = vmul.f32 %v1975, %v2970
        %v3048 = vmul.f32 %v1976, %v2975
        %v3049 = vmul.f32 %v1977, %v2980
        %v3050 = vmul.f32 %v1978, %v2985
        %v3051 = vmul.f32 %v1979, %v2990
        %v3052 = vmul.f32 %v1980, %v2995
        %v3053 = vmul.f32 %v1981, %v3000
        %v3054 = vmul.f32 %v1982, %v3005
        %v3055 = vmul.f32 %v1983, %v3010
        %v3056 = vmul.f32 %v1984, %v3015
        %v3057 = vmul.f32 %v1985, %v3020
        %v3058 = vmul.f32 %v1986, %v3025
        %v3059 = vmul.f32 %v1987, %v3030
        %v3060 = vmul.f32 %v1988, %v3035
        %v3061 = vmul.f32 %v1989, %v3040
        %v3062 = vmul.f32 %v1990, %v3045
        %v3063 = vld [vmem:[#allocation4] sm:$0xff]
        %v3064 = vld [vmem:[#allocation4 + $0x8] sm:$0xff]
        %v3065 = vld [vmem:[#allocation4 + $0x10] sm:$0xff]
        %v3066 = vld [vmem:[#allocation4 + $0x18] sm:$0xff]
        %v3067 = vld [vmem:[#allocation4 + $0x20] sm:$0xff]
        %v3068 = vld [vmem:[#allocation4 + $0x28] sm:$0xff]
        %v3069 = vld [vmem:[#allocation4 + $0x30] sm:$0xff]
        %v3070 = vld [vmem:[#allocation4 + $0x38] sm:$0xff]
        %v3071 = vld [vmem:[#allocation4 + $0x40] sm:$0xff]
        %v3072 = vld [vmem:[#allocation4 + $0x48] sm:$0xff]
        %v3073 = vld [vmem:[#allocation4 + $0x50] sm:$0xff]
        %v3074 = vld [vmem:[#allocation4 + $0x58] sm:$0xff]
        %v3075 = vld [vmem:[#allocation4 + $0x60] sm:$0xff]
        %v3076 = vld [vmem:[#allocation4 + $0x68] sm:$0xff]
        %v3077 = vld [vmem:[#allocation4 + $0x70] sm:$0xff]
        %v3078 = vld [vmem:[#allocation4 + $0x78] sm:$0xff]
        %3079 = vmatprep.subr.mxu0 %v3062
        %3080 = vmatpush1.msra.mxu0 %v2525
        %3081 = vmatprep.subr.mxu0 %v3061
        %3082 = vmatpush1.msra.mxu0 %v2524
        %3083 = vmatprep.subr.mxu0 %v3060
        %3084 = vmatpush1.msra.mxu0 %v2523
        %3085 = vmatprep.subr.mxu0 %v3059
        %3086 = vmatpush1.msra.mxu0 %v2522
        %3087 = vmatprep.subr.mxu0 %v3058
        %3088 = vmatpush1.msra.mxu0 %v2521
        %3089 = vmatprep.subr.mxu0 %v3057
        %3090 = vmatpush1.msra.mxu0 %v2520
        %3091 = vmatprep.subr.mxu0 %v3056
        %3092 = vmatpush1.msra.mxu0 %v2519
        %3093 = vmatprep.subr.mxu0 %v3055
        %3094 = vmatpush1.msra.mxu0 %v2518
        %3095 = vmatprep.subr.mxu0 %v3054
        %3096 = vmatpush1.msra.mxu0 %v2517
        %3097 = vmatprep.subr.mxu0 %v3053
        %3098 = vmatpush1.msra.mxu0 %v2516
        %3099 = vmatprep.subr.mxu0 %v3052
        %3100 = vmatpush1.msra.mxu0 %v2515
        %3101 = vmatprep.subr.mxu0 %v3051
        %3102 = vmatpush1.msra.mxu0 %v2514
        %3103 = vmatprep.subr.mxu0 %v3050
        %3104 = vmatpush1.msra.mxu0 %v2513
        %3105 = vmatprep.subr.mxu0 %v3049
        %3106 = vmatpush1.msra.mxu0 %v2512
        %3107 = vmatprep.subr.mxu0 %v3048
        %3108 = vmatpush1.msra.mxu0 %v2511
        %3109 = vmatprep.subr.mxu0 %v3047
        %3110 = vmatpush1.msra.mxu0 %v2510
        %3111 = vmatprep.subr.mxu0 0.0
        %3112 = vmatpush2.msra.mxu0 0.0
        %3113 = vmatprep.subr.mxu0 0.0
        %3114 = vmatpush2.msra.mxu0 0.0
        %3115 = vmatprep.subr.mxu0 0.0
        %3116 = vmatpush2.msra.mxu0 0.0
        %3117 = vmatprep.subr.mxu0 0.0
        %3118 = vmatpush2.msra.mxu0 0.0
        %3119 = vmatprep.subr.mxu0 0.0
        %3120 = vmatpush2.msra.mxu0 0.0
        %3121 = vmatprep.subr.mxu0 0.0
        %3122 = vmatpush2.msra.mxu0 0.0
        %3123 = vmatprep.subr.mxu0 0.0
        %3124 = vmatpush2.msra.mxu0 0.0
        %3125 = vmatprep.subr.mxu0 0.0
        %3126 = vmatpush2.msra.mxu0 0.0
        %3127 = vmatprep.subr.mxu0 0.0
        %3128 = vmatpush2.msra.mxu0 0.0
        %3129 = vmatprep.subr.mxu0 0.0
        %3130 = vmatpush2.msra.mxu0 0.0
        %3131 = vmatprep.subr.mxu0 0.0
        %3132 = vmatpush2.msra.mxu0 0.0
        %3133 = vmatprep.subr.mxu0 0.0
        %3134 = vmatpush2.msra.mxu0 0.0
        %3135 = vmatprep.subr.mxu0 0.0
        %3136 = vmatpush2.msra.mxu0 0.0
        %3137 = vmatprep.subr.mxu0 0.0
        %3138 = vmatpush2.msra.mxu0 0.0
        %3139 = vmatprep.subr.mxu0 0.0
        %3140 = vmatpush2.msra.mxu0 0.0
        %3141 = vmatprep.subr.mxu0 0.0
        %3142 = vmatpush2.msra.mxu0 0.0
        %3143 = vmatprep.mubr.f32.mxu0 0.0
        %3144 = vmatmul.mubr.f32.gmra.mxu0 %v1516
        %v3145 = vpop.f32.mrf.mxu0
        %v3146 = vadd.f32 0.0, %v3145
        %v3147 = vpop.f32.mrf.mxu0
        %v3148 = vadd.f32 0.0, %v3147
        %3149 = vmatprep.mubr.f32.mxu0 0.0
        %3150 = vmatmul.mubr.f32.gmra.mxu0 %v1517
        %v3151 = vpop.f32.mrf.mxu0
        %v3152 = vadd.f32 0.0, %v3151
        %v3153 = vpop.f32.mrf.mxu0
        %v3154 = vadd.f32 0.0, %v3153
        %3155 = vmatprep.mubr.f32.mxu0 0.0
        %3156 = vmatmul.mubr.f32.gmra.mxu0 %v1518
        %v3157 = vpop.f32.mrf.mxu0
        %v3158 = vadd.f32 0.0, %v3157
        %v3159 = vpop.f32.mrf.mxu0
        %v3160 = vadd.f32 0.0, %v3159
        %3161 = vmatprep.mubr.f32.mxu0 0.0
        %3162 = vmatmul.mubr.f32.gmra.mxu0 %v1519
        %v3163 = vpop.f32.mrf.mxu0
        %v3164 = vadd.f32 0.0, %v3163
        %v3165 = vpop.f32.mrf.mxu0
        %v3166 = vadd.f32 0.0, %v3165
        %3167 = vmatprep.mubr.f32.mxu0 0.0
        %3168 = vmatmul.mubr.f32.gmra.mxu0 %v1520
        %v3169 = vpop.f32.mrf.mxu0
        %v3170 = vadd.f32 0.0, %v3169
        %v3171 = vpop.f32.mrf.mxu0
        %v3172 = vadd.f32 0.0, %v3171
        %3173 = vmatprep.mubr.f32.mxu0 0.0
        %3174 = vmatmul.mubr.f32.gmra.mxu0 %v1521
        %v3175 = vpop.f32.mrf.mxu0
        %v3176 = vadd.f32 0.0, %v3175
        %v3177 = vpop.f32.mrf.mxu0
        %v3178 = vadd.f32 0.0, %v3177
        %3179 = vmatprep.mubr.f32.mxu0 0.0
        %3180 = vmatmul.mubr.f32.gmra.mxu0 %v1522
        %v3181 = vpop.f32.mrf.mxu0
        %v3182 = vadd.f32 0.0, %v3181
        %v3183 = vpop.f32.mrf.mxu0
        %v3184 = vadd.f32 0.0, %v3183
        %3185 = vmatprep.mubr.f32.mxu0 0.0
        %3186 = vmatmul.mubr.f32.gmra.mxu0 %v1523
        %v3187 = vpop.f32.mrf.mxu0
        %v3188 = vadd.f32 0.0, %v3187
        %v3189 = vpop.f32.mrf.mxu0
        %v3190 = vadd.f32 0.0, %v3189
        %3191 = vdwg.mxu0
        %v3192 = vadd.f32 %v3063, %v3146
        %v3193 = vadd.f32 %v3064, %v3148
        %v3194 = vadd.f32 %v3065, %v3152
        %v3195 = vadd.f32 %v3066, %v3154
        %v3196 = vadd.f32 %v3067, %v3158
        %v3197 = vadd.f32 %v3068, %v3160
        %v3198 = vadd.f32 %v3069, %v3164
        %v3199 = vadd.f32 %v3070, %v3166
        %v3200 = vadd.f32 %v3071, %v3170
        %v3201 = vadd.f32 %v3072, %v3172
        %v3202 = vadd.f32 %v3073, %v3176
        %v3203 = vadd.f32 %v3074, %v3178
        %v3204 = vadd.f32 %v3075, %v3182
        %v3205 = vadd.f32 %v3076, %v3184
        %v3206 = vadd.f32 %v3077, %v3188
        %v3207 = vadd.f32 %v3078, %v3190
        %3208 = vst [vmem:[#allocation4] sm:$0xff] %v3192
        %3209 = vst.msk [vmem:[#allocation4 + $0x8] sm:$0xff] %vm2007, %v3193
        %3210 = vst [vmem:[#allocation4 + $0x10] sm:$0xff] %v3194
        %3211 = vst.msk [vmem:[#allocation4 + $0x18] sm:$0xff] %vm2007, %v3195
        %3212 = vst [vmem:[#allocation4 + $0x20] sm:$0xff] %v3196
        %3213 = vst.msk [vmem:[#allocation4 + $0x28] sm:$0xff] %vm2007, %v3197
        %3214 = vst [vmem:[#allocation4 + $0x30] sm:$0xff] %v3198
        %3215 = vst.msk [vmem:[#allocation4 + $0x38] sm:$0xff] %vm2007, %v3199
        %3216 = vst [vmem:[#allocation4 + $0x40] sm:$0xff] %v3200
        %3217 = vst.msk [vmem:[#allocation4 + $0x48] sm:$0xff] %vm2007, %v3201
        %3218 = vst [vmem:[#allocation4 + $0x50] sm:$0xff] %v3202
        %3219 = vst.msk [vmem:[#allocation4 + $0x58] sm:$0xff] %vm2007, %v3203
        %3220 = vst [vmem:[#allocation4 + $0x60] sm:$0xff] %v3204
        %3221 = vst.msk [vmem:[#allocation4 + $0x68] sm:$0xff] %vm2007, %v3205
        %3222 = vst [vmem:[#allocation4 + $0x70] sm:$0xff] %v3206
        %3223 = vst.msk [vmem:[#allocation4 + $0x78] sm:$0xff] %vm2007, %v3207
        %p3224 = scmp.eq.s32.totalorder %s85, 3
        // Predicated region
        $region198: #{tpu_custom_call.1} parent=184 // pred_check
          %p3225 = pneg %p3224
        $region199: #{tpu_custom_call.1} parent=184 // pred_check_branch
          %3227 = sbr.rel (%p3225) target = $region201
        $region200: #{tpu_custom_call.1} parent=184 // pred_region
          %v3228 = vld [vmem:[#allocation8] sm:$0xff]
          %v3229 = vld [vmem:[#allocation8 + $0x8] sm:$0xff]
          %v3230 = vld [vmem:[#allocation8 + $0x10] sm:$0xff]
          %v3231 = vld [vmem:[#allocation8 + $0x18] sm:$0xff]
          %v3232 = vld [vmem:[#allocation8 + $0x20] sm:$0xff]
          %v3233 = vld [vmem:[#allocation8 + $0x28] sm:$0xff]
          %v3234 = vld [vmem:[#allocation8 + $0x30] sm:$0xff]
          %v3235 = vld [vmem:[#allocation8 + $0x38] sm:$0xff]
          %v3236 = vld [vmem:[%s9] sm:$0xff]
          %v3237 = vld [vmem:[%s9 + $0x8] sm:$0xff]
          %v3238 = vld [vmem:[%s9 + $0x10] sm:$0xff]
          %v3239 = vld [vmem:[%s9 + $0x18] sm:$0xff]
          %v3240 = vld [vmem:[%s9 + $0x20] sm:$0xff]
          %v3241 = vld [vmem:[%s9 + $0x28] sm:$0xff]
          %v3242 = vld [vmem:[%s9 + $0x30] sm:$0xff]
          %v3243 = vld [vmem:[%s9 + $0x38] sm:$0xff]
          %v3244 = vld [vmem:[#allocation4] sm:$0xff]
          %v3245 = vld [vmem:[#allocation4 + $0x8] sm:$0xff]
          %v3246 = vld [vmem:[#allocation4 + $0x10] sm:$0xff]
          %v3247 = vld [vmem:[#allocation4 + $0x18] sm:$0xff]
          %v3248 = vld [vmem:[#allocation4 + $0x20] sm:$0xff]
          %v3249 = vld [vmem:[#allocation4 + $0x28] sm:$0xff]
          %v3250 = vld [vmem:[#allocation4 + $0x30] sm:$0xff]
          %v3251 = vld [vmem:[#allocation4 + $0x38] sm:$0xff]
          %v3252 = vld [vmem:[#allocation4 + $0x40] sm:$0xff]
          %v3253 = vld [vmem:[#allocation4 + $0x48] sm:$0xff]
          %v3254 = vld [vmem:[#allocation4 + $0x50] sm:$0xff]
          %v3255 = vld [vmem:[#allocation4 + $0x58] sm:$0xff]
          %v3256 = vld [vmem:[#allocation4 + $0x60] sm:$0xff]
          %v3257 = vld [vmem:[#allocation4 + $0x68] sm:$0xff]
          %v3258 = vld [vmem:[#allocation4 + $0x70] sm:$0xff]
          %v3259 = vld [vmem:[#allocation4 + $0x78] sm:$0xff]
          %v3260 = vld [vmem:[%s19] sm:$0xff]
          %v3261 = vld [vmem:[%s19 + $0x8] sm:$0xff]
          %v3262 = vld [vmem:[%s19 + $0x10] sm:$0xff]
          %v3263 = vld [vmem:[%s19 + $0x18] sm:$0xff]
          %v3264 = vld [vmem:[%s19 + $0x20] sm:$0xff]
          %v3265 = vld [vmem:[%s19 + $0x28] sm:$0xff]
          %v3266 = vld [vmem:[%s19 + $0x30] sm:$0xff]
          %v3267 = vld [vmem:[%s19 + $0x38] sm:$0xff]
          %3269 = vset.pattern.permute.xlu0 0
          %3270 = vperm.xlu0 %3269, %v3260
          %v3271 = vpop.permute.xlu0 %3270
          %3274 = vset.pattern.permute.xlu0 0
          %3275 = vperm.xlu0 %3274, %v3261
          %v3276 = vpop.permute.xlu0 %3275
          %3279 = vset.pattern.permute.xlu0 0
          %3280 = vperm.xlu0 %3279, %v3262
          %v3281 = vpop.permute.xlu0 %3280
          %3284 = vset.pattern.permute.xlu0 0
          %3285 = vperm.xlu0 %3284, %v3263
          %v3286 = vpop.permute.xlu0 %3285
          %3289 = vset.pattern.permute.xlu0 0
          %3290 = vperm.xlu0 %3289, %v3264
          %v3291 = vpop.permute.xlu0 %3290
          %3294 = vset.pattern.permute.xlu0 0
          %3295 = vperm.xlu0 %3294, %v3265
          %v3296 = vpop.permute.xlu0 %3295
          %3299 = vset.pattern.permute.xlu0 0
          %3300 = vperm.xlu0 %3299, %v3266
          %v3301 = vpop.permute.xlu0 %3300
          %3304 = vset.pattern.permute.xlu0 0
          %3305 = vperm.xlu0 %3304, %v3267
          %v3306 = vpop.permute.xlu0 %3305
          %v3308 = vmul.f32 %v3245, %v3271
          %v3309 = vmul.f32 %v3247, %v3276
          %v3310 = vmul.f32 %v3249, %v3281
          %v3311 = vmul.f32 %v3251, %v3286
          %v3312 = vmul.f32 %v3253, %v3291
          %v3313 = vmul.f32 %v3255, %v3296
          %v3314 = vmul.f32 %v3257, %v3301
          %v3315 = vmul.f32 %v3259, %v3306
          %v3316 = vadd.f32 %v3236, %v3308
          %v3317 = vadd.f32 %v3237, %v3309
          %v3318 = vadd.f32 %v3238, %v3310
          %v3319 = vadd.f32 %v3239, %v3311
          %v3320 = vadd.f32 %v3240, %v3312
          %v3321 = vadd.f32 %v3241, %v3313
          %v3322 = vadd.f32 %v3242, %v3314
          %v3323 = vadd.f32 %v3243, %v3315
          %3324 = vst.msk [vmem:[%s67] sm:$0xff] %vm2007, %v3316
          %3325 = vst.msk [vmem:[%s67 + $0x8] sm:$0xff] %vm2007, %v3317
          %3326 = vst.msk [vmem:[%s67 + $0x10] sm:$0xff] %vm2007, %v3318
          %3327 = vst.msk [vmem:[%s67 + $0x18] sm:$0xff] %vm2007, %v3319
          %3328 = vst.msk [vmem:[%s67 + $0x20] sm:$0xff] %vm2007, %v3320
          %3329 = vst.msk [vmem:[%s67 + $0x28] sm:$0xff] %vm2007, %v3321
          %3330 = vst.msk [vmem:[%s67 + $0x30] sm:$0xff] %vm2007, %v3322
          %3331 = vst.msk [vmem:[%s67 + $0x38] sm:$0xff] %vm2007, %v3323
          %v3332 = vld [vmem:[%s43] sm:$0xff]
          %v3333 = vld [vmem:[%s43 + $0x8] sm:$0xff]
          %v3334 = vld [vmem:[%s43 + $0x10] sm:$0xff]
          %v3335 = vld [vmem:[%s43 + $0x18] sm:$0xff]
          %v3336 = vld [vmem:[%s43 + $0x20] sm:$0xff]
          %v3337 = vld [vmem:[%s43 + $0x28] sm:$0xff]
          %v3338 = vld [vmem:[%s43 + $0x30] sm:$0xff]
          %v3339 = vld [vmem:[%s43 + $0x38] sm:$0xff]
          %v3340 = vld [vmem:[%s43 + $0x40] sm:$0xff]
          %v3341 = vld [vmem:[%s43 + $0x48] sm:$0xff]
          %v3342 = vld [vmem:[%s43 + $0x50] sm:$0xff]
          %v3343 = vld [vmem:[%s43 + $0x58] sm:$0xff]
          %v3344 = vld [vmem:[%s43 + $0x60] sm:$0xff]
          %v3345 = vld [vmem:[%s43 + $0x68] sm:$0xff]
          %v3346 = vld [vmem:[%s43 + $0x70] sm:$0xff]
          %v3347 = vld [vmem:[%s43 + $0x78] sm:$0xff]
          %v3348 = vld [vmem:[%s45] sm:$0xff]
          %v3349 = vld [vmem:[%s45 + $0x8] sm:$0xff]
          %v3350 = vld [vmem:[%s45 + $0x10] sm:$0xff]
          %v3351 = vld [vmem:[%s45 + $0x18] sm:$0xff]
          %v3352 = vld [vmem:[%s45 + $0x20] sm:$0xff]
          %v3353 = vld [vmem:[%s45 + $0x28] sm:$0xff]
          %v3354 = vld [vmem:[%s45 + $0x30] sm:$0xff]
          %v3355 = vld [vmem:[%s45 + $0x38] sm:$0xff]
          %v3356 = vld [vmem:[%s45 + $0x40] sm:$0xff]
          %v3357 = vld [vmem:[%s45 + $0x48] sm:$0xff]
          %v3358 = vld [vmem:[%s45 + $0x50] sm:$0xff]
          %v3359 = vld [vmem:[%s45 + $0x58] sm:$0xff]
          %v3360 = vld [vmem:[%s45 + $0x60] sm:$0xff]
          %v3361 = vld [vmem:[%s45 + $0x68] sm:$0xff]
          %v3362 = vld [vmem:[%s45 + $0x70] sm:$0xff]
          %v3363 = vld [vmem:[%s45 + $0x78] sm:$0xff]
          %3364 = vmatprep.subr.mxu0 0.0
          %3365 = vmatpush1.msra.mxu0 %v3363
          %3366 = vmatprep.subr.mxu0 0.0
          %3367 = vmatpush1.msra.mxu0 %v3362
          %3368 = vmatprep.subr.mxu0 0.0
          %3369 = vmatpush1.msra.mxu0 %v3361
          %3370 = vmatprep.subr.mxu0 0.0
          %3371 = vmatpush1.msra.mxu0 %v3360
          %3372 = vmatprep.subr.mxu0 0.0
          %3373 = vmatpush1.msra.mxu0 %v3359
          %3374 = vmatprep.subr.mxu0 0.0
          %3375 = vmatpush1.msra.mxu0 %v3358
          %3376 = vmatprep.subr.mxu0 0.0
          %3377 = vmatpush1.msra.mxu0 %v3357
          %3378 = vmatprep.subr.mxu0 0.0
          %3379 = vmatpush1.msra.mxu0 %v3356
          %3380 = vmatprep.subr.mxu0 0.0
          %3381 = vmatpush1.msra.mxu0 %v3355
          %3382 = vmatprep.subr.mxu0 0.0
          %3383 = vmatpush1.msra.mxu0 %v3354
          %3384 = vmatprep.subr.mxu0 0.0
          %3385 = vmatpush1.msra.mxu0 %v3353
          %3386 = vmatprep.subr.mxu0 0.0
          %3387 = vmatpush1.msra.mxu0 %v3352
          %3388 = vmatprep.subr.mxu0 0.0
          %3389 = vmatpush1.msra.mxu0 %v3351
          %3390 = vmatprep.subr.mxu0 0.0
          %3391 = vmatpush1.msra.mxu0 %v3350
          %3392 = vmatprep.subr.mxu0 0.0
          %3393 = vmatpush1.msra.mxu0 %v3349
          %3394 = vmatprep.subr.mxu0 0.0
          %3395 = vmatpush1.msra.mxu0 %v3348
          %3396 = vmatprep.subr.mxu0 0.0
          %3397 = vmatpush2.msra.mxu0 0.0
          %3398 = vmatprep.subr.mxu0 0.0
          %3399 = vmatpush2.msra.mxu0 0.0
          %3400 = vmatprep.subr.mxu0 0.0
          %3401 = vmatpush2.msra.mxu0 0.0
          %3402 = vmatprep.subr.mxu0 0.0
          %3403 = vmatpush2.msra.mxu0 0.0
          %3404 = vmatprep.subr.mxu0 0.0
          %3405 = vmatpush2.msra.mxu0 0.0
          %3406 = vmatprep.subr.mxu0 0.0
          %3407 = vmatpush2.msra.mxu0 0.0
          %3408 = vmatprep.subr.mxu0 0.0
          %3409 = vmatpush2.msra.mxu0 0.0
          %3410 = vmatprep.subr.mxu0 0.0
          %3411 = vmatpush2.msra.mxu0 0.0
          %3412 = vmatprep.subr.mxu0 0.0
          %3413 = vmatpush2.msra.mxu0 0.0
          %3414 = vmatprep.subr.mxu0 0.0
          %3415 = vmatpush2.msra.mxu0 0.0
          %3416 = vmatprep.subr.mxu0 0.0
          %3417 = vmatpush2.msra.mxu0 0.0
          %3418 = vmatprep.subr.mxu0 0.0
          %3419 = vmatpush2.msra.mxu0 0.0
          %3420 = vmatprep.subr.mxu0 0.0
          %3421 = vmatpush2.msra.mxu0 0.0
          %3422 = vmatprep.subr.mxu0 0.0
          %3423 = vmatpush2.msra.mxu0 0.0
          %3424 = vmatprep.subr.mxu0 0.0
          %3425 = vmatpush2.msra.mxu0 0.0
          %3426 = vmatprep.subr.mxu0 0.0
          %3427 = vmatpush2.msra.mxu0 0.0
          %3428 = vmatprep.mubr.f32.mxu0 0.0
          %3429 = vmatmul.mubr.f32.gmra.mxu0 %v3244
          %v3430 = vpop.f32.mrf.mxu0
          %v3431 = vadd.f32 0.0, %v3430
          %v3432 = vpop.f32.mrf.mxu0
          %3433 = vmatprep.mubr.f32.mxu0 0.0
          %3434 = vmatmul.mubr.f32.gmra.mxu0 %v3246
          %v3435 = vpop.f32.mrf.mxu0
          %v3436 = vadd.f32 0.0, %v3435
          %v3437 = vpop.f32.mrf.mxu0
          %3438 = vmatprep.mubr.f32.mxu0 0.0
          %3439 = vmatmul.mubr.f32.gmra.mxu0 %v3248
          %v3440 = vpop.f32.mrf.mxu0
          %v3441 = vadd.f32 0.0, %v3440
          %v3442 = vpop.f32.mrf.mxu0
          %3443 = vmatprep.mubr.f32.mxu0 0.0
          %3444 = vmatmul.mubr.f32.gmra.mxu0 %v3250
          %v3445 = vpop.f32.mrf.mxu0
          %v3446 = vadd.f32 0.0, %v3445
          %v3447 = vpop.f32.mrf.mxu0
          %3448 = vmatprep.mubr.f32.mxu0 0.0
          %3449 = vmatmul.mubr.f32.gmra.mxu0 %v3252
          %v3450 = vpop.f32.mrf.mxu0
          %v3451 = vadd.f32 0.0, %v3450
          %v3452 = vpop.f32.mrf.mxu0
          %3453 = vmatprep.mubr.f32.mxu0 0.0
          %3454 = vmatmul.mubr.f32.gmra.mxu0 %v3254
          %v3455 = vpop.f32.mrf.mxu0
          %v3456 = vadd.f32 0.0, %v3455
          %v3457 = vpop.f32.mrf.mxu0
          %3458 = vmatprep.mubr.f32.mxu0 0.0
          %3459 = vmatmul.mubr.f32.gmra.mxu0 %v3256
          %v3460 = vpop.f32.mrf.mxu0
          %v3461 = vadd.f32 0.0, %v3460
          %v3462 = vpop.f32.mrf.mxu0
          %3463 = vmatprep.mubr.f32.mxu0 0.0
          %3464 = vmatmul.mubr.f32.gmra.mxu0 %v3258
          %v3465 = vpop.f32.mrf.mxu0
          %v3466 = vadd.f32 0.0, %v3465
          %v3467 = vpop.f32.mrf.mxu0
          %3468 = vdwg.mxu0
          %3469 = vmatprep.subr.mxu0 0.0
          %3470 = vmatpush1.msra.mxu0 %v3347
          %3471 = vmatprep.subr.mxu0 0.0
          %3472 = vmatpush1.msra.mxu0 %v3346
          %3473 = vmatprep.subr.mxu0 0.0
          %3474 = vmatpush1.msra.mxu0 %v3345
          %3475 = vmatprep.subr.mxu0 0.0
          %3476 = vmatpush1.msra.mxu0 %v3344
          %3477 = vmatprep.subr.mxu0 0.0
          %3478 = vmatpush1.msra.mxu0 %v3343
          %3479 = vmatprep.subr.mxu0 0.0
          %3480 = vmatpush1.msra.mxu0 %v3342
          %3481 = vmatprep.subr.mxu0 0.0
          %3482 = vmatpush1.msra.mxu0 %v3341
          %3483 = vmatprep.subr.mxu0 0.0
          %3484 = vmatpush1.msra.mxu0 %v3340
          %3485 = vmatprep.subr.mxu0 0.0
          %3486 = vmatpush1.msra.mxu0 %v3339
          %3487 = vmatprep.subr.mxu0 0.0
          %3488 = vmatpush1.msra.mxu0 %v3338
          %3489 = vmatprep.subr.mxu0 0.0
          %3490 = vmatpush1.msra.mxu0 %v3337
          %3491 = vmatprep.subr.mxu0 0.0
          %3492 = vmatpush1.msra.mxu0 %v3336
          %3493 = vmatprep.subr.mxu0 0.0
          %3494 = vmatpush1.msra.mxu0 %v3335
          %3495 = vmatprep.subr.mxu0 0.0
          %3496 = vmatpush1.msra.mxu0 %v3334
          %3497 = vmatprep.subr.mxu0 0.0
          %3498 = vmatpush1.msra.mxu0 %v3333
          %3499 = vmatprep.subr.mxu0 0.0
          %3500 = vmatpush1.msra.mxu0 %v3332
          %3501 = vmatprep.subr.mxu0 0.0
          %3502 = vmatpush2.msra.mxu0 0.0
          %3503 = vmatprep.subr.mxu0 0.0
          %3504 = vmatpush2.msra.mxu0 0.0
          %3505 = vmatprep.subr.mxu0 0.0
          %3506 = vmatpush2.msra.mxu0 0.0
          %3507 = vmatprep.subr.mxu0 0.0
          %3508 = vmatpush2.msra.mxu0 0.0
          %3509 = vmatprep.subr.mxu0 0.0
          %3510 = vmatpush2.msra.mxu0 0.0
          %3511 = vmatprep.subr.mxu0 0.0
          %3512 = vmatpush2.msra.mxu0 0.0
          %3513 = vmatprep.subr.mxu0 0.0
          %3514 = vmatpush2.msra.mxu0 0.0
          %3515 = vmatprep.subr.mxu0 0.0
          %3516 = vmatpush2.msra.mxu0 0.0
          %3517 = vmatprep.subr.mxu0 0.0
          %3518 = vmatpush2.msra.mxu0 0.0
          %3519 = vmatprep.subr.mxu0 0.0
          %3520 = vmatpush2.msra.mxu0 0.0
          %3521 = vmatprep.subr.mxu0 0.0
          %3522 = vmatpush2.msra.mxu0 0.0
          %3523 = vmatprep.subr.mxu0 0.0
          %3524 = vmatpush2.msra.mxu0 0.0
          %3525 = vmatprep.subr.mxu0 0.0
          %3526 = vmatpush2.msra.mxu0 0.0
          %3527 = vmatprep.subr.mxu0 0.0
          %3528 = vmatpush2.msra.mxu0 0.0
          %3529 = vmatprep.subr.mxu0 0.0
          %3530 = vmatpush2.msra.mxu0 0.0
          %3531 = vmatprep.subr.mxu0 0.0
          %3532 = vmatpush2.msra.mxu0 0.0
          %3533 = vmatprep.mubr.f32.mxu0 0.0
          %3534 = vmatmul.mubr.f32.gmra.mxu0 %v3228
          %v3535 = vpop.f32.mrf.mxu0
          %v3536 = vadd.f32 %v3431, %v3535
          %v3537 = vpop.f32.mrf.mxu0
          %3538 = vmatprep.mubr.f32.mxu0 0.0
          %3539 = vmatmul.mubr.f32.gmra.mxu0 %v3229
          %v3540 = vpop.f32.mrf.mxu0
          %v3541 = vadd.f32 %v3436, %v3540
          %v3542 = vpop.f32.mrf.mxu0
          %3543 = vmatprep.mubr.f32.mxu0 0.0
          %3544 = vmatmul.mubr.f32.gmra.mxu0 %v3230
          %v3545 = vpop.f32.mrf.mxu0
          %v3546 = vadd.f32 %v3441, %v3545
          %v3547 = vpop.f32.mrf.mxu0
          %3548 = vmatprep.mubr.f32.mxu0 0.0
          %3549 = vmatmul.mubr.f32.gmra.mxu0 %v3231
          %v3550 = vpop.f32.mrf.mxu0
          %v3551 = vadd.f32 %v3446, %v3550
          %v3552 = vpop.f32.mrf.mxu0
          %3553 = vmatprep.mubr.f32.mxu0 0.0
          %3554 = vmatmul.mubr.f32.gmra.mxu0 %v3232
          %v3555 = vpop.f32.mrf.mxu0
          %v3556 = vadd.f32 %v3451, %v3555
          %v3557 = vpop.f32.mrf.mxu0
          %3558 = vmatprep.mubr.f32.mxu0 0.0
          %3559 = vmatmul.mubr.f32.gmra.mxu0 %v3233
          %v3560 = vpop.f32.mrf.mxu0
          %v3561 = vadd.f32 %v3456, %v3560
          %v3562 = vpop.f32.mrf.mxu0
          %3563 = vmatprep.mubr.f32.mxu0 0.0
          %3564 = vmatmul.mubr.f32.gmra.mxu0 %v3234
          %v3565 = vpop.f32.mrf.mxu0
          %v3566 = vadd.f32 %v3461, %v3565
          %v3567 = vpop.f32.mrf.mxu0
          %3568 = vmatprep.mubr.f32.mxu0 0.0
          %3569 = vmatmul.mubr.f32.gmra.mxu0 %v3235
          %v3570 = vpop.f32.mrf.mxu0
          %v3571 = vadd.f32 %v3466, %v3570
          %v3572 = vpop.f32.mrf.mxu0
          %3573 = vdwg.mxu0
          %v3574 = vld [vmem:[%s47] sm:$0x1]
          %v3576 = vlaneseq
          %v3577 = vshrl.u32 %v3576, 7
          %v3578 = vsub.s32 0, %v3577
          %v3579 = vrot.slane %v3574, %v3578
          %v3581 = vadd.f32 %v3536, %v3579
          %v3582 = vadd.f32 %v3541, %v3579
          %v3583 = vadd.f32 %v3546, %v3579
          %v3584 = vadd.f32 %v3551, %v3579
          %v3585 = vadd.f32 %v3556, %v3579
          %v3586 = vadd.f32 %v3561, %v3579
          %v3587 = vadd.f32 %v3566, %v3579
          %v3588 = vadd.f32 %v3571, %v3579
          %v3589 = vsub.f32 0.0, %v3581
          %v3590 = vsub.f32 0.0, %v3582
          %v3591 = vsub.f32 0.0, %v3583
          %v3592 = vsub.f32 0.0, %v3584
          %v3593 = vsub.f32 0.0, %v3585
          %v3594 = vsub.f32 0.0, %v3586
          %v3595 = vsub.f32 0.0, %v3587
          %v3596 = vsub.f32 0.0, %v3588
          %v3597 = vmul.f32 %v3589, 1.442695
          %v3598 = vpow.pop %v3597
          %v3599 = vmul.f32 %v3590, 1.442695
          %v3600 = vpow.pop %v3599
          %v3601 = vmul.f32 %v3591, 1.442695
          %v3602 = vpow.pop %v3601
          %v3603 = vmul.f32 %v3592, 1.442695
          %v3604 = vpow.pop %v3603
          %v3605 = vmul.f32 %v3593, 1.442695
          %v3606 = vpow.pop %v3605
          %v3607 = vmul.f32 %v3594, 1.442695
          %v3608 = vpow.pop %v3607
          %v3609 = vmul.f32 %v3595, 1.442695
          %v3610 = vpow.pop %v3609
          %v3611 = vmul.f32 %v3596, 1.442695
          %v3612 = vpow.pop %v3611
          %v3613 = vadd.f32 %v3598, 1.0
          %v3614 = vadd.f32 %v3600, 1.0
          %v3615 = vadd.f32 %v3602, 1.0
          %v3616 = vadd.f32 %v3604, 1.0
          %v3617 = vadd.f32 %v3606, 1.0
          %v3618 = vadd.f32 %v3608, 1.0
          %v3619 = vadd.f32 %v3610, 1.0
          %v3620 = vadd.f32 %v3612, 1.0
          %v3621 = vrcp.pop %v3613
          %v3622 = vmul.f32 1.0, %v3621
          %v3623 = vrcp.pop %v3614
          %v3624 = vmul.f32 1.0, %v3623
          %v3625 = vrcp.pop %v3615
          %v3626 = vmul.f32 1.0, %v3625
          %v3627 = vrcp.pop %v3616
          %v3628 = vmul.f32 1.0, %v3627
          %v3629 = vrcp.pop %v3617
          %v3630 = vmul.f32 1.0, %v3629
          %v3631 = vrcp.pop %v3618
          %v3632 = vmul.f32 1.0, %v3631
          %v3633 = vrcp.pop %v3619
          %v3634 = vmul.f32 1.0, %v3633
          %v3635 = vrcp.pop %v3620
          %v3636 = vmul.f32 1.0, %v3635
          %v3637 = vmul.f32 %v3581, %v3622
          %v3638 = vmul.f32 %v3582, %v3624
          %v3639 = vmul.f32 %v3583, %v3626
          %v3640 = vmul.f32 %v3584, %v3628
          %v3641 = vmul.f32 %v3585, %v3630
          %v3642 = vmul.f32 %v3586, %v3632
          %v3643 = vmul.f32 %v3587, %v3634
          %v3644 = vmul.f32 %v3588, %v3636
          %v3645 = vld [vmem:[%s49] sm:$0xff]
          %v3646 = vld [vmem:[%s49 + $0x8] sm:$0xff]
          %v3647 = vld [vmem:[%s49 + $0x10] sm:$0xff]
          %v3648 = vld [vmem:[%s49 + $0x18] sm:$0xff]
          %v3649 = vld [vmem:[%s49 + $0x20] sm:$0xff]
          %v3650 = vld [vmem:[%s49 + $0x28] sm:$0xff]
          %v3651 = vld [vmem:[%s49 + $0x30] sm:$0xff]
          %v3652 = vld [vmem:[%s49 + $0x38] sm:$0xff]
          %v3653 = vld [vmem:[%s49 + $0x40] sm:$0xff]
          %v3654 = vld [vmem:[%s49 + $0x48] sm:$0xff]
          %v3655 = vld [vmem:[%s49 + $0x50] sm:$0xff]
          %v3656 = vld [vmem:[%s49 + $0x58] sm:$0xff]
          %v3657 = vld [vmem:[%s49 + $0x60] sm:$0xff]
          %v3658 = vld [vmem:[%s49 + $0x68] sm:$0xff]
          %v3659 = vld [vmem:[%s49 + $0x70] sm:$0xff]
          %v3660 = vld [vmem:[%s49 + $0x78] sm:$0xff]
          %3661 = vmatprep.subr.mxu0 0.0
          %3662 = vmatpush1.msra.mxu0 %v3660
          %3663 = vmatprep.subr.mxu0 0.0
          %3664 = vmatpush1.msra.mxu0 %v3659
          %3665 = vmatprep.subr.mxu0 0.0
          %3666 = vmatpush1.msra.mxu0 %v3658
          %3667 = vmatprep.subr.mxu0 0.0
          %3668 = vmatpush1.msra.mxu0 %v3657
          %3669 = vmatprep.subr.mxu0 0.0
          %3670 = vmatpush1.msra.mxu0 %v3656
          %3671 = vmatprep.subr.mxu0 0.0
          %3672 = vmatpush1.msra.mxu0 %v3655
          %3673 = vmatprep.subr.mxu0 0.0
          %3674 = vmatpush1.msra.mxu0 %v3654
          %3675 = vmatprep.subr.mxu0 0.0
          %3676 = vmatpush1.msra.mxu0 %v3653
          %3677 = vmatprep.subr.mxu0 0.0
          %3678 = vmatpush1.msra.mxu0 %v3652
          %3679 = vmatprep.subr.mxu0 0.0
          %3680 = vmatpush1.msra.mxu0 %v3651
          %3681 = vmatprep.subr.mxu0 0.0
          %3682 = vmatpush1.msra.mxu0 %v3650
          %3683 = vmatprep.subr.mxu0 0.0
          %3684 = vmatpush1.msra.mxu0 %v3649
          %3685 = vmatprep.subr.mxu0 0.0
          %3686 = vmatpush1.msra.mxu0 %v3648
          %3687 = vmatprep.subr.mxu0 0.0
          %3688 = vmatpush1.msra.mxu0 %v3647
          %3689 = vmatprep.subr.mxu0 0.0
          %3690 = vmatpush1.msra.mxu0 %v3646
          %3691 = vmatprep.subr.mxu0 0.0
          %3692 = vmatpush1.msra.mxu0 %v3645
          %3693 = vmatprep.subr.mxu0 0.0
          %3694 = vmatpush2.msra.mxu0 0.0
          %3695 = vmatprep.subr.mxu0 0.0
          %3696 = vmatpush2.msra.mxu0 0.0
          %3697 = vmatprep.subr.mxu0 0.0
          %3698 = vmatpush2.msra.mxu0 0.0
          %3699 = vmatprep.subr.mxu0 0.0
          %3700 = vmatpush2.msra.mxu0 0.0
          %3701 = vmatprep.subr.mxu0 0.0
          %3702 = vmatpush2.msra.mxu0 0.0
          %3703 = vmatprep.subr.mxu0 0.0
          %3704 = vmatpush2.msra.mxu0 0.0
          %3705 = vmatprep.subr.mxu0 0.0
          %3706 = vmatpush2.msra.mxu0 0.0
          %3707 = vmatprep.subr.mxu0 0.0
          %3708 = vmatpush2.msra.mxu0 0.0
          %3709 = vmatprep.subr.mxu0 0.0
          %3710 = vmatpush2.msra.mxu0 0.0
          %3711 = vmatprep.subr.mxu0 0.0
          %3712 = vmatpush2.msra.mxu0 0.0
          %3713 = vmatprep.subr.mxu0 0.0
          %3714 = vmatpush2.msra.mxu0 0.0
          %3715 = vmatprep.subr.mxu0 0.0
          %3716 = vmatpush2.msra.mxu0 0.0
          %3717 = vmatprep.subr.mxu0 0.0
          %3718 = vmatpush2.msra.mxu0 0.0
          %3719 = vmatprep.subr.mxu0 0.0
          %3720 = vmatpush2.msra.mxu0 0.0
          %3721 = vmatprep.subr.mxu0 0.0
          %3722 = vmatpush2.msra.mxu0 0.0
          %3723 = vmatprep.subr.mxu0 0.0
          %3724 = vmatpush2.msra.mxu0 0.0
          %3725 = vmatprep.mubr.f32.mxu0 0.0
          %3726 = vmatmul.mubr.f32.gmra.mxu0 %v3637
          %v3727 = vpop.f32.mrf.mxu0
          %v3728 = vadd.f32 0.0, %v3727
          %v3729 = vpop.f32.mrf.mxu0
          %3730 = vmatprep.mubr.f32.mxu0 0.0
          %3731 = vmatmul.mubr.f32.gmra.mxu0 %v3638
          %v3732 = vpop.f32.mrf.mxu0
          %v3733 = vadd.f32 0.0, %v3732
          %v3734 = vpop.f32.mrf.mxu0
          %3735 = vmatprep.mubr.f32.mxu0 0.0
          %3736 = vmatmul.mubr.f32.gmra.mxu0 %v3639
          %v3737 = vpop.f32.mrf.mxu0
          %v3738 = vadd.f32 0.0, %v3737
          %v3739 = vpop.f32.mrf.mxu0
          %3740 = vmatprep.mubr.f32.mxu0 0.0
          %3741 = vmatmul.mubr.f32.gmra.mxu0 %v3640
          %v3742 = vpop.f32.mrf.mxu0
          %v3743 = vadd.f32 0.0, %v3742
          %v3744 = vpop.f32.mrf.mxu0
          %3745 = vmatprep.mubr.f32.mxu0 0.0
          %3746 = vmatmul.mubr.f32.gmra.mxu0 %v3641
          %v3747 = vpop.f32.mrf.mxu0
          %v3748 = vadd.f32 0.0, %v3747
          %v3749 = vpop.f32.mrf.mxu0
          %3750 = vmatprep.mubr.f32.mxu0 0.0
          %3751 = vmatmul.mubr.f32.gmra.mxu0 %v3642
          %v3752 = vpop.f32.mrf.mxu0
          %v3753 = vadd.f32 0.0, %v3752
          %v3754 = vpop.f32.mrf.mxu0
          %3755 = vmatprep.mubr.f32.mxu0 0.0
          %3756 = vmatmul.mubr.f32.gmra.mxu0 %v3643
          %v3757 = vpop.f32.mrf.mxu0
          %v3758 = vadd.f32 0.0, %v3757
          %v3759 = vpop.f32.mrf.mxu0
          %3760 = vmatprep.mubr.f32.mxu0 0.0
          %3761 = vmatmul.mubr.f32.gmra.mxu0 %v3644
          %v3762 = vpop.f32.mrf.mxu0
          %v3763 = vadd.f32 0.0, %v3762
          %v3764 = vpop.f32.mrf.mxu0
          %3765 = vdwg.mxu0
          %v3766 = vadd.f32 %v3228, %v3728
          %v3767 = vadd.f32 %v3229, %v3733
          %v3768 = vadd.f32 %v3230, %v3738
          %v3769 = vadd.f32 %v3231, %v3743
          %v3770 = vadd.f32 %v3232, %v3748
          %v3771 = vadd.f32 %v3233, %v3753
          %v3772 = vadd.f32 %v3234, %v3758
          %v3773 = vadd.f32 %v3235, %v3763
          %v3774 = vld [vmem:[%s51] sm:$0x1]
          %v3776 = vlaneseq
          %v3777 = vshrl.u32 %v3776, 7
          %v3778 = vsub.s32 0, %v3777
          %v3779 = vrot.slane %v3774, %v3778
          %v3781 = vadd.f32 %v3766, %v3779
          %v3782 = vadd.f32 %v3767, %v3779
          %v3783 = vadd.f32 %v3768, %v3779
          %v3784 = vadd.f32 %v3769, %v3779
          %v3785 = vadd.f32 %v3770, %v3779
          %v3786 = vadd.f32 %v3771, %v3779
          %v3787 = vadd.f32 %v3772, %v3779
          %v3788 = vadd.f32 %v3773, %v3779
          %vm3789 = vcmp.gt.f32.partialorder %v3781, 0.0
          %vm3790 = vcmp.gt.f32.partialorder %v3782, 0.0
          %vm3791 = vcmp.gt.f32.partialorder %v3783, 0.0
          %vm3792 = vcmp.gt.f32.partialorder %v3784, 0.0
          %vm3793 = vcmp.gt.f32.partialorder %v3785, 0.0
          %vm3794 = vcmp.gt.f32.partialorder %v3786, 0.0
          %vm3795 = vcmp.gt.f32.partialorder %v3787, 0.0
          %vm3796 = vcmp.gt.f32.partialorder %v3788, 0.0
          %v3797 = vmin.f32 %v3781, 0.0
          %v3798 = vmin.f32 %v3782, 0.0
          %v3799 = vmin.f32 %v3783, 0.0
          %v3800 = vmin.f32 %v3784, 0.0
          %v3801 = vmin.f32 %v3785, 0.0
          %v3802 = vmin.f32 %v3786, 0.0
          %v3803 = vmin.f32 %v3787, 0.0
          %v3804 = vmin.f32 %v3788, 0.0
          %v3805 = vmul.f32 %v3797, 1.442695
          %v3806 = vpow.pop %v3805
          %v3807 = vmul.f32 %v3798, 1.442695
          %v3808 = vpow.pop %v3807
          %v3809 = vmul.f32 %v3799, 1.442695
          %v3810 = vpow.pop %v3809
          %v3811 = vmul.f32 %v3800, 1.442695
          %v3812 = vpow.pop %v3811
          %v3813 = vmul.f32 %v3801, 1.442695
          %v3814 = vpow.pop %v3813
          %v3815 = vmul.f32 %v3802, 1.442695
          %v3816 = vpow.pop %v3815
          %v3817 = vmul.f32 %v3803, 1.442695
          %v3818 = vpow.pop %v3817
          %v3819 = vmul.f32 %v3804, 1.442695
          %v3820 = vpow.pop %v3819
          %v3821 = vsub.f32 %v3806, 1.0
          %v3822 = vsub.f32 %v3808, 1.0
          %v3823 = vsub.f32 %v3810, 1.0
          %v3824 = vsub.f32 %v3812, 1.0
          %v3825 = vsub.f32 %v3814, 1.0
          %v3826 = vsub.f32 %v3816, 1.0
          %v3827 = vsub.f32 %v3818, 1.0
          %v3828 = vsub.f32 %v3820, 1.0
          %v3829 = vsel %vm3789, %v3781, %v3821
          %v3830 = vsel %vm3790, %v3782, %v3822
          %v3831 = vsel %vm3791, %v3783, %v3823
          %v3832 = vsel %vm3792, %v3784, %v3824
          %v3833 = vsel %vm3793, %v3785, %v3825
          %v3834 = vsel %vm3794, %v3786, %v3826
          %v3835 = vsel %vm3795, %v3787, %v3827
          %v3836 = vsel %vm3796, %v3788, %v3828
          %v3837 = vld [vmem:[%s15] sm:$0xff]
          %v3838 = vld [vmem:[%s15 + $0x8] sm:$0xff]
          %v3839 = vld [vmem:[%s15 + $0x10] sm:$0xff]
          %v3840 = vld [vmem:[%s15 + $0x18] sm:$0xff]
          %v3841 = vld [vmem:[%s15 + $0x20] sm:$0xff]
          %v3842 = vld [vmem:[%s15 + $0x28] sm:$0xff]
          %v3843 = vld [vmem:[%s15 + $0x30] sm:$0xff]
          %v3844 = vld [vmem:[%s15 + $0x38] sm:$0xff]
          %v3845 = vld [vmem:[#allocation5] sm:$0x1]
          %3847 = vset.pattern.permute.xlu0 0
          %3848 = vperm.xlu0 %3847, %v3837
          %v3849 = vpop.permute.xlu0 %3848
          %3852 = vset.pattern.permute.xlu0 0
          %3853 = vperm.xlu0 %3852, %v3838
          %v3854 = vpop.permute.xlu0 %3853
          %3857 = vset.pattern.permute.xlu0 0
          %3858 = vperm.xlu0 %3857, %v3839
          %v3859 = vpop.permute.xlu0 %3858
          %3862 = vset.pattern.permute.xlu0 0
          %3863 = vperm.xlu0 %3862, %v3840
          %v3864 = vpop.permute.xlu0 %3863
          %3867 = vset.pattern.permute.xlu0 0
          %3868 = vperm.xlu0 %3867, %v3841
          %v3869 = vpop.permute.xlu0 %3868
          %3872 = vset.pattern.permute.xlu0 0
          %3873 = vperm.xlu0 %3872, %v3842
          %v3874 = vpop.permute.xlu0 %3873
          %3877 = vset.pattern.permute.xlu0 0
          %3878 = vperm.xlu0 %3877, %v3843
          %v3879 = vpop.permute.xlu0 %3878
          %3882 = vset.pattern.permute.xlu0 0
          %3883 = vperm.xlu0 %3882, %v3844
          %v3884 = vpop.permute.xlu0 %3883
          %v3886 = vmul.f32 %v3829, %v3849
          %v3887 = vmul.f32 %v3830, %v3854
          %v3888 = vmul.f32 %v3831, %v3859
          %v3889 = vmul.f32 %v3832, %v3864
          %v3890 = vmul.f32 %v3833, %v3869
          %v3891 = vmul.f32 %v3834, %v3874
          %v3892 = vmul.f32 %v3835, %v3879
          %v3893 = vmul.f32 %v3836, %v3884
          %v3894 = vadd.f32 %v3886, %v3887
          %v3895 = vadd.f32 %v3894, %v3888
          %v3896 = vadd.f32 %v3895, %v3889
          %v3897 = vadd.f32 %v3896, %v3890
          %v3898 = vadd.f32 %v3897, %v3891
          %v3899 = vadd.f32 %v3898, %v3892
          %v3900 = vadd.f32 %v3899, %v3893
          %v3901 = vrot.slane %v3900, 4
          %v3902 = vadd.f32 %v3900, %v3901
          %v3903 = vrot.slane %v3902, 2
          %v3904 = vadd.f32 %v3902, %v3903
          %v3905 = vrot.slane %v3904, 1
          %v3906 = vadd.f32 %v3904, %v3905
          %3908 = vset.pattern.permute.xlu0 0
          %3909 = vperm.xlu0 %3908, %v3845
          %v3910 = vpop.permute.xlu0 %3909
          %v3912 = vlaneseq
          %v3913 = vshrl.u32 %v3912, 7
          %v3914 = vsub.s32 0, %v3913
          %v3915 = vrot.slane %v3910, %v3914
          %v3916 = vmul.f32 %v3906, %v3915
          %v3917 = vsub.f32 %v3829, %v3916
          %v3918 = vsub.f32 %v3830, %v3916
          %v3919 = vsub.f32 %v3831, %v3916
          %v3920 = vsub.f32 %v3832, %v3916
          %v3921 = vsub.f32 %v3833, %v3916
          %v3922 = vsub.f32 %v3834, %v3916
          %v3923 = vsub.f32 %v3835, %v3916
          %v3924 = vsub.f32 %v3836, %v3916
          %v3925 = vmul.f32 %v3917, %v3849
          %v3926 = vmul.f32 %v3918, %v3854
          %v3927 = vmul.f32 %v3919, %v3859
          %v3928 = vmul.f32 %v3920, %v3864
          %v3929 = vmul.f32 %v3921, %v3869
          %v3930 = vmul.f32 %v3922, %v3874
          %v3931 = vmul.f32 %v3923, %v3879
          %v3932 = vmul.f32 %v3924, %v3884
          %v3933 = vmul.f32 %v3925, %v3925
          %v3934 = vmul.f32 %v3926, %v3926
          %v3935 = vmul.f32 %v3927, %v3927
          %v3936 = vmul.f32 %v3928, %v3928
          %v3937 = vmul.f32 %v3929, %v3929
          %v3938 = vmul.f32 %v3930, %v3930
          %v3939 = vmul.f32 %v3931, %v3931
          %v3940 = vmul.f32 %v3932, %v3932
          %v3941 = vadd.f32 %v3933, %v3934
          %v3942 = vadd.f32 %v3941, %v3935
          %v3943 = vadd.f32 %v3942, %v3936
          %v3944 = vadd.f32 %v3943, %v3937
          %v3945 = vadd.f32 %v3944, %v3938
          %v3946 = vadd.f32 %v3945, %v3939
          %v3947 = vadd.f32 %v3946, %v3940
          %v3948 = vrot.slane %v3947, 4
          %v3949 = vadd.f32 %v3947, %v3948
          %v3950 = vrot.slane %v3949, 2
          %v3951 = vadd.f32 %v3949, %v3950
          %v3952 = vrot.slane %v3951, 1
          %v3953 = vadd.f32 %v3951, %v3952
          %v3954 = vmul.f32 %v3953, %v3915
          %v3955 = vadd.f32 %v3954, 1e-05
          %v3956 = vrsqrt.pop %v3955
          %v3957 = vmul.f32 %v3917, %v3956
          %v3958 = vmul.f32 %v3918, %v3956
          %v3959 = vmul.f32 %v3919, %v3956
          %v3960 = vmul.f32 %v3920, %v3956
          %v3961 = vmul.f32 %v3921, %v3956
          %v3962 = vmul.f32 %v3922, %v3956
          %v3963 = vmul.f32 %v3923, %v3956
          %v3964 = vmul.f32 %v3924, %v3956
          %v3965 = vld [vmem:[%s53] sm:$0x1]
          %v3967 = vlaneseq
          %v3968 = vshrl.u32 %v3967, 7
          %v3969 = vsub.s32 0, %v3968
          %v3970 = vrot.slane %v3965, %v3969
          %v3972 = vmul.f32 %v3957, %v3970
          %v3973 = vmul.f32 %v3958, %v3970
          %v3974 = vmul.f32 %v3959, %v3970
          %v3975 = vmul.f32 %v3960, %v3970
          %v3976 = vmul.f32 %v3961, %v3970
          %v3977 = vmul.f32 %v3962, %v3970
          %v3978 = vmul.f32 %v3963, %v3970
          %v3979 = vmul.f32 %v3964, %v3970
          %v3980 = vld [vmem:[%s55] sm:$0x1]
          %v3982 = vlaneseq
          %v3983 = vshrl.u32 %v3982, 7
          %v3984 = vsub.s32 0, %v3983
          %v3985 = vrot.slane %v3980, %v3984
          %v3987 = vadd.f32 %v3972, %v3985
          %v3988 = vadd.f32 %v3973, %v3985
          %v3989 = vadd.f32 %v3974, %v3985
          %v3990 = vadd.f32 %v3975, %v3985
          %v3991 = vadd.f32 %v3976, %v3985
          %v3992 = vadd.f32 %v3977, %v3985
          %v3993 = vadd.f32 %v3978, %v3985
          %v3994 = vadd.f32 %v3979, %v3985
          %v3995 = vld [vmem:[%s57] sm:$0xff]
          %v3996 = vld [vmem:[%s57 + $0x8] sm:$0xff]
          %v3997 = vld [vmem:[%s57 + $0x10] sm:$0xff]
          %v3998 = vld [vmem:[%s57 + $0x18] sm:$0xff]
          %v3999 = vld [vmem:[%s57 + $0x20] sm:$0xff]
          %v4000 = vld [vmem:[%s57 + $0x28] sm:$0xff]
          %v4001 = vld [vmem:[%s57 + $0x30] sm:$0xff]
          %v4002 = vld [vmem:[%s57 + $0x38] sm:$0xff]
          %v4003 = vld [vmem:[%s57 + $0x40] sm:$0xff]
          %v4004 = vld [vmem:[%s57 + $0x48] sm:$0xff]
          %v4005 = vld [vmem:[%s57 + $0x50] sm:$0xff]
          %v4006 = vld [vmem:[%s57 + $0x58] sm:$0xff]
          %v4007 = vld [vmem:[%s57 + $0x60] sm:$0xff]
          %v4008 = vld [vmem:[%s57 + $0x68] sm:$0xff]
          %v4009 = vld [vmem:[%s57 + $0x70] sm:$0xff]
          %v4010 = vld [vmem:[%s57 + $0x78] sm:$0xff]
          %v4011 = vld [vmem:[%s59] sm:$0x1]
          %v4013 = vlaneseq
          %v4014 = vshrl.u32 %v4013, 7
          %v4015 = vsub.s32 0, %v4014
          %v4016 = vrot.slane %v4011, %v4015
          %4018 = vmatprep.subr.mxu0 0.0
          %4019 = vmatpush1.msra.mxu0 %v4010
          %4020 = vmatprep.subr.mxu0 0.0
          %4021 = vmatpush1.msra.mxu0 %v4009
          %4022 = vmatprep.subr.mxu0 0.0
          %4023 = vmatpush1.msra.mxu0 %v4008
          %4024 = vmatprep.subr.mxu0 0.0
          %4025 = vmatpush1.msra.mxu0 %v4007
          %4026 = vmatprep.subr.mxu0 0.0
          %4027 = vmatpush1.msra.mxu0 %v4006
          %4028 = vmatprep.subr.mxu0 0.0
          %4029 = vmatpush1.msra.mxu0 %v4005
          %4030 = vmatprep.subr.mxu0 0.0
          %4031 = vmatpush1.msra.mxu0 %v4004
          %4032 = vmatprep.subr.mxu0 0.0
          %4033 = vmatpush1.msra.mxu0 %v4003
          %4034 = vmatprep.subr.mxu0 0.0
          %4035 = vmatpush1.msra.mxu0 %v4002
          %4036 = vmatprep.subr.mxu0 0.0
          %4037 = vmatpush1.msra.mxu0 %v4001
          %4038 = vmatprep.subr.mxu0 0.0
          %4039 = vmatpush1.msra.mxu0 %v4000
          %4040 = vmatprep.subr.mxu0 0.0
          %4041 = vmatpush1.msra.mxu0 %v3999
          %4042 = vmatprep.subr.mxu0 0.0
          %4043 = vmatpush1.msra.mxu0 %v3998
          %4044 = vmatprep.subr.mxu0 0.0
          %4045 = vmatpush1.msra.mxu0 %v3997
          %4046 = vmatprep.subr.mxu0 0.0
          %4047 = vmatpush1.msra.mxu0 %v3996
          %4048 = vmatprep.subr.mxu0 0.0
          %4049 = vmatpush1.msra.mxu0 %v3995
          %4050 = vmatprep.subr.mxu0 0.0
          %4051 = vmatpush2.msra.mxu0 0.0
          %4052 = vmatprep.subr.mxu0 0.0
          %4053 = vmatpush2.msra.mxu0 0.0
          %4054 = vmatprep.subr.mxu0 0.0
          %4055 = vmatpush2.msra.mxu0 0.0
          %4056 = vmatprep.subr.mxu0 0.0
          %4057 = vmatpush2.msra.mxu0 0.0
          %4058 = vmatprep.subr.mxu0 0.0
          %4059 = vmatpush2.msra.mxu0 0.0
          %4060 = vmatprep.subr.mxu0 0.0
          %4061 = vmatpush2.msra.mxu0 0.0
          %4062 = vmatprep.subr.mxu0 0.0
          %4063 = vmatpush2.msra.mxu0 0.0
          %4064 = vmatprep.subr.mxu0 0.0
          %4065 = vmatpush2.msra.mxu0 0.0
          %4066 = vmatprep.subr.mxu0 0.0
          %4067 = vmatpush2.msra.mxu0 0.0
          %4068 = vmatprep.subr.mxu0 0.0
          %4069 = vmatpush2.msra.mxu0 0.0
          %4070 = vmatprep.subr.mxu0 0.0
          %4071 = vmatpush2.msra.mxu0 0.0
          %4072 = vmatprep.subr.mxu0 0.0
          %4073 = vmatpush2.msra.mxu0 0.0
          %4074 = vmatprep.subr.mxu0 0.0
          %4075 = vmatpush2.msra.mxu0 0.0
          %4076 = vmatprep.subr.mxu0 0.0
          %4077 = vmatpush2.msra.mxu0 0.0
          %4078 = vmatprep.subr.mxu0 0.0
          %4079 = vmatpush2.msra.mxu0 0.0
          %4080 = vmatprep.subr.mxu0 0.0
          %4081 = vmatpush2.msra.mxu0 0.0
          %4082 = vmatprep.mubr.f32.mxu0 0.0
          %4083 = vmatmul.mubr.f32.gmra.mxu0 %v3987
          %v4084 = vpop.f32.mrf.mxu0
          %v4085 = vadd.f32 %v4016, %v4084
          %v4086 = vpop.f32.mrf.mxu0
          %4087 = vmatprep.mubr.f32.mxu0 0.0
          %4088 = vmatmul.mubr.f32.gmra.mxu0 %v3988
          %v4089 = vpop.f32.mrf.mxu0
          %v4090 = vadd.f32 %v4016, %v4089
          %v4091 = vpop.f32.mrf.mxu0
          %4092 = vmatprep.mubr.f32.mxu0 0.0
          %4093 = vmatmul.mubr.f32.gmra.mxu0 %v3989
          %v4094 = vpop.f32.mrf.mxu0
          %v4095 = vadd.f32 %v4016, %v4094
          %v4096 = vpop.f32.mrf.mxu0
          %4097 = vmatprep.mubr.f32.mxu0 0.0
          %4098 = vmatmul.mubr.f32.gmra.mxu0 %v3990
          %v4099 = vpop.f32.mrf.mxu0
          %v4100 = vadd.f32 %v4016, %v4099
          %v4101 = vpop.f32.mrf.mxu0
          %4102 = vmatprep.mubr.f32.mxu0 0.0
          %4103 = vmatmul.mubr.f32.gmra.mxu0 %v3991
          %v4104 = vpop.f32.mrf.mxu0
          %v4105 = vadd.f32 %v4016, %v4104
          %v4106 = vpop.f32.mrf.mxu0
          %4107 = vmatprep.mubr.f32.mxu0 0.0
          %4108 = vmatmul.mubr.f32.gmra.mxu0 %v3992
          %v4109 = vpop.f32.mrf.mxu0
          %v4110 = vadd.f32 %v4016, %v4109
          %v4111 = vpop.f32.mrf.mxu0
          %4112 = vmatprep.mubr.f32.mxu0 0.0
          %4113 = vmatmul.mubr.f32.gmra.mxu0 %v3993
          %v4114 = vpop.f32.mrf.mxu0
          %v4115 = vadd.f32 %v4016, %v4114
          %v4116 = vpop.f32.mrf.mxu0
          %4117 = vmatprep.mubr.f32.mxu0 0.0
          %4118 = vmatmul.mubr.f32.gmra.mxu0 %v3994
          %v4119 = vpop.f32.mrf.mxu0
          %v4120 = vadd.f32 %v4016, %v4119
          %v4121 = vpop.f32.mrf.mxu0
          %4122 = vdwg.mxu0
          %vm4123 = vcmp.gt.f32.partialorder %v4085, 0.0
          %vm4124 = vcmp.gt.f32.partialorder %v4090, 0.0
          %vm4125 = vcmp.gt.f32.partialorder %v4095, 0.0
          %vm4126 = vcmp.gt.f32.partialorder %v4100, 0.0
          %vm4127 = vcmp.gt.f32.partialorder %v4105, 0.0
          %vm4128 = vcmp.gt.f32.partialorder %v4110, 0.0
          %vm4129 = vcmp.gt.f32.partialorder %v4115, 0.0
          %vm4130 = vcmp.gt.f32.partialorder %v4120, 0.0
          %v4131 = vmin.f32 %v4085, 0.0
          %v4132 = vmin.f32 %v4090, 0.0
          %v4133 = vmin.f32 %v4095, 0.0
          %v4134 = vmin.f32 %v4100, 0.0
          %v4135 = vmin.f32 %v4105, 0.0
          %v4136 = vmin.f32 %v4110, 0.0
          %v4137 = vmin.f32 %v4115, 0.0
          %v4138 = vmin.f32 %v4120, 0.0
          %v4139 = vmul.f32 %v4131, 1.442695
          %v4140 = vpow.pop %v4139
          %v4141 = vmul.f32 %v4132, 1.442695
          %v4142 = vpow.pop %v4141
          %v4143 = vmul.f32 %v4133, 1.442695
          %v4144 = vpow.pop %v4143
          %v4145 = vmul.f32 %v4134, 1.442695
          %v4146 = vpow.pop %v4145
          %v4147 = vmul.f32 %v4135, 1.442695
          %v4148 = vpow.pop %v4147
          %v4149 = vmul.f32 %v4136, 1.442695
          %v4150 = vpow.pop %v4149
          %v4151 = vmul.f32 %v4137, 1.442695
          %v4152 = vpow.pop %v4151
          %v4153 = vmul.f32 %v4138, 1.442695
          %v4154 = vpow.pop %v4153
          %v4155 = vsub.f32 %v4140, 1.0
          %v4156 = vsub.f32 %v4142, 1.0
          %v4157 = vsub.f32 %v4144, 1.0
          %v4158 = vsub.f32 %v4146, 1.0
          %v4159 = vsub.f32 %v4148, 1.0
          %v4160 = vsub.f32 %v4150, 1.0
          %v4161 = vsub.f32 %v4152, 1.0
          %v4162 = vsub.f32 %v4154, 1.0
          %v4163 = vsel %vm4123, %v4085, %v4155
          %v4164 = vsel %vm4124, %v4090, %v4156
          %v4165 = vsel %vm4125, %v4095, %v4157
          %v4166 = vsel %vm4126, %v4100, %v4158
          %v4167 = vsel %vm4127, %v4105, %v4159
          %v4168 = vsel %vm4128, %v4110, %v4160
          %v4169 = vsel %vm4129, %v4115, %v4161
          %v4170 = vsel %vm4130, %v4120, %v4162
          %v4171 = vld [vmem:[%s11] sm:$0xff]
          %v4172 = vld [vmem:[%s11 + $0x8] sm:$0xff]
          %v4173 = vld [vmem:[%s11 + $0x10] sm:$0xff]
          %v4174 = vld [vmem:[%s11 + $0x18] sm:$0xff]
          %v4175 = vld [vmem:[%s11 + $0x20] sm:$0xff]
          %v4176 = vld [vmem:[%s11 + $0x28] sm:$0xff]
          %v4177 = vld [vmem:[%s11 + $0x30] sm:$0xff]
          %v4178 = vld [vmem:[%s11 + $0x38] sm:$0xff]
          %v4179 = vld [vmem:[%s13] sm:$0xf]
          %v4181 = vsel %vm1540, %v4179, 0
          %4183 = vmatprep.subr.mxu0 0.0
          %4184 = vmatpush1.msra.mxu0 0.0
          %4185 = vmatprep.subr.mxu0 0.0
          %4186 = vmatpush1.msra.mxu0 0.0
          %4187 = vmatprep.subr.mxu0 0.0
          %4188 = vmatpush1.msra.mxu0 0.0
          %4189 = vmatprep.subr.mxu0 0.0
          %4190 = vmatpush1.msra.mxu0 0.0
          %4191 = vmatprep.subr.mxu0 0.0
          %4192 = vmatpush1.msra.mxu0 0.0
          %4193 = vmatprep.subr.mxu0 0.0
          %4194 = vmatpush1.msra.mxu0 0.0
          %4195 = vmatprep.subr.mxu0 0.0
          %4196 = vmatpush1.msra.mxu0 0.0
          %4197 = vmatprep.subr.mxu0 0.0
          %4198 = vmatpush1.msra.mxu0 0.0
          %4199 = vmatprep.subr.mxu0 0.0
          %4200 = vmatpush1.msra.mxu0 %v4170
          %4201 = vmatprep.subr.mxu0 0.0
          %4202 = vmatpush1.msra.mxu0 %v4169
          %4203 = vmatprep.subr.mxu0 0.0
          %4204 = vmatpush1.msra.mxu0 %v4168
          %4205 = vmatprep.subr.mxu0 0.0
          %4206 = vmatpush1.msra.mxu0 %v4167
          %4207 = vmatprep.subr.mxu0 0.0
          %4208 = vmatpush1.msra.mxu0 %v4166
          %4209 = vmatprep.subr.mxu0 0.0
          %4210 = vmatpush1.msra.mxu0 %v4165
          %4211 = vmatprep.subr.mxu0 0.0
          %4212 = vmatpush1.msra.mxu0 %v4164
          %4213 = vmatprep.subr.mxu0 0.0
          %4214 = vmatpush1.msra.mxu0 %v4163
          %4215 = vmatprep.subr.mxu0 0.0
          %4216 = vmatpush2.msra.mxu0 0.0
          %4217 = vmatprep.subr.mxu0 0.0
          %4218 = vmatpush2.msra.mxu0 0.0
          %4219 = vmatprep.subr.mxu0 0.0
          %4220 = vmatpush2.msra.mxu0 0.0
          %4221 = vmatprep.subr.mxu0 0.0
          %4222 = vmatpush2.msra.mxu0 0.0
          %4223 = vmatprep.subr.mxu0 0.0
          %4224 = vmatpush2.msra.mxu0 0.0
          %4225 = vmatprep.subr.mxu0 0.0
          %4226 = vmatpush2.msra.mxu0 0.0
          %4227 = vmatprep.subr.mxu0 0.0
          %4228 = vmatpush2.msra.mxu0 0.0
          %4229 = vmatprep.subr.mxu0 0.0
          %4230 = vmatpush2.msra.mxu0 0.0
          %4231 = vmatprep.subr.mxu0 0.0
          %4232 = vmatpush2.msra.mxu0 0.0
          %4233 = vmatprep.subr.mxu0 0.0
          %4234 = vmatpush2.msra.mxu0 0.0
          %4235 = vmatprep.subr.mxu0 0.0
          %4236 = vmatpush2.msra.mxu0 0.0
          %4237 = vmatprep.subr.mxu0 0.0
          %4238 = vmatpush2.msra.mxu0 0.0
          %4239 = vmatprep.subr.mxu0 0.0
          %4240 = vmatpush2.msra.mxu0 0.0
          %4241 = vmatprep.subr.mxu0 0.0
          %4242 = vmatpush2.msra.mxu0 0.0
          %4243 = vmatprep.subr.mxu0 0.0
          %4244 = vmatpush2.msra.mxu0 0.0
          %4245 = vmatprep.subr.mxu0 0.0
          %4246 = vmatpush2.msra.mxu0 0.0
          %4247 = vmatprep.mubr.f32.mxu0 0.0
          %4248 = vmatmul.mubr.f32.gmra.mxu0 %v4181
          %v4249 = vpop.f32.mrf.mxu0
          %v4250 = vadd.f32 0.0, %v4249
          %v4251 = vpop.f32.mrf.mxu0
          %4252 = vdwg.mxu0
          %v4253 = vld [vmem:[%s21] sm:$0xf]
          %4255 = vset.pattern.permute.xlu0 0
          %4256 = vperm.xlu0 %4255, %v4253
          %v4257 = vpop.permute.xlu0 %4256
          %v4259 = vmul.f32 %v4250, %v4257
          %vm4260 = vcmp.gt.f32.partialorder %v4171, 0.5
          %vm4261 = vcmp.gt.f32.partialorder %v4172, 0.5
          %vm4262 = vcmp.gt.f32.partialorder %v4173, 0.5
          %vm4263 = vcmp.gt.f32.partialorder %v4174, 0.5
          %vm4264 = vcmp.gt.f32.partialorder %v4175, 0.5
          %vm4265 = vcmp.gt.f32.partialorder %v4176, 0.5
          %vm4266 = vcmp.gt.f32.partialorder %v4177, 0.5
          %vm4267 = vcmp.gt.f32.partialorder %v4178, 0.5
          %v4268 = vsel %vm4260, 1, 0
          %v4269 = vsel %vm4261, 1, 0
          %v4270 = vsel %vm4262, 1, 0
          %v4271 = vsel %vm4263, 1, 0
          %v4272 = vsel %vm4264, 1, 0
          %v4273 = vsel %vm4265, 1, 0
          %v4274 = vsel %vm4266, 1, 0
          %v4275 = vsel %vm4267, 1, 0
          %4276 = vset.pattern.permute.xlu0 0
          %4277 = vperm.xlu0 %4276, %v4268
          %v4278 = vpop.permute.xlu0 %4277
          %4279 = vset.pattern.permute.xlu0 0
          %4280 = vperm.xlu0 %4279, %v4269
          %v4281 = vpop.permute.xlu0 %4280
          %4282 = vset.pattern.permute.xlu0 0
          %4283 = vperm.xlu0 %4282, %v4270
          %v4284 = vpop.permute.xlu0 %4283
          %4285 = vset.pattern.permute.xlu0 0
          %4286 = vperm.xlu0 %4285, %v4271
          %v4287 = vpop.permute.xlu0 %4286
          %4288 = vset.pattern.permute.xlu0 0
          %4289 = vperm.xlu0 %4288, %v4272
          %v4290 = vpop.permute.xlu0 %4289
          %4291 = vset.pattern.permute.xlu0 0
          %4292 = vperm.xlu0 %4291, %v4273
          %v4293 = vpop.permute.xlu0 %4292
          %4294 = vset.pattern.permute.xlu0 0
          %4295 = vperm.xlu0 %4294, %v4274
          %v4296 = vpop.permute.xlu0 %4295
          %4297 = vset.pattern.permute.xlu0 0
          %4298 = vperm.xlu0 %4297, %v4275
          %v4299 = vpop.permute.xlu0 %4298
          %vm4300 = vcmp.eq.s32.totalorder %v4278, 1
          %vm4301 = vcmp.eq.s32.totalorder %v4281, 1
          %vm4302 = vcmp.eq.s32.totalorder %v4284, 1
          %vm4303 = vcmp.eq.s32.totalorder %v4287, 1
          %vm4304 = vcmp.eq.s32.totalorder %v4290, 1
          %vm4305 = vcmp.eq.s32.totalorder %v4293, 1
          %vm4306 = vcmp.eq.s32.totalorder %v4296, 1
          %vm4307 = vcmp.eq.s32.totalorder %v4299, 1
          %v4308 = vsel %vm4300, %v4163, -1e+30
          %v4309 = vsel %vm4301, %v4164, -1e+30
          %v4310 = vsel %vm4302, %v4165, -1e+30
          %v4311 = vsel %vm4303, %v4166, -1e+30
          %v4312 = vsel %vm4304, %v4167, -1e+30
          %v4313 = vsel %vm4305, %v4168, -1e+30
          %v4314 = vsel %vm4306, %v4169, -1e+30
          %v4315 = vsel %vm4307, %v4170, -1e+30
          %v4316 = vmax.f32 %v4308, %v4312
          %v4317 = vmax.f32 %v4309, %v4313
          %v4318 = vmax.f32 %v4310, %v4314
          %v4319 = vmax.f32 %v4311, %v4315
          %v4320 = vmax.f32 %v4316, %v4317
          %v4321 = vmax.f32 %v4318, %v4319
          %v4322 = vmax.f32 %v4320, %v4321
          %v4323 = vrot.slane %v4322, 4
          %v4324 = vmax.f32 %v4322, %v4323
          %v4325 = vrot.slane %v4324, 2
          %v4326 = vmax.f32 %v4324, %v4325
          %v4327 = vrot.slane %v4326, 1
          %v4328 = vmax.f32 %v4326, %v4327
          %4329 = vset.pattern.permute.xlu0 1
          %4330 = vperm.xlu0 %4329, %v4268
          %v4331 = vpop.permute.xlu0 %4330
          %4332 = vset.pattern.permute.xlu0 1
          %4333 = vperm.xlu0 %4332, %v4269
          %v4334 = vpop.permute.xlu0 %4333
          %4335 = vset.pattern.permute.xlu0 1
          %4336 = vperm.xlu0 %4335, %v4270
          %v4337 = vpop.permute.xlu0 %4336
          %4338 = vset.pattern.permute.xlu0 1
          %4339 = vperm.xlu0 %4338, %v4271
          %v4340 = vpop.permute.xlu0 %4339
          %4341 = vset.pattern.permute.xlu0 1
          %4342 = vperm.xlu0 %4341, %v4272
          %v4343 = vpop.permute.xlu0 %4342
          %4344 = vset.pattern.permute.xlu0 1
          %4345 = vperm.xlu0 %4344, %v4273
          %v4346 = vpop.permute.xlu0 %4345
          %4347 = vset.pattern.permute.xlu0 1
          %4348 = vperm.xlu0 %4347, %v4274
          %v4349 = vpop.permute.xlu0 %4348
          %4350 = vset.pattern.permute.xlu0 1
          %4351 = vperm.xlu0 %4350, %v4275
          %v4352 = vpop.permute.xlu0 %4351
          %vm4353 = vcmp.eq.s32.totalorder %v4331, 1
          %vm4354 = vcmp.eq.s32.totalorder %v4334, 1
          %vm4355 = vcmp.eq.s32.totalorder %v4337, 1
          %vm4356 = vcmp.eq.s32.totalorder %v4340, 1
          %vm4357 = vcmp.eq.s32.totalorder %v4343, 1
          %vm4358 = vcmp.eq.s32.totalorder %v4346, 1
          %vm4359 = vcmp.eq.s32.totalorder %v4349, 1
          %vm4360 = vcmp.eq.s32.totalorder %v4352, 1
          %v4361 = vsel %vm4353, %v4163, -1e+30
          %v4362 = vsel %vm4354, %v4164, -1e+30
          %v4363 = vsel %vm4355, %v4165, -1e+30
          %v4364 = vsel %vm4356, %v4166, -1e+30
          %v4365 = vsel %vm4357, %v4167, -1e+30
          %v4366 = vsel %vm4358, %v4168, -1e+30
          %v4367 = vsel %vm4359, %v4169, -1e+30
          %v4368 = vsel %vm4360, %v4170, -1e+30
          %v4369 = vmax.f32 %v4361, %v4365
          %v4370 = vmax.f32 %v4362, %v4366
          %v4371 = vmax.f32 %v4363, %v4367
          %v4372 = vmax.f32 %v4364, %v4368
          %v4373 = vmax.f32 %v4369, %v4370
          %v4374 = vmax.f32 %v4371, %v4372
          %v4375 = vmax.f32 %v4373, %v4374
          %v4376 = vrot.slane %v4375, 4
          %v4377 = vmax.f32 %v4375, %v4376
          %v4378 = vrot.slane %v4377, 2
          %v4379 = vmax.f32 %v4377, %v4378
          %v4380 = vrot.slane %v4379, 1
          %v4381 = vmax.f32 %v4379, %v4380
          %4382 = vset.pattern.permute.xlu0 2
          %4383 = vperm.xlu0 %4382, %v4268
          %v4384 = vpop.permute.xlu0 %4383
          %4385 = vset.pattern.permute.xlu0 2
          %4386 = vperm.xlu0 %4385, %v4269
          %v4387 = vpop.permute.xlu0 %4386
          %4388 = vset.pattern.permute.xlu0 2
          %4389 = vperm.xlu0 %4388, %v4270
          %v4390 = vpop.permute.xlu0 %4389
          %4391 = vset.pattern.permute.xlu0 2
          %4392 = vperm.xlu0 %4391, %v4271
          %v4393 = vpop.permute.xlu0 %4392
          %4394 = vset.pattern.permute.xlu0 2
          %4395 = vperm.xlu0 %4394, %v4272
          %v4396 = vpop.permute.xlu0 %4395
          %4397 = vset.pattern.permute.xlu0 2
          %4398 = vperm.xlu0 %4397, %v4273
          %v4399 = vpop.permute.xlu0 %4398
          %4400 = vset.pattern.permute.xlu0 2
          %4401 = vperm.xlu0 %4400, %v4274
          %v4402 = vpop.permute.xlu0 %4401
          %4403 = vset.pattern.permute.xlu0 2
          %4404 = vperm.xlu0 %4403, %v4275
          %v4405 = vpop.permute.xlu0 %4404
          %vm4406 = vcmp.eq.s32.totalorder %v4384, 1
          %vm4407 = vcmp.eq.s32.totalorder %v4387, 1
          %vm4408 = vcmp.eq.s32.totalorder %v4390, 1
          %vm4409 = vcmp.eq.s32.totalorder %v4393, 1
          %vm4410 = vcmp.eq.s32.totalorder %v4396, 1
          %vm4411 = vcmp.eq.s32.totalorder %v4399, 1
          %vm4412 = vcmp.eq.s32.totalorder %v4402, 1
          %vm4413 = vcmp.eq.s32.totalorder %v4405, 1
          %v4414 = vsel %vm4406, %v4163, -1e+30
          %v4415 = vsel %vm4407, %v4164, -1e+30
          %v4416 = vsel %vm4408, %v4165, -1e+30
          %v4417 = vsel %vm4409, %v4166, -1e+30
          %v4418 = vsel %vm4410, %v4167, -1e+30
          %v4419 = vsel %vm4411, %v4168, -1e+30
          %v4420 = vsel %vm4412, %v4169, -1e+30
          %v4421 = vsel %vm4413, %v4170, -1e+30
          %v4422 = vmax.f32 %v4414, %v4418
          %v4423 = vmax.f32 %v4415, %v4419
          %v4424 = vmax.f32 %v4416, %v4420
          %v4425 = vmax.f32 %v4417, %v4421
          %v4426 = vmax.f32 %v4422, %v4423
          %v4427 = vmax.f32 %v4424, %v4425
          %v4428 = vmax.f32 %v4426, %v4427
          %v4429 = vrot.slane %v4428, 4
          %v4430 = vmax.f32 %v4428, %v4429
          %v4431 = vrot.slane %v4430, 2
          %v4432 = vmax.f32 %v4430, %v4431
          %v4433 = vrot.slane %v4432, 1
          %v4434 = vmax.f32 %v4432, %v4433
          %4435 = vset.pattern.permute.xlu0 3
          %4436 = vperm.xlu0 %4435, %v4268
          %v4437 = vpop.permute.xlu0 %4436
          %4438 = vset.pattern.permute.xlu0 3
          %4439 = vperm.xlu0 %4438, %v4269
          %v4440 = vpop.permute.xlu0 %4439
          %4441 = vset.pattern.permute.xlu0 3
          %4442 = vperm.xlu0 %4441, %v4270
          %v4443 = vpop.permute.xlu0 %4442
          %4444 = vset.pattern.permute.xlu0 3
          %4445 = vperm.xlu0 %4444, %v4271
          %v4446 = vpop.permute.xlu0 %4445
          %4447 = vset.pattern.permute.xlu0 3
          %4448 = vperm.xlu0 %4447, %v4272
          %v4449 = vpop.permute.xlu0 %4448
          %4450 = vset.pattern.permute.xlu0 3
          %4451 = vperm.xlu0 %4450, %v4273
          %v4452 = vpop.permute.xlu0 %4451
          %4453 = vset.pattern.permute.xlu0 3
          %4454 = vperm.xlu0 %4453, %v4274
          %v4455 = vpop.permute.xlu0 %4454
          %4456 = vset.pattern.permute.xlu0 3
          %4457 = vperm.xlu0 %4456, %v4275
          %v4458 = vpop.permute.xlu0 %4457
          %vm4459 = vcmp.eq.s32.totalorder %v4437, 1
          %vm4460 = vcmp.eq.s32.totalorder %v4440, 1
          %vm4461 = vcmp.eq.s32.totalorder %v4443, 1
          %vm4462 = vcmp.eq.s32.totalorder %v4446, 1
          %vm4463 = vcmp.eq.s32.totalorder %v4449, 1
          %vm4464 = vcmp.eq.s32.totalorder %v4452, 1
          %vm4465 = vcmp.eq.s32.totalorder %v4455, 1
          %vm4466 = vcmp.eq.s32.totalorder %v4458, 1
          %v4467 = vsel %vm4459, %v4163, -1e+30
          %v4468 = vsel %vm4460, %v4164, -1e+30
          %v4469 = vsel %vm4461, %v4165, -1e+30
          %v4470 = vsel %vm4462, %v4166, -1e+30
          %v4471 = vsel %vm4463, %v4167, -1e+30
          %v4472 = vsel %vm4464, %v4168, -1e+30
          %v4473 = vsel %vm4465, %v4169, -1e+30
          %v4474 = vsel %vm4466, %v4170, -1e+30
          %v4475 = vmax.f32 %v4467, %v4471
          %v4476 = vmax.f32 %v4468, %v4472
          %v4477 = vmax.f32 %v4469, %v4473
          %v4478 = vmax.f32 %v4470, %v4474
          %v4479 = vmax.f32 %v4475, %v4476
          %v4480 = vmax.f32 %v4477, %v4478
          %v4481 = vmax.f32 %v4479, %v4480
          %v4482 = vrot.slane %v4481, 4
          %v4483 = vmax.f32 %v4481, %v4482
          %v4484 = vrot.slane %v4483, 2
          %v4485 = vmax.f32 %v4483, %v4484
          %v4486 = vrot.slane %v4485, 1
          %v4487 = vmax.f32 %v4485, %v4486
          %vm4488 = vcmask 1040384
          %v4489 = vsel %vm4488, %v4328, %v4381
          %vm4490 = vcmask 1041408
          %v4491 = vsel %vm4490, %v4489, %v4434
          %vm4492 = vcmask 1042432
          %v4493 = vsel %vm4492, %v4491, %v4487
          %v4494 = vld [vmem:[%s23] sm:$0xf]
          %vm4495 = vcmp.gt.f32.partialorder %v4494, 0.5
          %v4496 = vsel %vm4495, 1, 0
          %4497 = vset.pattern.permute.xlu0 0
          %4498 = vperm.xlu0 %4497, %v4496
          %v4499 = vpop.permute.xlu0 %4498
          %vm4500 = vcmp.eq.s32.totalorder %v4499, 1
          %v4501 = vsel %vm4500, %v4493, 0.0
          %v4502 = vld [vmem:[%s61] sm:$0x1]
          %v4504 = vlaneseq
          %v4505 = vshrl.u32 %v4504, 7
          %v4506 = vsub.s32 0, %v4505
          %v4507 = vrot.slane %v4502, %v4506
          %4508 = vset.pattern.permute.xlu0 0
          %4509 = vperm.xlu0 %4508, %v4507
          %v4510 = vpop.permute.xlu0 %4509
          %v4512 = vmul.f32 %v4510, %v4501
          %4513 = vset.pattern.permute.xlu0 1
          %4514 = vperm.xlu0 %4513, %v4507
          %v4515 = vpop.permute.xlu0 %4514
          %v4517 = vmul.f32 %v4515, %v4259
          %v4518 = vadd.f32 %v4512, %v4517
          %v4519 = vld [vmem:[#allocation6] sm:$0x1]
          %v4521 = vlaneseq
          %v4522 = vshrl.u32 %v4521, 7
          %v4523 = vsub.s32 0, %v4522
          %v4524 = vrot.slane %v4519, %v4523
          %4525 = vset.pattern.permute.xlu0 0
          %4526 = vperm.xlu0 %4525, %v4524
          %v4527 = vpop.permute.xlu0 %4526
          %v4529 = vadd.f32 %v4518, %v4527
          %vm4530 = vcmp.gt.f32.partialorder %v4529, 0.0
          %v4531 = vmin.f32 %v4529, 0.0
          %v4532 = vmul.f32 %v4531, 1.442695
          %v4533 = vpow.pop %v4532
          %v4534 = vsub.f32 %v4533, 1.0
          %v4535 = vsel %vm4530, %v4529, %v4534
          %vm4536 = vcmask 31744
          %v4538 = vsel %vm4536, %v4171, 0
          %v4541 = vsel %vm4536, %v4172, 0
          %v4544 = vsel %vm4536, %v4173, 0
          %v4547 = vsel %vm4536, %v4174, 0
          %v4550 = vsel %vm4536, %v4175, 0
          %v4553 = vsel %vm4536, %v4176, 0
          %v4556 = vsel %vm4536, %v4177, 0
          %v4559 = vsel %vm4536, %v4178, 0
          %vm4561 = vcmask 1043456
          %v4563 = vsel %vm4561, %v4535, 0
          %4565 = vmatprep.subr.mxu0 0.0
          %4566 = vmatpush1.msra.mxu0 0.0
          %4567 = vmatprep.subr.mxu0 0.0
          %4568 = vmatpush1.msra.mxu0 0.0
          %4569 = vmatprep.subr.mxu0 0.0
          %4570 = vmatpush1.msra.mxu0 0.0
          %4571 = vmatprep.subr.mxu0 0.0
          %4572 = vmatpush1.msra.mxu0 0.0
          %4573 = vmatprep.subr.mxu0 0.0
          %4574 = vmatpush1.msra.mxu0 0.0
          %4575 = vmatprep.subr.mxu0 0.0
          %4576 = vmatpush1.msra.mxu0 0.0
          %4577 = vmatprep.subr.mxu0 0.0
          %4578 = vmatpush1.msra.mxu0 0.0
          %4579 = vmatprep.subr.mxu0 0.0
          %4580 = vmatpush1.msra.mxu0 0.0
          %4581 = vmatprep.subr.mxu0 0.0
          %4582 = vmatpush1.msra.mxu0 0.0
          %4583 = vmatprep.subr.mxu0 0.0
          %4584 = vmatpush1.msra.mxu0 0.0
          %4585 = vmatprep.subr.mxu0 0.0
          %4586 = vmatpush1.msra.mxu0 0.0
          %4587 = vmatprep.subr.mxu0 0.0
          %4588 = vmatpush1.msra.mxu0 0.0
          %4589 = vmatprep.subr.mxu0 0.0
          %4590 = vmatpush1.msra.mxu0 0.0
          %4591 = vmatprep.subr.mxu0 0.0
          %4592 = vmatpush1.msra.mxu0 0.0
          %4593 = vmatprep.subr.mxu0 0.0
          %4594 = vmatpush1.msra.mxu0 0.0
          %4595 = vmatprep.subr.mxu0 0.0
          %4596 = vmatpush1.msra.mxu0 %v4563
          %4597 = vmatprep.subr.mxu0 0.0
          %4598 = vmatpush2.msra.mxu0 0.0
          %4599 = vmatprep.subr.mxu0 0.0
          %4600 = vmatpush2.msra.mxu0 0.0
          %4601 = vmatprep.subr.mxu0 0.0
          %4602 = vmatpush2.msra.mxu0 0.0
          %4603 = vmatprep.subr.mxu0 0.0
          %4604 = vmatpush2.msra.mxu0 0.0
          %4605 = vmatprep.subr.mxu0 0.0
          %4606 = vmatpush2.msra.mxu0 0.0
          %4607 = vmatprep.subr.mxu0 0.0
          %4608 = vmatpush2.msra.mxu0 0.0
          %4609 = vmatprep.subr.mxu0 0.0
          %4610 = vmatpush2.msra.mxu0 0.0
          %4611 = vmatprep.subr.mxu0 0.0
          %4612 = vmatpush2.msra.mxu0 0.0
          %4613 = vmatprep.subr.mxu0 0.0
          %4614 = vmatpush2.msra.mxu0 0.0
          %4615 = vmatprep.subr.mxu0 0.0
          %4616 = vmatpush2.msra.mxu0 0.0
          %4617 = vmatprep.subr.mxu0 0.0
          %4618 = vmatpush2.msra.mxu0 0.0
          %4619 = vmatprep.subr.mxu0 0.0
          %4620 = vmatpush2.msra.mxu0 0.0
          %4621 = vmatprep.subr.mxu0 0.0
          %4622 = vmatpush2.msra.mxu0 0.0
          %4623 = vmatprep.subr.mxu0 0.0
          %4624 = vmatpush2.msra.mxu0 0.0
          %4625 = vmatprep.subr.mxu0 0.0
          %4626 = vmatpush2.msra.mxu0 0.0
          %4627 = vmatprep.subr.mxu0 0.0
          %4628 = vmatpush2.msra.mxu0 0.0
          %4629 = vmatprep.mubr.f32.mxu0 0.0
          %4630 = vmatmul.mubr.f32.gmra.mxu0 %v4538
          %v4631 = vpop.f32.mrf.mxu0
          %v4632 = vadd.f32 0.0, %v4631
          %v4633 = vpop.f32.mrf.mxu0
          %4634 = vmatprep.mubr.f32.mxu0 0.0
          %4635 = vmatmul.mubr.f32.gmra.mxu0 %v4541
          %v4636 = vpop.f32.mrf.mxu0
          %v4637 = vadd.f32 0.0, %v4636
          %v4638 = vpop.f32.mrf.mxu0
          %4639 = vmatprep.mubr.f32.mxu0 0.0
          %4640 = vmatmul.mubr.f32.gmra.mxu0 %v4544
          %v4641 = vpop.f32.mrf.mxu0
          %v4642 = vadd.f32 0.0, %v4641
          %v4643 = vpop.f32.mrf.mxu0
          %4644 = vmatprep.mubr.f32.mxu0 0.0
          %4645 = vmatmul.mubr.f32.gmra.mxu0 %v4547
          %v4646 = vpop.f32.mrf.mxu0
          %v4647 = vadd.f32 0.0, %v4646
          %v4648 = vpop.f32.mrf.mxu0
          %4649 = vmatprep.mubr.f32.mxu0 0.0
          %4650 = vmatmul.mubr.f32.gmra.mxu0 %v4550
          %v4651 = vpop.f32.mrf.mxu0
          %v4652 = vadd.f32 0.0, %v4651
          %v4653 = vpop.f32.mrf.mxu0
          %4654 = vmatprep.mubr.f32.mxu0 0.0
          %4655 = vmatmul.mubr.f32.gmra.mxu0 %v4553
          %v4656 = vpop.f32.mrf.mxu0
          %v4657 = vadd.f32 0.0, %v4656
          %v4658 = vpop.f32.mrf.mxu0
          %4659 = vmatprep.mubr.f32.mxu0 0.0
          %4660 = vmatmul.mubr.f32.gmra.mxu0 %v4556
          %v4661 = vpop.f32.mrf.mxu0
          %v4662 = vadd.f32 0.0, %v4661
          %v4663 = vpop.f32.mrf.mxu0
          %4664 = vmatprep.mubr.f32.mxu0 0.0
          %4665 = vmatmul.mubr.f32.gmra.mxu0 %v4559
          %v4666 = vpop.f32.mrf.mxu0
          %v4667 = vadd.f32 0.0, %v4666
          %v4668 = vpop.f32.mrf.mxu0
          %4669 = vdwg.mxu0
          %v4670 = vadd.f32 %v3987, %v4632
          %v4671 = vadd.f32 %v3988, %v4637
          %v4672 = vadd.f32 %v3989, %v4642
          %v4673 = vadd.f32 %v3990, %v4647
          %v4674 = vadd.f32 %v3991, %v4652
          %v4675 = vadd.f32 %v3992, %v4657
          %v4676 = vadd.f32 %v3993, %v4662
          %v4677 = vadd.f32 %v3994, %v4667
          %4678 = vst [vmem:[#allocation11] sm:$0xff] %v4670
          %4679 = vst [vmem:[#allocation11 + $0x8] sm:$0xff] %v4671
          %4680 = vst [vmem:[#allocation11 + $0x10] sm:$0xff] %v4672
          %4681 = vst [vmem:[#allocation11 + $0x18] sm:$0xff] %v4673
          %4682 = vst [vmem:[#allocation11 + $0x20] sm:$0xff] %v4674
          %4683 = vst [vmem:[#allocation11 + $0x28] sm:$0xff] %v4675
          %4684 = vst [vmem:[#allocation11 + $0x30] sm:$0xff] %v4676
          %4685 = vst [vmem:[#allocation11 + $0x38] sm:$0xff] %v4677
        $region201: #{tpu_custom_call.1} parent=184 // pred_fallthru
          _
        // Predicated region
        $region202: #{tpu_custom_call.1} parent=184 // pred_check
          %p4686 = pneg %p785
        $region203: #{tpu_custom_call.1} parent=184 // pred_check_branch
          %4688 = sbr.rel (%p4686) target = $region205
        $region204: #{tpu_custom_call.1} parent=184 // pred_region
          %s4690 = ssub.s32 1024, 1024
          %4691 = vsyncadd [#allocation10], %s4690
          %s4692 = sshll.u32 [#allocation11], 4
          %s4693 = int_to_ptr.vmem [resolvable:$true] %s4692
          %4698 = dma.vmem_to_hbm [thread:$0]  %s4693, 1024, %s65, [#allocation10], 128, 128, 8
        $region205: #{tpu_custom_call.1} parent=184 // pred_fallthru
          _
        // Predicated region
        $region206: #{tpu_custom_call.1} parent=184 // pred_check
          %p4699 = pneg %p806
        $region207: #{tpu_custom_call.1} parent=184 // pred_check_branch
          %4701 = sbr.rel (%p4699) target = $region209
        $region208: #{tpu_custom_call.1} parent=184 // pred_region
          _
        $region209: #{tpu_custom_call.1} parent=184 // pred_fallthru
          _
        // Predicated region
        $region210: #{tpu_custom_call.1} parent=184 // pred_check
          %p4702 = pneg %p785
        $region211: #{tpu_custom_call.1} parent=184 // pred_check_branch
          %4704 = sbr.rel (%p4702) target = $region213
        $region212: #{tpu_custom_call.1} parent=184 // pred_region
          %4705 = dma.done [#allocation10], 1024
        $region213: #{tpu_custom_call.1} parent=184 // pred_fallthru
          _
        // Predicated region
        $region214: #{tpu_custom_call.1} parent=184 // pred_check
          %p4706 = pneg %p806
        $region215: #{tpu_custom_call.1} parent=184 // pred_check_branch
          %4708 = sbr.rel (%p4706) target = $region217
        $region216: #{tpu_custom_call.1} parent=184 // pred_region
          _
        $region217: #{tpu_custom_call.1} parent=184 // pred_fallthru
          _
      $region185: #{tpu_custom_call.1} parent=5 // pred_fallthru
        _
      %p4709 = scmp.le.s32.totalorder 2, %s80
      // Predicated region
      $region218: #{tpu_custom_call.1} parent=5 // pred_check
        %p4710 = pneg %p4709
      $region219: #{tpu_custom_call.1} parent=5 // pred_check_branch
        %4712 = sbr.rel (%p4710) target = $region221
      $region220: #{tpu_custom_call.1} parent=5 // pred_region
        %s4713 = ssub.s32 %s80, 2
      $region221: #{tpu_custom_call.1} parent=5 // pred_fallthru
        _
    $region6: #{tpu_custom_call.1} parent=1 // loop_footer
      %s84 = sadd.s32 1, %s80
    $region7: #{tpu_custom_call.1} parent=1 // loop_footer_branch
      %79 = sbr.rel target = $region3
    $region8: #{tpu_custom_call.1} parent=1 // loop_exit
      _
    %4714 = vsyncpa [#allocation9], 1
    %s4715 = scalar_lea.sflag [#allocation9], 1
    %4716 = vsyncpa %s4715, 1
    %4717 = vsyncpa [#allocation10], 1
    %s4718 = scalar_lea.sflag [#allocation10], 1
    %4719 = vsyncpa %s4718, 1

</llo_original>
